<compile_context>
chip_gen: v7x
topology: tpu7x:2x2x1
jax: 0.10.0
libtpu: 0.0.40
codegen_flags: <defaults>
</compile_context>

<pallas_src>
import math

import jax
import jax.numpy as jnp
from jax.experimental import pallas as pl
from jax.experimental.pallas import tpu as pltpu


def _make_kernel(T, Bp, H1p, H2p, OUT, decay2, decay3, membrane_filter,
                 threshold=1.0):
    def kernel(x_ref, w1_ref, b1_ref, scale2_ref, b2_ref,
               a1_3_ref, a2_3_ref, b3_ref,
               w2_hbm, w3_hbm,
               out_ref,
               w2_vmem, w3_vmem, psp2_all, i2_all, psp3_all, sem):
        f32, bf16 = jnp.float32, jnp.bfloat16

        # ---- Kick off W2 / W3 HBM->VMEM fetches immediately; they complete
        #      behind Phase 0 (MXU) and Phase 1/2b (VPU). -----------------------
        cp_w2 = pltpu.make_async_copy(w2_hbm, w2_vmem, sem.at[0])
        cp_w3 = pltpu.make_async_copy(w3_hbm, w3_vmem, sem.at[1])
        cp_w2.start()
        cp_w3.start()

        # ---- Phase 0: ANN front-end (single MXU matmul, bf16 operands) --------
        h = jax.nn.sigmoid(
            jnp.dot(x_ref[...], w1_ref[...], preferred_element_type=f32)
            + b1_ref[...])

        # Loop-invariant broadcasts, hoisted (JAX does not CSE broadcast_in_dim).
        a1_3 = jnp.broadcast_to(a1_3_ref[...], (Bp, H2p))
        a2_3 = jnp.broadcast_to(a2_3_ref[...], (Bp, H2p))
        scale2 = scale2_ref[...]                         # [T, H1p]

        # ---- Phase 1: axon2 dual-exp IIR, input constant over t ---------------
        # Closed form: psp2[t] = S2[t] (per-feature) * h. One broadcast multiply
        # per slab; slabs are stored bf16 (they are the MXU LHS of Phase 2a).
        # TODO(synk): for T > ~16, convert this and the loops below to
        #             lax.fori_loop(..., unroll=True) to bound vreg live ranges.
        for t in range(T):
            psp2_all[t * Bp:(t + 1) * Bp, :] = (
                scale2[t:t + 1, :] * h).astype(bf16)

        # ---- Phase 2a: layer-2 currents for every step, one batched matmul ----
        cp_w2.wait()                                      # W2 fetch hidden above
        i2_all[...] = (jnp.dot(psp2_all[...], w2_vmem[...],
                               preferred_element_type=f32) + b2_ref[...])

        # ---- Phase 2b: LIF-2 + axon-3 recurrences (elementwise, unrolled,
        #      carries live in f32 vregs — no shift copies) ---------------------
        v2 = jnp.zeros((Bp, H2p), f32)
        s2 = jnp.zeros((Bp, H2p), f32)
        q1 = jnp.zeros((Bp, H2p), f32)
        q2 = jnp.zeros((Bp, H2p), f32)
        for t in range(T):
            i2_t = i2_all[t * Bp:(t + 1) * Bp, :]
            if membrane_filter:
                v2 = v2 * (decay2 * (1.0 - s2)) + i2_t
            else:
                v2 = v2 * (1.0 - s2) + i2_t
            s2 = jnp.where(v2 > threshold, 1.0, 0.0).astype(f32)
            q = a1_3 * q1 + a2_3 * q2 + s2
            psp3_all[t * Bp:(t + 1) * Bp, :] = q.astype(bf16)
            q2, q1 = q1, q

        # ---- Phase 3a: output currents for every step, one batched matmul -----
        cp_w3.wait()                                      # W3 fetch hidden above
        i3_all = (jnp.dot(psp3_all[...], w3_vmem[...],
                          preferred_element_type=f32) + b3_ref[...])

        # ---- Phase 3b: LIF-3 recurrence, per-step spike store ------------------
        v3 = jnp.zeros((Bp, OUT), f32)
        s3 = jnp.zeros((Bp, OUT), f32)
        for t in range(T):
            i3_t = i3_all[t * Bp:(t + 1) * Bp, :]
            if membrane_filter:
                v3 = v3 * (decay3 * (1.0 - s3)) + i3_t
            else:
                v3 = v3 * (1.0 - s3) + i3_t
            s3 = jnp.where(v3 > threshold, 1.0, 0.0).astype(f32)
            out_ref[t * Bp:(t + 1) * Bp, :] = s3

    return kernel


def _iir_scale_rows(a1, a2, T):
    """Per-feature dual-exp IIR response to a constant unit input.

    S[-1] = S[-2] = 0;  S[t] = a1*S[t-1] + a2*S[t-2] + 1.  Returns [T, H]."""
    s_prev = jnp.zeros_like(a1)
    s_prev2 = jnp.zeros_like(a1)
    rows = []
    for _ in range(T):
        s = a1 * s_prev + a2 * s_prev2 + 1.0
        rows.append(s)
        s_prev2, s_prev = s_prev, s
    return jnp.concatenate(rows, axis=0)


def ann1_snn2_forward(x, params, *, length, tau_m, tau_s, membrane_filter=True):
    """x: [B, 784] float32. Returns spike_l3: [B, 10, length] float32."""
    B = x.shape[0]
    IN, H1, H2, OUT = 784, 500, 500, 10
    H1p, H2p = 512, 512                 # pad hidden dims to full 128-lane tiles
    Bp = ((B + 7) // 8) * 8             # pad batch to full f32 sublane groups
    T = length
    decay = math.exp(-1.0 / tau_m)

    f32, bf16 = jnp.float32, jnp.bfloat16

    # bf16 inputs/weights on the MXU path: halves the dominant weight DMA and
    # runs the MXU at native bf16 rate; elementwise state stays f32 in-kernel.
    x_pad = jnp.pad(x.astype(f32), ((0, Bp - B), (0, 0))).astype(bf16)
    w1 = jnp.pad(params["w1"], ((0, 0), (0, H1p - H1))).astype(bf16)
    b1 = jnp.pad(params["b1"], ((0, 0), (0, H1p - H1)))
    w2 = jnp.pad(params["w2"], ((0, H1p - H1), (0, H2p - H2))).astype(bf16)
    b2 = jnp.pad(params["b2"], ((0, 0), (0, H2p - H2)))
    w3 = jnp.pad(params["w3"], ((0, H2p - H2), (0, 0))).astype(bf16)
    b3 = params["b3"]
    a1_2 = jnp.pad(params["a1_2"], ((0, 0), (0, H1p - H1)))
    a2_2 = jnp.pad(params["a2_2"], ((0, 0), (0, H1p - H1)))
    a1_3 = jnp.pad(params["a1_3"], ((0, 0), (0, H2p - H2)))
    a2_3 = jnp.pad(params["a2_3"], ((0, 0), (0, H2p - H2)))

    # axon-2 input is constant over time -> precompute per-feature scale rows.
    scale2 = _iir_scale_rows(a1_2, a2_2, T)              # [T, H1p] f32

    kernel = _make_kernel(T, Bp, H1p, H2p, OUT, decay, decay, membrane_filter)
    vmem = pl.BlockSpec(memory_space=pltpu.MemorySpace.VMEM)
    hbm = pl.BlockSpec(memory_space=pl.ANY)              # manual DMA inside kernel

    # No grid: ~1.3 MB of weights + ~0.4 MB scratch fits one TensorCore's VMEM
    # on v5e/v6e/v7x with large headroom.
    # TODO(synk): at production batch sizes add a batch grid axis with
    #             dimension_semantics=("parallel",) (weights index_map -> constant
    #             block so they stay VMEM-resident) to use both v7x cores and
    #             amortize the weight DMA across batch tiles.
    out_flat = pl.pallas_call(
        kernel,
        out_shape=jax.ShapeDtypeStruct((T * Bp, OUT), jnp.float32),
        in_specs=[vmem] * 8 + [hbm, hbm],
        out_specs=vmem,
        scratch_shapes=[
            pltpu.VMEM((H1p, H2p), bf16),      # W2 landing buffer (manual DMA)
            pltpu.VMEM((H2p, OUT), bf16),      # W3 landing buffer (manual DMA)
            pltpu.VMEM((T * Bp, H1p), bf16),   # psp2 slabs, all time steps (MXU LHS)
            pltpu.VMEM((T * Bp, H2p), f32),    # i2 slabs, all time steps
            pltpu.VMEM((T * Bp, H2p), bf16),   # psp3 slabs, all time steps (MXU LHS)
            pltpu.SemaphoreType.DMA((2,)),     # W2 / W3 copy completion
        ],
        compiler_params=pltpu.CompilerParams(
            vmem_limit_bytes=32 * 1024 * 1024),
    )(x_pad, w1, b1, scale2, b2, a1_3, a2_3, b3, w2, w3)

    # [T*Bp, 10] -> [T, B, 10] -> PyTorch convention [batch, features, time]
    out = out_flat.reshape(T, Bp, OUT)[:, :B, :]
    return jnp.transpose(out, (1, 2, 0))


def init_params(key, tau_m, tau_s):
    """Deterministic synthetic parameters (PyTorch-Linear-style uniform init).

    Weights stored as [in, out] so the kernel computes x @ W (== torch x @ W.T)."""
    IN, H1, H2, OUT = 784, 500, 500, 10
    ks = jax.random.split(key, 6)

    def linear(kw, kb, fan_in, fan_out):
        bound = 1.0 / math.sqrt(fan_in)
        w = jax.random.uniform(kw, (fan_in, fan_out), jnp.float32, -bound, bound)
        b = jax.random.uniform(kb, (1, fan_out), jnp.float32, -bound, bound)
        return w, b

    w1, b1 = linear(ks[0], ks[1], IN, H1)   # mlp1
    w2, b2 = linear(ks[2], ks[3], H1, H2)   # snn2 dense (train_bias=True)
    w3, b3 = linear(ks[4], ks[5], H2, OUT)  # snn3 dense

    am = math.exp(-1.0 / tau_m)
    as_ = math.exp(-1.0 / tau_s)
    a1_2 = jnp.full((1, H1), am + as_, jnp.float32)   # per-feature IIR coeffs
    a2_2 = jnp.full((1, H1), -am * as_, jnp.float32)  # (train_coefficients init)
    a1_3 = jnp.full((1, H2), am + as_, jnp.float32)
    a2_3 = jnp.full((1, H2), -am * as_, jnp.float32)
    return dict(w1=w1, b1=b1, w2=w2, b2=b2, w3=w3, b3=b3,
                a1_2=a1_2, a2_2=a2_2, a1_3=a1_3, a2_3=a2_3)


if __name__ == "__main__":
    B, T = 2, 8                # batch_size=2, length=8 (time steps)
    tau_m, tau_s = 4, 1
    key = jax.random.PRNGKey(0)
    kx, kp = jax.random.split(key)
    x = jax.random.uniform(kx, (B, 784), jnp.float32)   # MNIST-like flat input
    params = init_params(kp, tau_m, tau_s)

    spike_l3 = ann1_snn2_forward(
        x, params, length=T, tau_m=tau_m, tau_s=tau_s, membrane_filter=True)
    spike_l3 = jax.block_until_ready(spike_l3)

    assert spike_l3.shape == (B, 10, T)
    assert bool(jnp.all(jnp.isfinite(spike_l3)))
    assert bool(jnp.all((spike_l3 == 0.0) | (spike_l3 == 1.0)))
    print("KERNEL_OK")
</pallas_src>

<mosaic_0001>
module attributes {stable_mosaic.version = 11 : i64} {
  func.func @kernel(%arg0: memref<8x784xbf16, #tpu.memory_space<vmem>>, %arg1: memref<784x512xbf16, #tpu.memory_space<vmem>>, %arg2: memref<1x512xf32, #tpu.memory_space<vmem>>, %arg3: memref<8x512xf32, #tpu.memory_space<vmem>>, %arg4: memref<1x512xf32, #tpu.memory_space<vmem>>, %arg5: memref<1x512xf32, #tpu.memory_space<vmem>>, %arg6: memref<1x512xf32, #tpu.memory_space<vmem>>, %arg7: memref<1x10xf32, #tpu.memory_space<vmem>>, %arg8: memref<512x512xbf16, #tpu.memory_space<any>>, %arg9: memref<512x10xbf16, #tpu.memory_space<any>>, %arg10: memref<64x10xf32, #tpu.memory_space<vmem>>, %arg11: memref<512x512xbf16, #tpu.memory_space<vmem>>, %arg12: memref<512x10xbf16, #tpu.memory_space<vmem>>, %arg13: memref<64x512xbf16, #tpu.memory_space<vmem>>, %arg14: memref<64x512xf32, #tpu.memory_space<vmem>>, %arg15: memref<64x512xbf16, #tpu.memory_space<vmem>>, %arg16: memref<2x!tpu.dma_semaphore, #tpu.memory_space<semaphore_mem>>) attributes {dimension_semantics = [], scalar_prefetch = 0 : i64, scratch_operands = 6 : i64, tpu.core_type = #tpu.core_type<tc>} {
    %c0_i32 = arith.constant 0 : i32
    %0 = tpu.memref_slice %arg16[%c0_i32] : memref<2x!tpu.dma_semaphore, #tpu.memory_space<semaphore_mem>> -> memref<1x!tpu.dma_semaphore, #tpu.memory_space<semaphore_mem>>
    %1 = tpu.memref_squeeze %0 : memref<1x!tpu.dma_semaphore, #tpu.memory_space<semaphore_mem>> -> memref<!tpu.dma_semaphore, #tpu.memory_space<semaphore_mem>>
    tpu.enqueue_dma source(%arg8 : memref<512x512xbf16, #tpu.memory_space<any>>) target(%arg11 : memref<512x512xbf16, #tpu.memory_space<vmem>>) target_semaphore(%1 : memref<!tpu.dma_semaphore, #tpu.memory_space<semaphore_mem>>)
    %c1_i32 = arith.constant 1 : i32
    %2 = tpu.memref_slice %arg16[%c1_i32] : memref<2x!tpu.dma_semaphore, #tpu.memory_space<semaphore_mem>> -> memref<1x!tpu.dma_semaphore, #tpu.memory_space<semaphore_mem>>
    %3 = tpu.memref_squeeze %2 : memref<1x!tpu.dma_semaphore, #tpu.memory_space<semaphore_mem>> -> memref<!tpu.dma_semaphore, #tpu.memory_space<semaphore_mem>>
    tpu.enqueue_dma source(%arg9 : memref<512x10xbf16, #tpu.memory_space<any>>) target(%arg12 : memref<512x10xbf16, #tpu.memory_space<vmem>>) target_semaphore(%3 : memref<!tpu.dma_semaphore, #tpu.memory_space<semaphore_mem>>)
    %c0 = arith.constant 0 : index
    %c0_0 = arith.constant 0 : index
    %4 = vector.load %arg0[%c0, %c0_0] : memref<8x784xbf16, #tpu.memory_space<vmem>>, vector<8x784xbf16>
    %c0_1 = arith.constant 0 : index
    %c0_2 = arith.constant 0 : index
    %5 = vector.load %arg1[%c0_1, %c0_2] : memref<784x512xbf16, #tpu.memory_space<vmem>>, vector<784x512xbf16>
    %cst = arith.constant dense<0.000000e+00> : vector<8x512xf32>
    %6 = tpu.matmul %4, %5, %cst {dimension_numbers = #tpu.dot_dimension_numbers<[1], [0], [0], [1], [0, 0, 1, 1], [], []>} : vector<8x784xbf16>, vector<784x512xbf16>, vector<8x512xf32> -> vector<8x512xf32>
    %c0_3 = arith.constant 0 : index
    %c0_4 = arith.constant 0 : index
    %7 = vector.load %arg2[%c0_3, %c0_4] : memref<1x512xf32, #tpu.memory_space<vmem>>, vector<1x512xf32>
    %8 = vector.broadcast %7 : vector<1x512xf32> to vector<8x512xf32>
    %9 = arith.addf %6, %8 : vector<8x512xf32>
    %10 = arith.negf %9 : vector<8x512xf32>
    %11 = math.exp %10 : vector<8x512xf32>
    %cst_5 = arith.constant 1.000000e+00 : f32
    %12 = vector.broadcast %cst_5 : f32 to vector<8x512xf32>
    %13 = arith.addf %12, %11 : vector<8x512xf32>
    %14 = arith.divf %12, %13 : vector<8x512xf32>
    %c0_6 = arith.constant 0 : index
    %c0_7 = arith.constant 0 : index
    %15 = vector.load %arg5[%c0_6, %c0_7] : memref<1x512xf32, #tpu.memory_space<vmem>>, vector<1x512xf32>
    %16 = vector.shape_cast %15 : vector<1x512xf32> to vector<1x512xf32>
    %17 = vector.broadcast %16 : vector<1x512xf32> to vector<8x512xf32>
    %c0_8 = arith.constant 0 : index
    %c0_9 = arith.constant 0 : index
    %18 = vector.load %arg6[%c0_8, %c0_9] : memref<1x512xf32, #tpu.memory_space<vmem>>, vector<1x512xf32>
    %19 = vector.shape_cast %18 : vector<1x512xf32> to vector<1x512xf32>
    %20 = vector.broadcast %19 : vector<1x512xf32> to vector<8x512xf32>
    %c0_10 = arith.constant 0 : index
    %c0_11 = arith.constant 0 : index
    %21 = vector.load %arg3[%c0_10, %c0_11] : memref<8x512xf32, #tpu.memory_space<vmem>>, vector<8x512xf32>
    %22 = vector.extract_strided_slice %21 {offsets = [0, 0], sizes = [1, 512], strides = [1, 1]} : vector<8x512xf32> to vector<1x512xf32>
    %23 = vector.broadcast %22 : vector<1x512xf32> to vector<8x512xf32>
    %24 = arith.mulf %23, %14 : vector<8x512xf32>
    %25 = arith.truncf %24 : vector<8x512xf32> to vector<8x512xbf16>
    %c0_12 = arith.constant 0 : index
    %c0_13 = arith.constant 0 : index
    %26 = vector.load %arg13[%c0_12, %c0_13] : memref<64x512xbf16, #tpu.memory_space<vmem>>, vector<8x512xbf16>
    tpu.vector_store %arg13[%c0_12, %c0_13], %25 {strides = array<i32>} : memref<64x512xbf16, #tpu.memory_space<vmem>>, vector<8x512xbf16>,
    %27 = vector.extract_strided_slice %21 {offsets = [1, 0], sizes = [1, 512], strides = [1, 1]} : vector<8x512xf32> to vector<1x512xf32>
    %28 = vector.broadcast %27 : vector<1x512xf32> to vector<8x512xf32>
    %29 = arith.mulf %28, %14 : vector<8x512xf32>
    %30 = arith.truncf %29 : vector<8x512xf32> to vector<8x512xbf16>
    %c8 = arith.constant 8 : index
    %c0_14 = arith.constant 0 : index
    %31 = vector.load %arg13[%c8, %c0_14] : memref<64x512xbf16, #tpu.memory_space<vmem>>, vector<8x512xbf16>
    tpu.vector_store %arg13[%c8, %c0_14], %30 {strides = array<i32>} : memref<64x512xbf16, #tpu.memory_space<vmem>>, vector<8x512xbf16>,
    %32 = vector.extract_strided_slice %21 {offsets = [2, 0], sizes = [1, 512], strides = [1, 1]} : vector<8x512xf32> to vector<1x512xf32>
    %33 = vector.broadcast %32 : vector<1x512xf32> to vector<8x512xf32>
    %34 = arith.mulf %33, %14 : vector<8x512xf32>
    %35 = arith.truncf %34 : vector<8x512xf32> to vector<8x512xbf16>
    %c16 = arith.constant 16 : index
    %c0_15 = arith.constant 0 : index
    %36 = vector.load %arg13[%c16, %c0_15] : memref<64x512xbf16, #tpu.memory_space<vmem>>, vector<8x512xbf16>
    tpu.vector_store %arg13[%c16, %c0_15], %35 {strides = array<i32>} : memref<64x512xbf16, #tpu.memory_space<vmem>>, vector<8x512xbf16>,
    %37 = vector.extract_strided_slice %21 {offsets = [3, 0], sizes = [1, 512], strides = [1, 1]} : vector<8x512xf32> to vector<1x512xf32>
    %38 = vector.broadcast %37 : vector<1x512xf32> to vector<8x512xf32>
    %39 = arith.mulf %38, %14 : vector<8x512xf32>
    %40 = arith.truncf %39 : vector<8x512xf32> to vector<8x512xbf16>
    %c24 = arith.constant 24 : index
    %c0_16 = arith.constant 0 : index
    %41 = vector.load %arg13[%c24, %c0_16] : memref<64x512xbf16, #tpu.memory_space<vmem>>, vector<8x512xbf16>
    tpu.vector_store %arg13[%c24, %c0_16], %40 {strides = array<i32>} : memref<64x512xbf16, #tpu.memory_space<vmem>>, vector<8x512xbf16>,
    %42 = vector.extract_strided_slice %21 {offsets = [4, 0], sizes = [1, 512], strides = [1, 1]} : vector<8x512xf32> to vector<1x512xf32>
    %43 = vector.broadcast %42 : vector<1x512xf32> to vector<8x512xf32>
    %44 = arith.mulf %43, %14 : vector<8x512xf32>
    %45 = arith.truncf %44 : vector<8x512xf32> to vector<8x512xbf16>
    %c32 = arith.constant 32 : index
    %c0_17 = arith.constant 0 : index
    %46 = vector.load %arg13[%c32, %c0_17] : memref<64x512xbf16, #tpu.memory_space<vmem>>, vector<8x512xbf16>
    tpu.vector_store %arg13[%c32, %c0_17], %45 {strides = array<i32>} : memref<64x512xbf16, #tpu.memory_space<vmem>>, vector<8x512xbf16>,
    %47 = vector.extract_strided_slice %21 {offsets = [5, 0], sizes = [1, 512], strides = [1, 1]} : vector<8x512xf32> to vector<1x512xf32>
    %48 = vector.broadcast %47 : vector<1x512xf32> to vector<8x512xf32>
    %49 = arith.mulf %48, %14 : vector<8x512xf32>
    %50 = arith.truncf %49 : vector<8x512xf32> to vector<8x512xbf16>
    %c40 = arith.constant 40 : index
    %c0_18 = arith.constant 0 : index
    %51 = vector.load %arg13[%c40, %c0_18] : memref<64x512xbf16, #tpu.memory_space<vmem>>, vector<8x512xbf16>
    tpu.vector_store %arg13[%c40, %c0_18], %50 {strides = array<i32>} : memref<64x512xbf16, #tpu.memory_space<vmem>>, vector<8x512xbf16>,
    %52 = vector.extract_strided_slice %21 {offsets = [6, 0], sizes = [1, 512], strides = [1, 1]} : vector<8x512xf32> to vector<1x512xf32>
    %53 = vector.broadcast %52 : vector<1x512xf32> to vector<8x512xf32>
    %54 = arith.mulf %53, %14 : vector<8x512xf32>
    %55 = arith.truncf %54 : vector<8x512xf32> to vector<8x512xbf16>
    %c48 = arith.constant 48 : index
    %c0_19 = arith.constant 0 : index
    %56 = vector.load %arg13[%c48, %c0_19] : memref<64x512xbf16, #tpu.memory_space<vmem>>, vector<8x512xbf16>
    tpu.vector_store %arg13[%c48, %c0_19], %55 {strides = array<i32>} : memref<64x512xbf16, #tpu.memory_space<vmem>>, vector<8x512xbf16>,
    %57 = vector.extract_strided_slice %21 {offsets = [7, 0], sizes = [1, 512], strides = [1, 1]} : vector<8x512xf32> to vector<1x512xf32>
    %58 = vector.broadcast %57 : vector<1x512xf32> to vector<8x512xf32>
    %59 = arith.mulf %58, %14 : vector<8x512xf32>
    %60 = arith.truncf %59 : vector<8x512xf32> to vector<8x512xbf16>
    %c56 = arith.constant 56 : index
    %c0_20 = arith.constant 0 : index
    %61 = vector.load %arg13[%c56, %c0_20] : memref<64x512xbf16, #tpu.memory_space<vmem>>, vector<8x512xbf16>
    tpu.vector_store %arg13[%c56, %c0_20], %60 {strides = array<i32>} : memref<64x512xbf16, #tpu.memory_space<vmem>>, vector<8x512xbf16>,
    %c0_i32_21 = arith.constant 0 : i32
    %62 = tpu.memref_slice %arg16[%c0_i32_21] : memref<2x!tpu.dma_semaphore, #tpu.memory_space<semaphore_mem>> -> memref<1x!tpu.dma_semaphore, #tpu.memory_space<semaphore_mem>>
    %63 = tpu.memref_squeeze %62 : memref<1x!tpu.dma_semaphore, #tpu.memory_space<semaphore_mem>> -> memref<!tpu.dma_semaphore, #tpu.memory_space<semaphore_mem>>
    tpu.wait_dma2 semaphore(%63 : memref<!tpu.dma_semaphore, #tpu.memory_space<semaphore_mem>>) src(%arg8 : memref<512x512xbf16, #tpu.memory_space<any>>) dst(%arg11 : memref<512x512xbf16, #tpu.memory_space<vmem>>)
    %c0_22 = arith.constant 0 : index
    %c0_23 = arith.constant 0 : index
    %64 = vector.load %arg13[%c0_22, %c0_23] : memref<64x512xbf16, #tpu.memory_space<vmem>>, vector<64x512xbf16>
    %c0_24 = arith.constant 0 : index
    %c0_25 = arith.constant 0 : index
    %65 = vector.load %arg11[%c0_24, %c0_25] : memref<512x512xbf16, #tpu.memory_space<vmem>>, vector<512x512xbf16>
    %cst_26 = arith.constant dense<0.000000e+00> : vector<64x512xf32>
    %66 = tpu.matmul %64, %65, %cst_26 {dimension_numbers = #tpu.dot_dimension_numbers<[1], [0], [0], [1], [0, 0, 1, 1], [], []>} : vector<64x512xbf16>, vector<512x512xbf16>, vector<64x512xf32> -> vector<64x512xf32>
    %c0_27 = arith.constant 0 : index
    %c0_28 = arith.constant 0 : index
    %67 = vector.load %arg4[%c0_27, %c0_28] : memref<1x512xf32, #tpu.memory_space<vmem>>, vector<1x512xf32>
    %68 = vector.broadcast %67 : vector<1x512xf32> to vector<64x512xf32>
    %69 = arith.addf %66, %68 : vector<64x512xf32>
    %c0_29 = arith.constant 0 : index
    %c0_30 = arith.constant 0 : index
    %70 = vector.load %arg14[%c0_29, %c0_30] : memref<64x512xf32, #tpu.memory_space<vmem>>, vector<64x512xf32>
    tpu.vector_store %arg14[%c0_29, %c0_30], %69 {strides = array<i32>} : memref<64x512xf32, #tpu.memory_space<vmem>>, vector<64x512xf32>,
    %cst_31 = arith.constant 0.000000e+00 : f32
    %71 = vector.broadcast %cst_31 : f32 to vector<8x512xf32>
    %cst_32 = arith.constant 0.000000e+00 : f32
    %72 = vector.broadcast %cst_32 : f32 to vector<8x512xf32>
    %cst_33 = arith.constant 0.000000e+00 : f32
    %73 = vector.broadcast %cst_33 : f32 to vector<8x512xf32>
    %cst_34 = arith.constant 0.000000e+00 : f32
    %74 = vector.broadcast %cst_34 : f32 to vector<8x512xf32>
    %c0_35 = arith.constant 0 : index
    %c0_36 = arith.constant 0 : index
    %75 = vector.load %arg14[%c0_35, %c0_36] : memref<64x512xf32, #tpu.memory_space<vmem>>, vector<8x512xf32>
    %cst_37 = arith.constant 1.000000e+00 : f32
    %76 = vector.broadcast %cst_37 : f32 to vector<8x512xf32>
    %77 = arith.subf %76, %72 : vector<8x512xf32>
    %cst_38 = arith.constant 0.778800785 : f32
    %78 = vector.broadcast %cst_38 : f32 to vector<8x512xf32>
    %79 = arith.mulf %78, %77 : vector<8x512xf32>
    %80 = arith.mulf %71, %79 : vector<8x512xf32>
    %81 = arith.addf %80, %75 : vector<8x512xf32>
    %cst_39 = arith.constant 1.000000e+00 : f32
    %82 = vector.broadcast %cst_39 : f32 to vector<8x512xf32>
    %83 = arith.cmpf ogt, %81, %82 : vector<8x512xf32>
    %cst_40 = arith.constant 1.000000e+00 : f32
    %cst_41 = arith.constant 0.000000e+00 : f32
    %84 = vector.broadcast %cst_40 : f32 to vector<8x512xf32>
    %85 = vector.broadcast %cst_41 : f32 to vector<8x512xf32>
    %86 = arith.select %83, %84, %85 : vector<8x512xi1>, vector<8x512xf32>
    %87 = arith.mulf %17, %73 : vector<8x512xf32>
    %88 = arith.mulf %20, %74 : vector<8x512xf32>
    %89 = arith.addf %87, %88 : vector<8x512xf32>
    %90 = arith.addf %89, %86 : vector<8x512xf32>
    %91 = arith.truncf %90 : vector<8x512xf32> to vector<8x512xbf16>
    %c0_42 = arith.constant 0 : index
    %c0_43 = arith.constant 0 : index
    %92 = vector.load %arg15[%c0_42, %c0_43] : memref<64x512xbf16, #tpu.memory_space<vmem>>, vector<8x512xbf16>
    tpu.vector_store %arg15[%c0_42, %c0_43], %91 {strides = array<i32>} : memref<64x512xbf16, #tpu.memory_space<vmem>>, vector<8x512xbf16>,
    %c8_44 = arith.constant 8 : index
    %c0_45 = arith.constant 0 : index
    %93 = vector.load %arg14[%c8_44, %c0_45] : memref<64x512xf32, #tpu.memory_space<vmem>>, vector<8x512xf32>
    %cst_46 = arith.constant 1.000000e+00 : f32
    %94 = vector.broadcast %cst_46 : f32 to vector<8x512xf32>
    %95 = arith.subf %94, %86 : vector<8x512xf32>
    %cst_47 = arith.constant 0.778800785 : f32
    %96 = vector.broadcast %cst_47 : f32 to vector<8x512xf32>
    %97 = arith.mulf %96, %95 : vector<8x512xf32>
    %98 = arith.mulf %81, %97 : vector<8x512xf32>
    %99 = arith.addf %98, %93 : vector<8x512xf32>
    %cst_48 = arith.constant 1.000000e+00 : f32
    %100 = vector.broadcast %cst_48 : f32 to vector<8x512xf32>
    %101 = arith.cmpf ogt, %99, %100 : vector<8x512xf32>
    %cst_49 = arith.constant 1.000000e+00 : f32
    %cst_50 = arith.constant 0.000000e+00 : f32
    %102 = vector.broadcast %cst_49 : f32 to vector<8x512xf32>
    %103 = vector.broadcast %cst_50 : f32 to vector<8x512xf32>
    %104 = arith.select %101, %102, %103 : vector<8x512xi1>, vector<8x512xf32>
    %105 = arith.mulf %17, %90 : vector<8x512xf32>
    %106 = arith.mulf %20, %73 : vector<8x512xf32>
    %107 = arith.addf %105, %106 : vector<8x512xf32>
    %108 = arith.addf %107, %104 : vector<8x512xf32>
    %109 = arith.truncf %108 : vector<8x512xf32> to vector<8x512xbf16>
    %c8_51 = arith.constant 8 : index
    %c0_52 = arith.constant 0 : index
    %110 = vector.load %arg15[%c8_51, %c0_52] : memref<64x512xbf16, #tpu.memory_space<vmem>>, vector<8x512xbf16>
    tpu.vector_store %arg15[%c8_51, %c0_52], %109 {strides = array<i32>} : memref<64x512xbf16, #tpu.memory_space<vmem>>, vector<8x512xbf16>,
    %c16_53 = arith.constant 16 : index
    %c0_54 = arith.constant 0 : index
    %111 = vector.load %arg14[%c16_53, %c0_54] : memref<64x512xf32, #tpu.memory_space<vmem>>, vector<8x512xf32>
    %cst_55 = arith.constant 1.000000e+00 : f32
    %112 = vector.broadcast %cst_55 : f32 to vector<8x512xf32>
    %113 = arith.subf %112, %104 : vector<8x512xf32>
    %cst_56 = arith.constant 0.778800785 : f32
    %114 = vector.broadcast %cst_56 : f32 to vector<8x512xf32>
    %115 = arith.mulf %114, %113 : vector<8x512xf32>
    %116 = arith.mulf %99, %115 : vector<8x512xf32>
    %117 = arith.addf %116, %111 : vector<8x512xf32>
    %cst_57 = arith.constant 1.000000e+00 : f32
    %118 = vector.broadcast %cst_57 : f32 to vector<8x512xf32>
    %119 = arith.cmpf ogt, %117, %118 : vector<8x512xf32>
    %cst_58 = arith.constant 1.000000e+00 : f32
    %cst_59 = arith.constant 0.000000e+00 : f32
    %120 = vector.broadcast %cst_58 : f32 to vector<8x512xf32>
    %121 = vector.broadcast %cst_59 : f32 to vector<8x512xf32>
    %122 = arith.select %119, %120, %121 : vector<8x512xi1>, vector<8x512xf32>
    %123 = arith.mulf %17, %108 : vector<8x512xf32>
    %124 = arith.mulf %20, %90 : vector<8x512xf32>
    %125 = arith.addf %123, %124 : vector<8x512xf32>
    %126 = arith.addf %125, %122 : vector<8x512xf32>
    %127 = arith.truncf %126 : vector<8x512xf32> to vector<8x512xbf16>
    %c16_60 = arith.constant 16 : index
    %c0_61 = arith.constant 0 : index
    %128 = vector.load %arg15[%c16_60, %c0_61] : memref<64x512xbf16, #tpu.memory_space<vmem>>, vector<8x512xbf16>
    tpu.vector_store %arg15[%c16_60, %c0_61], %127 {strides = array<i32>} : memref<64x512xbf16, #tpu.memory_space<vmem>>, vector<8x512xbf16>,
    %c24_62 = arith.constant 24 : index
    %c0_63 = arith.constant 0 : index
    %129 = vector.load %arg14[%c24_62, %c0_63] : memref<64x512xf32, #tpu.memory_space<vmem>>, vector<8x512xf32>
    %cst_64 = arith.constant 1.000000e+00 : f32
    %130 = vector.broadcast %cst_64 : f32 to vector<8x512xf32>
    %131 = arith.subf %130, %122 : vector<8x512xf32>
    %cst_65 = arith.constant 0.778800785 : f32
    %132 = vector.broadcast %cst_65 : f32 to vector<8x512xf32>
    %133 = arith.mulf %132, %131 : vector<8x512xf32>
    %134 = arith.mulf %117, %133 : vector<8x512xf32>
    %135 = arith.addf %134, %129 : vector<8x512xf32>
    %cst_66 = arith.constant 1.000000e+00 : f32
    %136 = vector.broadcast %cst_66 : f32 to vector<8x512xf32>
    %137 = arith.cmpf ogt, %135, %136 : vector<8x512xf32>
    %cst_67 = arith.constant 1.000000e+00 : f32
    %cst_68 = arith.constant 0.000000e+00 : f32
    %138 = vector.broadcast %cst_67 : f32 to vector<8x512xf32>
    %139 = vector.broadcast %cst_68 : f32 to vector<8x512xf32>
    %140 = arith.select %137, %138, %139 : vector<8x512xi1>, vector<8x512xf32>
    %141 = arith.mulf %17, %126 : vector<8x512xf32>
    %142 = arith.mulf %20, %108 : vector<8x512xf32>
    %143 = arith.addf %141, %142 : vector<8x512xf32>
    %144 = arith.addf %143, %140 : vector<8x512xf32>
    %145 = arith.truncf %144 : vector<8x512xf32> to vector<8x512xbf16>
    %c24_69 = arith.constant 24 : index
    %c0_70 = arith.constant 0 : index
    %146 = vector.load %arg15[%c24_69, %c0_70] : memref<64x512xbf16, #tpu.memory_space<vmem>>, vector<8x512xbf16>
    tpu.vector_store %arg15[%c24_69, %c0_70], %145 {strides = array<i32>} : memref<64x512xbf16, #tpu.memory_space<vmem>>, vector<8x512xbf16>,
    %c32_71 = arith.constant 32 : index
    %c0_72 = arith.constant 0 : index
    %147 = vector.load %arg14[%c32_71, %c0_72] : memref<64x512xf32, #tpu.memory_space<vmem>>, vector<8x512xf32>
    %cst_73 = arith.constant 1.000000e+00 : f32
    %148 = vector.broadcast %cst_73 : f32 to vector<8x512xf32>
    %149 = arith.subf %148, %140 : vector<8x512xf32>
    %cst_74 = arith.constant 0.778800785 : f32
    %150 = vector.broadcast %cst_74 : f32 to vector<8x512xf32>
    %151 = arith.mulf %150, %149 : vector<8x512xf32>
    %152 = arith.mulf %135, %151 : vector<8x512xf32>
    %153 = arith.addf %152, %147 : vector<8x512xf32>
    %cst_75 = arith.constant 1.000000e+00 : f32
    %154 = vector.broadcast %cst_75 : f32 to vector<8x512xf32>
    %155 = arith.cmpf ogt, %153, %154 : vector<8x512xf32>
    %cst_76 = arith.constant 1.000000e+00 : f32
    %cst_77 = arith.constant 0.000000e+00 : f32
    %156 = vector.broadcast %cst_76 : f32 to vector<8x512xf32>
    %157 = vector.broadcast %cst_77 : f32 to vector<8x512xf32>
    %158 = arith.select %155, %156, %157 : vector<8x512xi1>, vector<8x512xf32>
    %159 = arith.mulf %17, %144 : vector<8x512xf32>
    %160 = arith.mulf %20, %126 : vector<8x512xf32>
    %161 = arith.addf %159, %160 : vector<8x512xf32>
    %162 = arith.addf %161, %158 : vector<8x512xf32>
    %163 = arith.truncf %162 : vector<8x512xf32> to vector<8x512xbf16>
    %c32_78 = arith.constant 32 : index
    %c0_79 = arith.constant 0 : index
    %164 = vector.load %arg15[%c32_78, %c0_79] : memref<64x512xbf16, #tpu.memory_space<vmem>>, vector<8x512xbf16>
    tpu.vector_store %arg15[%c32_78, %c0_79], %163 {strides = array<i32>} : memref<64x512xbf16, #tpu.memory_space<vmem>>, vector<8x512xbf16>,
    %c40_80 = arith.constant 40 : index
    %c0_81 = arith.constant 0 : index
    %165 = vector.load %arg14[%c40_80, %c0_81] : memref<64x512xf32, #tpu.memory_space<vmem>>, vector<8x512xf32>
    %cst_82 = arith.constant 1.000000e+00 : f32
    %166 = vector.broadcast %cst_82 : f32 to vector<8x512xf32>
    %167 = arith.subf %166, %158 : vector<8x512xf32>
    %cst_83 = arith.constant 0.778800785 : f32
    %168 = vector.broadcast %cst_83 : f32 to vector<8x512xf32>
    %169 = arith.mulf %168, %167 : vector<8x512xf32>
    %170 = arith.mulf %153, %169 : vector<8x512xf32>
    %171 = arith.addf %170, %165 : vector<8x512xf32>
    %cst_84 = arith.constant 1.000000e+00 : f32
    %172 = vector.broadcast %cst_84 : f32 to vector<8x512xf32>
    %173 = arith.cmpf ogt, %171, %172 : vector<8x512xf32>
    %cst_85 = arith.constant 1.000000e+00 : f32
    %cst_86 = arith.constant 0.000000e+00 : f32
    %174 = vector.broadcast %cst_85 : f32 to vector<8x512xf32>
    %175 = vector.broadcast %cst_86 : f32 to vector<8x512xf32>
    %176 = arith.select %173, %174, %175 : vector<8x512xi1>, vector<8x512xf32>
    %177 = arith.mulf %17, %162 : vector<8x512xf32>
    %178 = arith.mulf %20, %144 : vector<8x512xf32>
    %179 = arith.addf %177, %178 : vector<8x512xf32>
    %180 = arith.addf %179, %176 : vector<8x512xf32>
    %181 = arith.truncf %180 : vector<8x512xf32> to vector<8x512xbf16>
    %c40_87 = arith.constant 40 : index
    %c0_88 = arith.constant 0 : index
    %182 = vector.load %arg15[%c40_87, %c0_88] : memref<64x512xbf16, #tpu.memory_space<vmem>>, vector<8x512xbf16>
    tpu.vector_store %arg15[%c40_87, %c0_88], %181 {strides = array<i32>} : memref<64x512xbf16, #tpu.memory_space<vmem>>, vector<8x512xbf16>,
    %c48_89 = arith.constant 48 : index
    %c0_90 = arith.constant 0 : index
    %183 = vector.load %arg14[%c48_89, %c0_90] : memref<64x512xf32, #tpu.memory_space<vmem>>, vector<8x512xf32>
    %cst_91 = arith.constant 1.000000e+00 : f32
    %184 = vector.broadcast %cst_91 : f32 to vector<8x512xf32>
    %185 = arith.subf %184, %176 : vector<8x512xf32>
    %cst_92 = arith.constant 0.778800785 : f32
    %186 = vector.broadcast %cst_92 : f32 to vector<8x512xf32>
    %187 = arith.mulf %186, %185 : vector<8x512xf32>
    %188 = arith.mulf %171, %187 : vector<8x512xf32>
    %189 = arith.addf %188, %183 : vector<8x512xf32>
    %cst_93 = arith.constant 1.000000e+00 : f32
    %190 = vector.broadcast %cst_93 : f32 to vector<8x512xf32>
    %191 = arith.cmpf ogt, %189, %190 : vector<8x512xf32>
    %cst_94 = arith.constant 1.000000e+00 : f32
    %cst_95 = arith.constant 0.000000e+00 : f32
    %192 = vector.broadcast %cst_94 : f32 to vector<8x512xf32>
    %193 = vector.broadcast %cst_95 : f32 to vector<8x512xf32>
    %194 = arith.select %191, %192, %193 : vector<8x512xi1>, vector<8x512xf32>
    %195 = arith.mulf %17, %180 : vector<8x512xf32>
    %196 = arith.mulf %20, %162 : vector<8x512xf32>
    %197 = arith.addf %195, %196 : vector<8x512xf32>
    %198 = arith.addf %197, %194 : vector<8x512xf32>
    %199 = arith.truncf %198 : vector<8x512xf32> to vector<8x512xbf16>
    %c48_96 = arith.constant 48 : index
    %c0_97 = arith.constant 0 : index
    %200 = vector.load %arg15[%c48_96, %c0_97] : memref<64x512xbf16, #tpu.memory_space<vmem>>, vector<8x512xbf16>
    tpu.vector_store %arg15[%c48_96, %c0_97], %199 {strides = array<i32>} : memref<64x512xbf16, #tpu.memory_space<vmem>>, vector<8x512xbf16>,
    %c56_98 = arith.constant 56 : index
    %c0_99 = arith.constant 0 : index
    %201 = vector.load %arg14[%c56_98, %c0_99] : memref<64x512xf32, #tpu.memory_space<vmem>>, vector<8x512xf32>
    %cst_100 = arith.constant 1.000000e+00 : f32
    %202 = vector.broadcast %cst_100 : f32 to vector<8x512xf32>
    %203 = arith.subf %202, %194 : vector<8x512xf32>
    %cst_101 = arith.constant 0.778800785 : f32
    %204 = vector.broadcast %cst_101 : f32 to vector<8x512xf32>
    %205 = arith.mulf %204, %203 : vector<8x512xf32>
    %206 = arith.mulf %189, %205 : vector<8x512xf32>
    %207 = arith.addf %206, %201 : vector<8x512xf32>
    %cst_102 = arith.constant 1.000000e+00 : f32
    %208 = vector.broadcast %cst_102 : f32 to vector<8x512xf32>
    %209 = arith.cmpf ogt, %207, %208 : vector<8x512xf32>
    %cst_103 = arith.constant 1.000000e+00 : f32
    %cst_104 = arith.constant 0.000000e+00 : f32
    %210 = vector.broadcast %cst_103 : f32 to vector<8x512xf32>
    %211 = vector.broadcast %cst_104 : f32 to vector<8x512xf32>
    %212 = arith.select %209, %210, %211 : vector<8x512xi1>, vector<8x512xf32>
    %213 = arith.mulf %17, %198 : vector<8x512xf32>
    %214 = arith.mulf %20, %180 : vector<8x512xf32>
    %215 = arith.addf %213, %214 : vector<8x512xf32>
    %216 = arith.addf %215, %212 : vector<8x512xf32>
    %217 = arith.truncf %216 : vector<8x512xf32> to vector<8x512xbf16>
    %c56_105 = arith.constant 56 : index
    %c0_106 = arith.constant 0 : index
    %218 = vector.load %arg15[%c56_105, %c0_106] : memref<64x512xbf16, #tpu.memory_space<vmem>>, vector<8x512xbf16>
    tpu.vector_store %arg15[%c56_105, %c0_106], %217 {strides = array<i32>} : memref<64x512xbf16, #tpu.memory_space<vmem>>, vector<8x512xbf16>,
    %c1_i32_107 = arith.constant 1 : i32
    %219 = tpu.memref_slice %arg16[%c1_i32_107] : memref<2x!tpu.dma_semaphore, #tpu.memory_space<semaphore_mem>> -> memref<1x!tpu.dma_semaphore, #tpu.memory_space<semaphore_mem>>
    %220 = tpu.memref_squeeze %219 : memref<1x!tpu.dma_semaphore, #tpu.memory_space<semaphore_mem>> -> memref<!tpu.dma_semaphore, #tpu.memory_space<semaphore_mem>>
    tpu.wait_dma2 semaphore(%220 : memref<!tpu.dma_semaphore, #tpu.memory_space<semaphore_mem>>) src(%arg9 : memref<512x10xbf16, #tpu.memory_space<any>>) dst(%arg12 : memref<512x10xbf16, #tpu.memory_space<vmem>>)
    %c0_108 = arith.constant 0 : index
    %c0_109 = arith.constant 0 : index
    %221 = vector.load %arg15[%c0_108, %c0_109] : memref<64x512xbf16, #tpu.memory_space<vmem>>, vector<64x512xbf16>
    %c0_110 = arith.constant 0 : index
    %c0_111 = arith.constant 0 : index
    %222 = vector.load %arg12[%c0_110, %c0_111] : memref<512x10xbf16, #tpu.memory_space<vmem>>, vector<512x10xbf16>
    %cst_112 = arith.constant dense<0.000000e+00> : vector<64x10xf32>
    %223 = tpu.matmul %221, %222, %cst_112 {dimension_numbers = #tpu.dot_dimension_numbers<[1], [0], [0], [1], [0, 0, 1, 1], [], []>} : vector<64x512xbf16>, vector<512x10xbf16>, vector<64x10xf32> -> vector<64x10xf32>
    %c0_113 = arith.constant 0 : index
    %c0_114 = arith.constant 0 : index
    %224 = vector.load %arg7[%c0_113, %c0_114] : memref<1x10xf32, #tpu.memory_space<vmem>>, vector<1x10xf32>
    %225 = vector.broadcast %224 : vector<1x10xf32> to vector<64x10xf32>
    %226 = arith.addf %223, %225 : vector<64x10xf32>
    %cst_115 = arith.constant 0.000000e+00 : f32
    %227 = vector.broadcast %cst_115 : f32 to vector<8x10xf32>
    %cst_116 = arith.constant 0.000000e+00 : f32
    %228 = vector.broadcast %cst_116 : f32 to vector<8x10xf32>
    %229 = vector.extract_strided_slice %226 {offsets = [0, 0], sizes = [8, 10], strides = [1, 1]} : vector<64x10xf32> to vector<8x10xf32>
    %cst_117 = arith.constant 1.000000e+00 : f32
    %230 = vector.broadcast %cst_117 : f32 to vector<8x10xf32>
    %231 = arith.subf %230, %228 : vector<8x10xf32>
    %cst_118 = arith.constant 0.778800785 : f32
    %232 = vector.broadcast %cst_118 : f32 to vector<8x10xf32>
    %233 = arith.mulf %232, %231 : vector<8x10xf32>
    %234 = arith.mulf %227, %233 : vector<8x10xf32>
    %235 = arith.addf %234, %229 : vector<8x10xf32>
    %cst_119 = arith.constant 1.000000e+00 : f32
    %236 = vector.broadcast %cst_119 : f32 to vector<8x10xf32>
    %237 = arith.cmpf ogt, %235, %236 : vector<8x10xf32>
    %cst_120 = arith.constant 1.000000e+00 : f32
    %cst_121 = arith.constant 0.000000e+00 : f32
    %238 = vector.broadcast %cst_120 : f32 to vector<8x10xf32>
    %239 = vector.broadcast %cst_121 : f32 to vector<8x10xf32>
    %240 = arith.select %237, %238, %239 : vector<8x10xi1>, vector<8x10xf32>
    %c0_122 = arith.constant 0 : index
    %c0_123 = arith.constant 0 : index
    %241 = vector.load %arg10[%c0_122, %c0_123] : memref<64x10xf32, #tpu.memory_space<vmem>>, vector<8x10xf32>
    tpu.vector_store %arg10[%c0_122, %c0_123], %240 {strides = array<i32>} : memref<64x10xf32, #tpu.memory_space<vmem>>, vector<8x10xf32>,
    %242 = vector.extract_strided_slice %226 {offsets = [8, 0], sizes = [8, 10], strides = [1, 1]} : vector<64x10xf32> to vector<8x10xf32>
    %cst_124 = arith.constant 1.000000e+00 : f32
    %243 = vector.broadcast %cst_124 : f32 to vector<8x10xf32>
    %244 = arith.subf %243, %240 : vector<8x10xf32>
    %cst_125 = arith.constant 0.778800785 : f32
    %245 = vector.broadcast %cst_125 : f32 to vector<8x10xf32>
    %246 = arith.mulf %245, %244 : vector<8x10xf32>
    %247 = arith.mulf %235, %246 : vector<8x10xf32>
    %248 = arith.addf %247, %242 : vector<8x10xf32>
    %cst_126 = arith.constant 1.000000e+00 : f32
    %249 = vector.broadcast %cst_126 : f32 to vector<8x10xf32>
    %250 = arith.cmpf ogt, %248, %249 : vector<8x10xf32>
    %cst_127 = arith.constant 1.000000e+00 : f32
    %cst_128 = arith.constant 0.000000e+00 : f32
    %251 = vector.broadcast %cst_127 : f32 to vector<8x10xf32>
    %252 = vector.broadcast %cst_128 : f32 to vector<8x10xf32>
    %253 = arith.select %250, %251, %252 : vector<8x10xi1>, vector<8x10xf32>
    %c8_129 = arith.constant 8 : index
    %c0_130 = arith.constant 0 : index
    %254 = vector.load %arg10[%c8_129, %c0_130] : memref<64x10xf32, #tpu.memory_space<vmem>>, vector<8x10xf32>
    tpu.vector_store %arg10[%c8_129, %c0_130], %253 {strides = array<i32>} : memref<64x10xf32, #tpu.memory_space<vmem>>, vector<8x10xf32>,
    %255 = vector.extract_strided_slice %226 {offsets = [16, 0], sizes = [8, 10], strides = [1, 1]} : vector<64x10xf32> to vector<8x10xf32>
    %cst_131 = arith.constant 1.000000e+00 : f32
    %256 = vector.broadcast %cst_131 : f32 to vector<8x10xf32>
    %257 = arith.subf %256, %253 : vector<8x10xf32>
    %cst_132 = arith.constant 0.778800785 : f32
    %258 = vector.broadcast %cst_132 : f32 to vector<8x10xf32>
    %259 = arith.mulf %258, %257 : vector<8x10xf32>
    %260 = arith.mulf %248, %259 : vector<8x10xf32>
    %261 = arith.addf %260, %255 : vector<8x10xf32>
    %cst_133 = arith.constant 1.000000e+00 : f32
    %262 = vector.broadcast %cst_133 : f32 to vector<8x10xf32>
    %263 = arith.cmpf ogt, %261, %262 : vector<8x10xf32>
    %cst_134 = arith.constant 1.000000e+00 : f32
    %cst_135 = arith.constant 0.000000e+00 : f32
    %264 = vector.broadcast %cst_134 : f32 to vector<8x10xf32>
    %265 = vector.broadcast %cst_135 : f32 to vector<8x10xf32>
    %266 = arith.select %263, %264, %265 : vector<8x10xi1>, vector<8x10xf32>
    %c16_136 = arith.constant 16 : index
    %c0_137 = arith.constant 0 : index
    %267 = vector.load %arg10[%c16_136, %c0_137] : memref<64x10xf32, #tpu.memory_space<vmem>>, vector<8x10xf32>
    tpu.vector_store %arg10[%c16_136, %c0_137], %266 {strides = array<i32>} : memref<64x10xf32, #tpu.memory_space<vmem>>, vector<8x10xf32>,
    %268 = vector.extract_strided_slice %226 {offsets = [24, 0], sizes = [8, 10], strides = [1, 1]} : vector<64x10xf32> to vector<8x10xf32>
    %cst_138 = arith.constant 1.000000e+00 : f32
    %269 = vector.broadcast %cst_138 : f32 to vector<8x10xf32>
    %270 = arith.subf %269, %266 : vector<8x10xf32>
    %cst_139 = arith.constant 0.778800785 : f32
    %271 = vector.broadcast %cst_139 : f32 to vector<8x10xf32>
    %272 = arith.mulf %271, %270 : vector<8x10xf32>
    %273 = arith.mulf %261, %272 : vector<8x10xf32>
    %274 = arith.addf %273, %268 : vector<8x10xf32>
    %cst_140 = arith.constant 1.000000e+00 : f32
    %275 = vector.broadcast %cst_140 : f32 to vector<8x10xf32>
    %276 = arith.cmpf ogt, %274, %275 : vector<8x10xf32>
    %cst_141 = arith.constant 1.000000e+00 : f32
    %cst_142 = arith.constant 0.000000e+00 : f32
    %277 = vector.broadcast %cst_141 : f32 to vector<8x10xf32>
    %278 = vector.broadcast %cst_142 : f32 to vector<8x10xf32>
    %279 = arith.select %276, %277, %278 : vector<8x10xi1>, vector<8x10xf32>
    %c24_143 = arith.constant 24 : index
    %c0_144 = arith.constant 0 : index
    %280 = vector.load %arg10[%c24_143, %c0_144] : memref<64x10xf32, #tpu.memory_space<vmem>>, vector<8x10xf32>
    tpu.vector_store %arg10[%c24_143, %c0_144], %279 {strides = array<i32>} : memref<64x10xf32, #tpu.memory_space<vmem>>, vector<8x10xf32>,
    %281 = vector.extract_strided_slice %226 {offsets = [32, 0], sizes = [8, 10], strides = [1, 1]} : vector<64x10xf32> to vector<8x10xf32>
    %cst_145 = arith.constant 1.000000e+00 : f32
    %282 = vector.broadcast %cst_145 : f32 to vector<8x10xf32>
    %283 = arith.subf %282, %279 : vector<8x10xf32>
    %cst_146 = arith.constant 0.778800785 : f32
    %284 = vector.broadcast %cst_146 : f32 to vector<8x10xf32>
    %285 = arith.mulf %284, %283 : vector<8x10xf32>
    %286 = arith.mulf %274, %285 : vector<8x10xf32>
    %287 = arith.addf %286, %281 : vector<8x10xf32>
    %cst_147 = arith.constant 1.000000e+00 : f32
    %288 = vector.broadcast %cst_147 : f32 to vector<8x10xf32>
    %289 = arith.cmpf ogt, %287, %288 : vector<8x10xf32>
    %cst_148 = arith.constant 1.000000e+00 : f32
    %cst_149 = arith.constant 0.000000e+00 : f32
    %290 = vector.broadcast %cst_148 : f32 to vector<8x10xf32>
    %291 = vector.broadcast %cst_149 : f32 to vector<8x10xf32>
    %292 = arith.select %289, %290, %291 : vector<8x10xi1>, vector<8x10xf32>
    %c32_150 = arith.constant 32 : index
    %c0_151 = arith.constant 0 : index
    %293 = vector.load %arg10[%c32_150, %c0_151] : memref<64x10xf32, #tpu.memory_space<vmem>>, vector<8x10xf32>
    tpu.vector_store %arg10[%c32_150, %c0_151], %292 {strides = array<i32>} : memref<64x10xf32, #tpu.memory_space<vmem>>, vector<8x10xf32>,
    %294 = vector.extract_strided_slice %226 {offsets = [40, 0], sizes = [8, 10], strides = [1, 1]} : vector<64x10xf32> to vector<8x10xf32>
    %cst_152 = arith.constant 1.000000e+00 : f32
    %295 = vector.broadcast %cst_152 : f32 to vector<8x10xf32>
    %296 = arith.subf %295, %292 : vector<8x10xf32>
    %cst_153 = arith.constant 0.778800785 : f32
    %297 = vector.broadcast %cst_153 : f32 to vector<8x10xf32>
    %298 = arith.mulf %297, %296 : vector<8x10xf32>
    %299 = arith.mulf %287, %298 : vector<8x10xf32>
    %300 = arith.addf %299, %294 : vector<8x10xf32>
    %cst_154 = arith.constant 1.000000e+00 : f32
    %301 = vector.broadcast %cst_154 : f32 to vector<8x10xf32>
    %302 = arith.cmpf ogt, %300, %301 : vector<8x10xf32>
    %cst_155 = arith.constant 1.000000e+00 : f32
    %cst_156 = arith.constant 0.000000e+00 : f32
    %303 = vector.broadcast %cst_155 : f32 to vector<8x10xf32>
    %304 = vector.broadcast %cst_156 : f32 to vector<8x10xf32>
    %305 = arith.select %302, %303, %304 : vector<8x10xi1>, vector<8x10xf32>
    %c40_157 = arith.constant 40 : index
    %c0_158 = arith.constant 0 : index
    %306 = vector.load %arg10[%c40_157, %c0_158] : memref<64x10xf32, #tpu.memory_space<vmem>>, vector<8x10xf32>
    tpu.vector_store %arg10[%c40_157, %c0_158], %305 {strides = array<i32>} : memref<64x10xf32, #tpu.memory_space<vmem>>, vector<8x10xf32>,
    %307 = vector.extract_strided_slice %226 {offsets = [48, 0], sizes = [8, 10], strides = [1, 1]} : vector<64x10xf32> to vector<8x10xf32>
    %cst_159 = arith.constant 1.000000e+00 : f32
    %308 = vector.broadcast %cst_159 : f32 to vector<8x10xf32>
    %309 = arith.subf %308, %305 : vector<8x10xf32>
    %cst_160 = arith.constant 0.778800785 : f32
    %310 = vector.broadcast %cst_160 : f32 to vector<8x10xf32>
    %311 = arith.mulf %310, %309 : vector<8x10xf32>
    %312 = arith.mulf %300, %311 : vector<8x10xf32>
    %313 = arith.addf %312, %307 : vector<8x10xf32>
    %cst_161 = arith.constant 1.000000e+00 : f32
    %314 = vector.broadcast %cst_161 : f32 to vector<8x10xf32>
    %315 = arith.cmpf ogt, %313, %314 : vector<8x10xf32>
    %cst_162 = arith.constant 1.000000e+00 : f32
    %cst_163 = arith.constant 0.000000e+00 : f32
    %316 = vector.broadcast %cst_162 : f32 to vector<8x10xf32>
    %317 = vector.broadcast %cst_163 : f32 to vector<8x10xf32>
    %318 = arith.select %315, %316, %317 : vector<8x10xi1>, vector<8x10xf32>
    %c48_164 = arith.constant 48 : index
    %c0_165 = arith.constant 0 : index
    %319 = vector.load %arg10[%c48_164, %c0_165] : memref<64x10xf32, #tpu.memory_space<vmem>>, vector<8x10xf32>
    tpu.vector_store %arg10[%c48_164, %c0_165], %318 {strides = array<i32>} : memref<64x10xf32, #tpu.memory_space<vmem>>, vector<8x10xf32>,
    %320 = vector.extract_strided_slice %226 {offsets = [56, 0], sizes = [8, 10], strides = [1, 1]} : vector<64x10xf32> to vector<8x10xf32>
    %cst_166 = arith.constant 1.000000e+00 : f32
    %321 = vector.broadcast %cst_166 : f32 to vector<8x10xf32>
    %322 = arith.subf %321, %318 : vector<8x10xf32>
    %cst_167 = arith.constant 0.778800785 : f32
    %323 = vector.broadcast %cst_167 : f32 to vector<8x10xf32>
    %324 = arith.mulf %323, %322 : vector<8x10xf32>
    %325 = arith.mulf %313, %324 : vector<8x10xf32>
    %326 = arith.addf %325, %320 : vector<8x10xf32>
    %cst_168 = arith.constant 1.000000e+00 : f32
    %327 = vector.broadcast %cst_168 : f32 to vector<8x10xf32>
    %328 = arith.cmpf ogt, %326, %327 : vector<8x10xf32>
    %cst_169 = arith.constant 1.000000e+00 : f32
    %cst_170 = arith.constant 0.000000e+00 : f32
    %329 = vector.broadcast %cst_169 : f32 to vector<8x10xf32>
    %330 = vector.broadcast %cst_170 : f32 to vector<8x10xf32>
    %331 = arith.select %328, %329, %330 : vector<8x10xi1>, vector<8x10xf32>
    %c56_171 = arith.constant 56 : index
    %c0_172 = arith.constant 0 : index
    %332 = vector.load %arg10[%c56_171, %c0_172] : memref<64x10xf32, #tpu.memory_space<vmem>>, vector<8x10xf32>
    tpu.vector_store %arg10[%c56_171, %c0_172], %331 {strides = array<i32>} : memref<64x10xf32, #tpu.memory_space<vmem>>, vector<8x10xf32>,
    return
  }
}

</mosaic_0001>

<llo_original>
// kernel: tpu_custom_call.1
$region0: #{tpu_custom_call.1}
  #allocation0 [shape = 'u32[]', space=smem, size = 0x4, offset = 0x4, fixed_abs, tag = 'smem constant byte address 0x4 - core index']
  #allocation1 [shape = 'u32[144,128]{1,0:T(1,128)}', space=vmem, size = 0x12000, scoped, tag = 'internal scratch']
  #allocation2 [shape = 'bf16[512,512]{1,0:T(16,128)(2,1)}', space=vmem, size = 0x80000, scoped, tag = 'scratch operand']
  #allocation3 [shape = 'bf16[512,10]{1,0:T(16,128)(2,1)}', space=vmem, size = 0x20000, scoped, tag = 'scratch operand']
  #allocation4 [shape = 'bf16[64,512]{1,0:T(16,128)(2,1)}', space=vmem, size = 0x10000, scoped, tag = 'scratch operand']
  #allocation5 [shape = 'f32[64,512]{1,0:T(8,128)}', space=vmem, size = 0x20000, scoped, tag = 'scratch operand']
  #allocation6 [shape = 'bf16[64,512]{1,0:T(16,128)(2,1)}', space=vmem, size = 0x10000, scoped, tag = 'scratch operand']
  #allocation7 [shape = 's32[2]{0}', space=sflag, size = 0x8, scoped, tag = 'scratch operand']
  #allocation10 [shape = 's32[]', space=sflag, size = 0x4, offset = 0, fixed_abs, tag = 'sflag constant byte address 0x0 - dummy sync flag']
  #allocation12 [shape = 's32[]', space=sflag, size = 0x4, offset = 0, fixed_abs, tag = 'sflag constant byte address 0x0 - dummy sync flag']
  %s0 = inlined_call_operand.vmem [shape: bf16[8,784], index: 0, kind: input, shape index: {}]
  %s1 = inlined_call_operand.hbm [shape: bf16[784,512], index: 1, kind: input, shape index: {}]
  %s2 = inlined_call_operand.vmem [shape: f32[1,512], index: 2, kind: input, shape index: {}]
  %s3 = inlined_call_operand.vmem [shape: f32[8,512], index: 3, kind: input, shape index: {}]
  %s4 = inlined_call_operand.vmem [shape: f32[1,512], index: 4, kind: input, shape index: {}]
  %s5 = inlined_call_operand.vmem [shape: f32[1,512], index: 5, kind: input, shape index: {}]
  %s6 = inlined_call_operand.vmem [shape: f32[1,512], index: 6, kind: input, shape index: {}]
  %s7 = inlined_call_operand.vmem [shape: f32[1,10], index: 7, kind: input, shape index: {}]
  %s8 = inlined_call_operand.hbm [shape: bf16[512,512], index: 8, kind: input, shape index: {}]
  %s9 = inlined_call_operand.vmem [shape: bf16[512,10], index: 9, kind: input, shape index: {}]
  %s10 = inlined_call_operand.vmem [shape: f32[64,10], index: 10, kind: output, shape index: {}]
  %s11 = sld [smem:[#allocation0]]
  $region80: #{tpu_custom_call.1} parent=0
    _
  %s13 = ssub.s32 1, %s11
  %s14 = scalar_select 0, %s13, %s11
  $region1: #{tpu_custom_call.1} parent=0
    #allocation8 [shape = 'u8[802816]{0}', space=vmem, size = 0xc4000, scoped, tag = 'input window, operand 1, single buffered']
    #allocation9 [shape = 's32[1]{0}', space=sflag, size = 0x4, scoped, tag = 'scoped memory for tpu_custom_call.1']
    #allocation11 [shape = 'u32[9]{0}', space=smem, size = 0x24, scoped, tag = 'DMA stride descriptor']
    %15 = vsyncpa [#allocation9], 0
    // Predicated region
    $region2: #{tpu_custom_call.1} parent=1 // pred_check
      _
    $region3: #{tpu_custom_call.1} parent=1 // pred_check_branch
      %17 = sbr.rel (0) target = $region5
    $region4: #{tpu_custom_call.1} parent=1 // pred_region
      _
    $region5: #{tpu_custom_call.1} parent=1 // pred_fallthru
      _
    // Predicated region
    $region6: #{tpu_custom_call.1} parent=1 // pred_check
      _
    $region7: #{tpu_custom_call.1} parent=1 // pred_check_branch
      %19 = sbr.rel (0) target = $region9
    $region8: #{tpu_custom_call.1} parent=1 // pred_region
      %s21 = ssub.s32 25088, 25088
      %22 = vsyncadd [#allocation9], %s21
      %s23 = sshll.u32 [#allocation8], 4
      %s24 = int_to_ptr.vmem [resolvable:$true] %s23
      %29 = dma.hbm_to_vmem [thread:$0]  %s1, 25088, %s24, [#allocation9], 256, 256, 16
    $region9: #{tpu_custom_call.1} parent=1 // pred_fallthru
      _
    // Predicated region
    $region10: #{tpu_custom_call.1} parent=1 // pred_check
      _
    $region11: #{tpu_custom_call.1} parent=1 // pred_check_branch
      %31 = sbr.rel (0) target = $region13
    $region12: #{tpu_custom_call.1} parent=1 // pred_region
      _
    $region13: #{tpu_custom_call.1} parent=1 // pred_fallthru
      _
    // Predicated region
    $region14: #{tpu_custom_call.1} parent=1 // pred_check
      _
    $region15: #{tpu_custom_call.1} parent=1 // pred_check_branch
      %33 = sbr.rel (0) target = $region17
    $region16: #{tpu_custom_call.1} parent=1 // pred_region
      _
    $region17: #{tpu_custom_call.1} parent=1 // pred_fallthru
      _
    // Predicated region
    $region18: #{tpu_custom_call.1} parent=1 // pred_check
      _
    $region19: #{tpu_custom_call.1} parent=1 // pred_check_branch
      %35 = sbr.rel (0) target = $region21
    $region20: #{tpu_custom_call.1} parent=1 // pred_region
      _
    $region21: #{tpu_custom_call.1} parent=1 // pred_fallthru
      _
    // Predicated region
    $region22: #{tpu_custom_call.1} parent=1 // pred_check
      _
    $region23: #{tpu_custom_call.1} parent=1 // pred_check_branch
      %37 = sbr.rel (0) target = $region25
    $region24: #{tpu_custom_call.1} parent=1 // pred_region
      _
    $region25: #{tpu_custom_call.1} parent=1 // pred_fallthru
      _
    // Predicated region
    $region26: #{tpu_custom_call.1} parent=1 // pred_check
      _
    $region27: #{tpu_custom_call.1} parent=1 // pred_check_branch
      %39 = sbr.rel (0) target = $region29
    $region28: #{tpu_custom_call.1} parent=1 // pred_region
      _
    $region29: #{tpu_custom_call.1} parent=1 // pred_fallthru
      _
    // Predicated region
    $region30: #{tpu_custom_call.1} parent=1 // pred_check
      _
    $region31: #{tpu_custom_call.1} parent=1 // pred_check_branch
      %41 = sbr.rel (0) target = $region33
    $region32: #{tpu_custom_call.1} parent=1 // pred_region
      _
    $region33: #{tpu_custom_call.1} parent=1 // pred_fallthru
      _
    // Predicated region
    $region34: #{tpu_custom_call.1} parent=1 // pred_check
      _
    $region35: #{tpu_custom_call.1} parent=1 // pred_check_branch
      %43 = sbr.rel (0) target = $region37
    $region36: #{tpu_custom_call.1} parent=1 // pred_region
      %44 = dma.done [#allocation9], 25088
    $region37: #{tpu_custom_call.1} parent=1 // pred_fallthru
      _
    %s47 = sshll.u32 1, 14
    %s48 = sxor.u32 4294967295, %s47
    %s50 = sld [smem:[#allocation0]]
    %s51 = sadd.s32 2, %s50
    %s53 = sshll.u32 7, 26
    %s54 = sxor.u32 4294967295, %s53
    %s55 = sand.u32 0, %s54
    %s56 = sshll.u32 %s51, 26
    %s57 = sor.u32 %s55, %s56
    %s58 = sshll.u32 [#allocation2], 4
    %s59 = int_to_ptr.vmem [resolvable:$true] %s58
    %62 = sst [smem:[#allocation11]] 512
    %s63 = scalar_lea.smem [#allocation11], 1
    %64 = sst [smem:[%s63]] 512
    %s65 = scalar_lea.smem [#allocation11], 2
    %66 = sst [smem:[%s65]] 4
    %s67 = scalar_lea.smem [#allocation11], 3
    %68 = sst [smem:[%s67]] 64
    %s69 = scalar_lea.smem [#allocation11], 4
    %70 = sst [smem:[%s69]] 128
    %s71 = scalar_lea.smem [#allocation11], 5
    %72 = sst [smem:[%s71]] 2
    %s73 = scalar_lea.smem [#allocation11], 6
    %74 = sst [smem:[%s73]] 256
    %s75 = scalar_lea.smem [#allocation11], 7
    %76 = sst [smem:[%s75]] 64
    %s77 = scalar_lea.smem [#allocation11], 8
    %78 = sst [smem:[%s77]] 4
    %80 = dma.general %s8, 16384, %s59, [#allocation7], [#allocation10], [#allocation11], %s57, 0
    %s81 = scalar_lea.sflag [#allocation7], 1
    %p83 = scmp.lt.u32.totalorder 256, 8
    %p84 = pneg %p83
    // Predicated region
    $region38: #{tpu_custom_call.1} parent=1 // pred_check
      _
    $region39: #{tpu_custom_call.1} parent=1 // pred_check_branch
      %86 = sbr.rel (%p83) target = $region41
    $region40: #{tpu_custom_call.1} parent=1 // pred_region
      %s101 = sand.u32 256, 7
      %p102 = scmp.eq.s32.totalorder %s101, 0
      // Predicated region
      $region53: #{tpu_custom_call.1} parent=40 // pred_check
        %p103 = pneg %p102
      $region54: #{tpu_custom_call.1} parent=40 // pred_check_branch
        %105 = sbr.rel (%p103) target = $region56
      $region55: #{tpu_custom_call.1} parent=40 // pred_region
        loop: start=0, step=1, limit=1
        $region57: #{tpu_custom_call.1} parent=55 // loop_pre_header
          _
        $region58: #{tpu_custom_call.1} parent=55 // loop_header
          %s107 = sphi 0, %s111
          %p108 = scmp.ge.s32.totalorder %s107, 1
          %s112 = sphi %s9, %s9
          %s113 = sphi [#allocation3], [#allocation3]
        $region59: #{tpu_custom_call.1} parent=55 // loop_header_branch
          %110 = sbr.rel (%p108) target = $region63
        $region60: #{tpu_custom_call.1} parent=55 // loop_body
          %v114 = vld [vmem:[%s112] sm:$0xff]
          %115 = vst [vmem:[%s113] sm:$0xff] %v114
          %v116 = vld [vmem:[%s112 + $0x8] sm:$0xff]
          %117 = vst [vmem:[%s113 + $0x8] sm:$0xff] %v116
          %v118 = vld [vmem:[%s112 + $0x10] sm:$0xff]
          %119 = vst [vmem:[%s113 + $0x10] sm:$0xff] %v118
          %v120 = vld [vmem:[%s112 + $0x18] sm:$0xff]
          %121 = vst [vmem:[%s113 + $0x18] sm:$0xff] %v120
          %v122 = vld [vmem:[%s112 + $0x20] sm:$0xff]
          %123 = vst [vmem:[%s113 + $0x20] sm:$0xff] %v122
          %v124 = vld [vmem:[%s112 + $0x28] sm:$0xff]
          %125 = vst [vmem:[%s113 + $0x28] sm:$0xff] %v124
          %v126 = vld [vmem:[%s112 + $0x30] sm:$0xff]
          %127 = vst [vmem:[%s113 + $0x30] sm:$0xff] %v126
          %v128 = vld [vmem:[%s112 + $0x38] sm:$0xff]
          %129 = vst [vmem:[%s113 + $0x38] sm:$0xff] %v128
          %v130 = vld [vmem:[%s112 + $0x40] sm:$0xff]
          %131 = vst [vmem:[%s113 + $0x40] sm:$0xff] %v130
          %v132 = vld [vmem:[%s112 + $0x48] sm:$0xff]
          %133 = vst [vmem:[%s113 + $0x48] sm:$0xff] %v132
          %v134 = vld [vmem:[%s112 + $0x50] sm:$0xff]
          %135 = vst [vmem:[%s113 + $0x50] sm:$0xff] %v134
          %v136 = vld [vmem:[%s112 + $0x58] sm:$0xff]
          %137 = vst [vmem:[%s113 + $0x58] sm:$0xff] %v136
          %v138 = vld [vmem:[%s112 + $0x60] sm:$0xff]
          %139 = vst [vmem:[%s113 + $0x60] sm:$0xff] %v138
          %v140 = vld [vmem:[%s112 + $0x68] sm:$0xff]
          %141 = vst [vmem:[%s113 + $0x68] sm:$0xff] %v140
          %v142 = vld [vmem:[%s112 + $0x70] sm:$0xff]
          %143 = vst [vmem:[%s113 + $0x70] sm:$0xff] %v142
          %v144 = vld [vmem:[%s112 + $0x78] sm:$0xff]
          %145 = vst [vmem:[%s113 + $0x78] sm:$0xff] %v144
          %v146 = vld [vmem:[%s112 + $0x80] sm:$0xff]
          %147 = vst [vmem:[%s113 + $0x80] sm:$0xff] %v146
          %v148 = vld [vmem:[%s112 + $0x88] sm:$0xff]
          %149 = vst [vmem:[%s113 + $0x88] sm:$0xff] %v148
          %v150 = vld [vmem:[%s112 + $0x90] sm:$0xff]
          %151 = vst [vmem:[%s113 + $0x90] sm:$0xff] %v150
          %v152 = vld [vmem:[%s112 + $0x98] sm:$0xff]
          %153 = vst [vmem:[%s113 + $0x98] sm:$0xff] %v152
          %v154 = vld [vmem:[%s112 + $0xa0] sm:$0xff]
          %155 = vst [vmem:[%s113 + $0xa0] sm:$0xff] %v154
          %v156 = vld [vmem:[%s112 + $0xa8] sm:$0xff]
          %157 = vst [vmem:[%s113 + $0xa8] sm:$0xff] %v156
          %v158 = vld [vmem:[%s112 + $0xb0] sm:$0xff]
          %159 = vst [vmem:[%s113 + $0xb0] sm:$0xff] %v158
          %v160 = vld [vmem:[%s112 + $0xb8] sm:$0xff]
          %161 = vst [vmem:[%s113 + $0xb8] sm:$0xff] %v160
          %v162 = vld [vmem:[%s112 + $0xc0] sm:$0xff]
          %163 = vst [vmem:[%s113 + $0xc0] sm:$0xff] %v162
          %v164 = vld [vmem:[%s112 + $0xc8] sm:$0xff]
          %165 = vst [vmem:[%s113 + $0xc8] sm:$0xff] %v164
          %v166 = vld [vmem:[%s112 + $0xd0] sm:$0xff]
          %167 = vst [vmem:[%s113 + $0xd0] sm:$0xff] %v166
          %v168 = vld [vmem:[%s112 + $0xd8] sm:$0xff]
          %169 = vst [vmem:[%s113 + $0xd8] sm:$0xff] %v168
          %v170 = vld [vmem:[%s112 + $0xe0] sm:$0xff]
          %171 = vst [vmem:[%s113 + $0xe0] sm:$0xff] %v170
          %v172 = vld [vmem:[%s112 + $0xe8] sm:$0xff]
          %173 = vst [vmem:[%s113 + $0xe8] sm:$0xff] %v172
          %v174 = vld [vmem:[%s112 + $0xf0] sm:$0xff]
          %175 = vst [vmem:[%s113 + $0xf0] sm:$0xff] %v174
          %v176 = vld [vmem:[%s112 + $0xf8] sm:$0xff]
          %177 = vst [vmem:[%s113 + $0xf8] sm:$0xff] %v176
        $region61: #{tpu_custom_call.1} parent=55 // loop_footer
          %s111 = sadd.s32 1, %s107
        $region62: #{tpu_custom_call.1} parent=55 // loop_footer_branch
          %106 = sbr.rel target = $region58
        $region63: #{tpu_custom_call.1} parent=55 // loop_exit
          _
      $region56: #{tpu_custom_call.1} parent=40 // pred_fallthru
        _
      %p178 = pneg %p102
      // Predicated region
      $region64: #{tpu_custom_call.1} parent=40 // pred_check
        _
      $region65: #{tpu_custom_call.1} parent=40 // pred_check_branch
        %180 = sbr.rel (%p102) target = $region67
      $region66: #{tpu_custom_call.1} parent=40 // pred_region
        %s181 = sand.u32 256, 7
      $region67: #{tpu_custom_call.1} parent=40 // pred_fallthru
        _
    $region41: #{tpu_custom_call.1} parent=1 // pred_fallthru
      _
    // Predicated region
    $region42: #{tpu_custom_call.1} parent=1 // pred_check
      %p87 = pneg %p83
    $region43: #{tpu_custom_call.1} parent=1 // pred_check_branch
      %89 = sbr.rel (%p87) target = $region45
    $region44: #{tpu_custom_call.1} parent=1 // pred_region
      %s90 = sshllo.u32 0, 256
      loop: start=0, step=1, limit=1
      $region46: #{tpu_custom_call.1} parent=44 // loop_pre_header
        _
      $region47: #{tpu_custom_call.1} parent=44 // loop_header
        %s92 = sphi 0, %s96
        %p93 = scmp.ge.s32.totalorder %s92, 1
        %s97 = sphi %s9, %s9
        %s98 = sphi [#allocation3], [#allocation3]
      $region48: #{tpu_custom_call.1} parent=44 // loop_header_branch
        %95 = sbr.rel (%p93) target = $region52
      $region49: #{tpu_custom_call.1} parent=44 // loop_body
        %v99 = vld [vmem:[%s97] sm:%s90]
        %100 = vst [vmem:[%s98] sm:%s90] %v99
      $region50: #{tpu_custom_call.1} parent=44 // loop_footer
        %s96 = sadd.s32 1, %s92
      $region51: #{tpu_custom_call.1} parent=44 // loop_footer_branch
        %91 = sbr.rel target = $region47
      $region52: #{tpu_custom_call.1} parent=44 // loop_exit
        _
    $region45: #{tpu_custom_call.1} parent=1 // pred_fallthru
      _
    // Predicated region
    $region68: #{tpu_custom_call.1} parent=1 // pred_check
      _
    $region69: #{tpu_custom_call.1} parent=1 // pred_check_branch
      %184 = sbr.rel (0) target = $region71
    $region70: #{tpu_custom_call.1} parent=1 // pred_region
      %185 = vsyncadd %s81, 4096
    $region71: #{tpu_custom_call.1} parent=1 // pred_fallthru
      _
    %v186 = vld [vmem:[%s0] sm:$0xff]
    %v187 = vld [vmem:[%s0 + $0x8] sm:$0xff]
    %v188 = vld [vmem:[%s0 + $0x10] sm:$0xff]
    %v189 = vld [vmem:[%s0 + $0x18] sm:$0xf]
    %v190 = vld [vmem:[#allocation8] sm:$0xff]
    %v191 = vld [vmem:[#allocation8 + $0x8] sm:$0xff]
    %v192 = vld [vmem:[#allocation8 + $0x10] sm:$0xff]
    %v193 = vld [vmem:[#allocation8 + $0x18] sm:$0xff]
    %v194 = vld [vmem:[#allocation8 + $0x20] sm:$0xff]
    %v195 = vld [vmem:[#allocation8 + $0x28] sm:$0xff]
    %v196 = vld [vmem:[#allocation8 + $0x30] sm:$0xff]
    %v197 = vld [vmem:[#allocation8 + $0x38] sm:$0xff]
    %v198 = vld [vmem:[#allocation8 + $0x40] sm:$0xff]
    %v199 = vld [vmem:[#allocation8 + $0x48] sm:$0xff]
    %v200 = vld [vmem:[#allocation8 + $0x50] sm:$0xff]
    %v201 = vld [vmem:[#allocation8 + $0x58] sm:$0xff]
    %v202 = vld [vmem:[#allocation8 + $0x60] sm:$0xff]
    %v203 = vld [vmem:[#allocation8 + $0x68] sm:$0xff]
    %v204 = vld [vmem:[#allocation8 + $0x70] sm:$0xff]
    %v205 = vld [vmem:[#allocation8 + $0x78] sm:$0xff]
    %v206 = vld [vmem:[#allocation8 + $0x80] sm:$0xff]
    %v207 = vld [vmem:[#allocation8 + $0x88] sm:$0xff]
    %v208 = vld [vmem:[#allocation8 + $0x90] sm:$0xff]
    %v209 = vld [vmem:[#allocation8 + $0x98] sm:$0xff]
    %v210 = vld [vmem:[#allocation8 + $0xa0] sm:$0xff]
    %v211 = vld [vmem:[#allocation8 + $0xa8] sm:$0xff]
    %v212 = vld [vmem:[#allocation8 + $0xb0] sm:$0xff]
    %v213 = vld [vmem:[#allocation8 + $0xb8] sm:$0xff]
    %v214 = vld [vmem:[#allocation8 + $0xc0] sm:$0xff]
    %v215 = vld [vmem:[#allocation8 + $0xc8] sm:$0xff]
    %v216 = vld [vmem:[#allocation8 + $0xd0] sm:$0xff]
    %v217 = vld [vmem:[#allocation8 + $0xd8] sm:$0xff]
    %v218 = vld [vmem:[#allocation8 + $0xe0] sm:$0xff]
    %v219 = vld [vmem:[#allocation8 + $0xe8] sm:$0xff]
    %v220 = vld [vmem:[#allocation8 + $0xf0] sm:$0xff]
    %v221 = vld [vmem:[#allocation8 + $0xf8] sm:$0xff]
    %v222 = vld [vmem:[#allocation8 + $0x100] sm:$0xff]
    %v223 = vld [vmem:[#allocation8 + $0x108] sm:$0xff]
    %v224 = vld [vmem:[#allocation8 + $0x110] sm:$0xff]
    %v225 = vld [vmem:[#allocation8 + $0x118] sm:$0xff]
    %v226 = vld [vmem:[#allocation8 + $0x120] sm:$0xff]
    %v227 = vld [vmem:[#allocation8 + $0x128] sm:$0xff]
    %v228 = vld [vmem:[#allocation8 + $0x130] sm:$0xff]
    %v229 = vld [vmem:[#allocation8 + $0x138] sm:$0xff]
    %v230 = vld [vmem:[#allocation8 + $0x140] sm:$0xff]
    %v231 = vld [vmem:[#allocation8 + $0x148] sm:$0xff]
    %v232 = vld [vmem:[#allocation8 + $0x150] sm:$0xff]
    %v233 = vld [vmem:[#allocation8 + $0x158] sm:$0xff]
    %v234 = vld [vmem:[#allocation8 + $0x160] sm:$0xff]
    %v235 = vld [vmem:[#allocation8 + $0x168] sm:$0xff]
    %v236 = vld [vmem:[#allocation8 + $0x170] sm:$0xff]
    %v237 = vld [vmem:[#allocation8 + $0x178] sm:$0xff]
    %v238 = vld [vmem:[#allocation8 + $0x180] sm:$0xff]
    %v239 = vld [vmem:[#allocation8 + $0x188] sm:$0xff]
    %v240 = vld [vmem:[#allocation8 + $0x190] sm:$0xff]
    %v241 = vld [vmem:[#allocation8 + $0x198] sm:$0xff]
    %v242 = vld [vmem:[#allocation8 + $0x1a0] sm:$0xff]
    %v243 = vld [vmem:[#allocation8 + $0x1a8] sm:$0xff]
    %v244 = vld [vmem:[#allocation8 + $0x1b0] sm:$0xff]
    %v245 = vld [vmem:[#allocation8 + $0x1b8] sm:$0xff]
    %v246 = vld [vmem:[#allocation8 + $0x1c0] sm:$0xff]
    %v247 = vld [vmem:[#allocation8 + $0x1c8] sm:$0xff]
    %v248 = vld [vmem:[#allocation8 + $0x1d0] sm:$0xff]
    %v249 = vld [vmem:[#allocation8 + $0x1d8] sm:$0xff]
    %v250 = vld [vmem:[#allocation8 + $0x1e0] sm:$0xff]
    %v251 = vld [vmem:[#allocation8 + $0x1e8] sm:$0xff]
    %v252 = vld [vmem:[#allocation8 + $0x1f0] sm:$0xff]
    %v253 = vld [vmem:[#allocation8 + $0x1f8] sm:$0xff]
    %v254 = vld [vmem:[#allocation8 + $0x200] sm:$0xff]
    %v255 = vld [vmem:[#allocation8 + $0x208] sm:$0xff]
    %v256 = vld [vmem:[#allocation8 + $0x210] sm:$0xff]
    %v257 = vld [vmem:[#allocation8 + $0x218] sm:$0xff]
    %v258 = vld [vmem:[#allocation8 + $0x220] sm:$0xff]
    %v259 = vld [vmem:[#allocation8 + $0x228] sm:$0xff]
    %v260 = vld [vmem:[#allocation8 + $0x230] sm:$0xff]
    %v261 = vld [vmem:[#allocation8 + $0x238] sm:$0xff]
    %v262 = vld [vmem:[#allocation8 + $0x240] sm:$0xff]
    %v263 = vld [vmem:[#allocation8 + $0x248] sm:$0xff]
    %v264 = vld [vmem:[#allocation8 + $0x250] sm:$0xff]
    %v265 = vld [vmem:[#allocation8 + $0x258] sm:$0xff]
    %v266 = vld [vmem:[#allocation8 + $0x260] sm:$0xff]
    %v267 = vld [vmem:[#allocation8 + $0x268] sm:$0xff]
    %v268 = vld [vmem:[#allocation8 + $0x270] sm:$0xff]
    %v269 = vld [vmem:[#allocation8 + $0x278] sm:$0xff]
    %v270 = vld [vmem:[#allocation8 + $0x280] sm:$0xff]
    %v271 = vld [vmem:[#allocation8 + $0x288] sm:$0xff]
    %v272 = vld [vmem:[#allocation8 + $0x290] sm:$0xff]
    %v273 = vld [vmem:[#allocation8 + $0x298] sm:$0xff]
    %v274 = vld [vmem:[#allocation8 + $0x2a0] sm:$0xff]
    %v275 = vld [vmem:[#allocation8 + $0x2a8] sm:$0xff]
    %v276 = vld [vmem:[#allocation8 + $0x2b0] sm:$0xff]
    %v277 = vld [vmem:[#allocation8 + $0x2b8] sm:$0xff]
    %v278 = vld [vmem:[#allocation8 + $0x2c0] sm:$0xff]
    %v279 = vld [vmem:[#allocation8 + $0x2c8] sm:$0xff]
    %v280 = vld [vmem:[#allocation8 + $0x2d0] sm:$0xff]
    %v281 = vld [vmem:[#allocation8 + $0x2d8] sm:$0xff]
    %v282 = vld [vmem:[#allocation8 + $0x2e0] sm:$0xff]
    %v283 = vld [vmem:[#allocation8 + $0x2e8] sm:$0xff]
    %v284 = vld [vmem:[#allocation8 + $0x2f0] sm:$0xff]
    %v285 = vld [vmem:[#allocation8 + $0x2f8] sm:$0xff]
    %v286 = vld [vmem:[#allocation8 + $0x300] sm:$0xff]
    %v287 = vld [vmem:[#allocation8 + $0x308] sm:$0xff]
    %v288 = vld [vmem:[#allocation8 + $0x310] sm:$0xff]
    %v289 = vld [vmem:[#allocation8 + $0x318] sm:$0xff]
    %v290 = vld [vmem:[#allocation8 + $0x320] sm:$0xff]
    %v291 = vld [vmem:[#allocation8 + $0x328] sm:$0xff]
    %v292 = vld [vmem:[#allocation8 + $0x330] sm:$0xff]
    %v293 = vld [vmem:[#allocation8 + $0x338] sm:$0xff]
    %v294 = vld [vmem:[#allocation8 + $0x340] sm:$0xff]
    %v295 = vld [vmem:[#allocation8 + $0x348] sm:$0xff]
    %v296 = vld [vmem:[#allocation8 + $0x350] sm:$0xff]
    %v297 = vld [vmem:[#allocation8 + $0x358] sm:$0xff]
    %v298 = vld [vmem:[#allocation8 + $0x360] sm:$0xff]
    %v299 = vld [vmem:[#allocation8 + $0x368] sm:$0xff]
    %v300 = vld [vmem:[#allocation8 + $0x370] sm:$0xff]
    %v301 = vld [vmem:[#allocation8 + $0x378] sm:$0xff]
    %v302 = vld [vmem:[#allocation8 + $0x380] sm:$0xff]
    %v303 = vld [vmem:[#allocation8 + $0x388] sm:$0xff]
    %v304 = vld [vmem:[#allocation8 + $0x390] sm:$0xff]
    %v305 = vld [vmem:[#allocation8 + $0x398] sm:$0xff]
    %v306 = vld [vmem:[#allocation8 + $0x3a0] sm:$0xff]
    %v307 = vld [vmem:[#allocation8 + $0x3a8] sm:$0xff]
    %v308 = vld [vmem:[#allocation8 + $0x3b0] sm:$0xff]
    %v309 = vld [vmem:[#allocation8 + $0x3b8] sm:$0xff]
    %v310 = vld [vmem:[#allocation8 + $0x3c0] sm:$0xff]
    %v311 = vld [vmem:[#allocation8 + $0x3c8] sm:$0xff]
    %v312 = vld [vmem:[#allocation8 + $0x3d0] sm:$0xff]
    %v313 = vld [vmem:[#allocation8 + $0x3d8] sm:$0xff]
    %v314 = vld [vmem:[#allocation8 + $0x3e0] sm:$0xff]
    %v315 = vld [vmem:[#allocation8 + $0x3e8] sm:$0xff]
    %v316 = vld [vmem:[#allocation8 + $0x3f0] sm:$0xff]
    %v317 = vld [vmem:[#allocation8 + $0x3f8] sm:$0xff]
    %v318 = vld [vmem:[#allocation8 + $0x400] sm:$0xff]
    %v319 = vld [vmem:[#allocation8 + $0x408] sm:$0xff]
    %v320 = vld [vmem:[#allocation8 + $0x410] sm:$0xff]
    %v321 = vld [vmem:[#allocation8 + $0x418] sm:$0xff]
    %v322 = vld [vmem:[#allocation8 + $0x420] sm:$0xff]
    %v323 = vld [vmem:[#allocation8 + $0x428] sm:$0xff]
    %v324 = vld [vmem:[#allocation8 + $0x430] sm:$0xff]
    %v325 = vld [vmem:[#allocation8 + $0x438] sm:$0xff]
    %v326 = vld [vmem:[#allocation8 + $0x440] sm:$0xff]
    %v327 = vld [vmem:[#allocation8 + $0x448] sm:$0xff]
    %v328 = vld [vmem:[#allocation8 + $0x450] sm:$0xff]
    %v329 = vld [vmem:[#allocation8 + $0x458] sm:$0xff]
    %v330 = vld [vmem:[#allocation8 + $0x460] sm:$0xff]
    %v331 = vld [vmem:[#allocation8 + $0x468] sm:$0xff]
    %v332 = vld [vmem:[#allocation8 + $0x470] sm:$0xff]
    %v333 = vld [vmem:[#allocation8 + $0x478] sm:$0xff]
    %v334 = vld [vmem:[#allocation8 + $0x480] sm:$0xff]
    %v335 = vld [vmem:[#allocation8 + $0x488] sm:$0xff]
    %v336 = vld [vmem:[#allocation8 + $0x490] sm:$0xff]
    %v337 = vld [vmem:[#allocation8 + $0x498] sm:$0xff]
    %v338 = vld [vmem:[#allocation8 + $0x4a0] sm:$0xff]
    %v339 = vld [vmem:[#allocation8 + $0x4a8] sm:$0xff]
    %v340 = vld [vmem:[#allocation8 + $0x4b0] sm:$0xff]
    %v341 = vld [vmem:[#allocation8 + $0x4b8] sm:$0xff]
    %v342 = vld [vmem:[#allocation8 + $0x4c0] sm:$0xff]
    %v343 = vld [vmem:[#allocation8 + $0x4c8] sm:$0xff]
    %v344 = vld [vmem:[#allocation8 + $0x4d0] sm:$0xff]
    %v345 = vld [vmem:[#allocation8 + $0x4d8] sm:$0xff]
    %v346 = vld [vmem:[#allocation8 + $0x4e0] sm:$0xff]
    %v347 = vld [vmem:[#allocation8 + $0x4e8] sm:$0xff]
    %v348 = vld [vmem:[#allocation8 + $0x4f0] sm:$0xff]
    %v349 = vld [vmem:[#allocation8 + $0x4f8] sm:$0xff]
    %v350 = vld [vmem:[#allocation8 + $0x500] sm:$0xff]
    %v351 = vld [vmem:[#allocation8 + $0x508] sm:$0xff]
    %v352 = vld [vmem:[#allocation8 + $0x510] sm:$0xff]
    %v353 = vld [vmem:[#allocation8 + $0x518] sm:$0xff]
    %v354 = vld [vmem:[#allocation8 + $0x520] sm:$0xff]
    %v355 = vld [vmem:[#allocation8 + $0x528] sm:$0xff]
    %v356 = vld [vmem:[#allocation8 + $0x530] sm:$0xff]
    %v357 = vld [vmem:[#allocation8 + $0x538] sm:$0xff]
    %v358 = vld [vmem:[#allocation8 + $0x540] sm:$0xff]
    %v359 = vld [vmem:[#allocation8 + $0x548] sm:$0xff]
    %v360 = vld [vmem:[#allocation8 + $0x550] sm:$0xff]
    %v361 = vld [vmem:[#allocation8 + $0x558] sm:$0xff]
    %v362 = vld [vmem:[#allocation8 + $0x560] sm:$0xff]
    %v363 = vld [vmem:[#allocation8 + $0x568] sm:$0xff]
    %v364 = vld [vmem:[#allocation8 + $0x570] sm:$0xff]
    %v365 = vld [vmem:[#allocation8 + $0x578] sm:$0xff]
    %v366 = vld [vmem:[#allocation8 + $0x580] sm:$0xff]
    %v367 = vld [vmem:[#allocation8 + $0x588] sm:$0xff]
    %v368 = vld [vmem:[#allocation8 + $0x590] sm:$0xff]
    %v369 = vld [vmem:[#allocation8 + $0x598] sm:$0xff]
    %v370 = vld [vmem:[#allocation8 + $0x5a0] sm:$0xff]
    %v371 = vld [vmem:[#allocation8 + $0x5a8] sm:$0xff]
    %v372 = vld [vmem:[#allocation8 + $0x5b0] sm:$0xff]
    %v373 = vld [vmem:[#allocation8 + $0x5b8] sm:$0xff]
    %v374 = vld [vmem:[#allocation8 + $0x5c0] sm:$0xff]
    %v375 = vld [vmem:[#allocation8 + $0x5c8] sm:$0xff]
    %v376 = vld [vmem:[#allocation8 + $0x5d0] sm:$0xff]
    %v377 = vld [vmem:[#allocation8 + $0x5d8] sm:$0xff]
    %v378 = vld [vmem:[#allocation8 + $0x5e0] sm:$0xff]
    %v379 = vld [vmem:[#allocation8 + $0x5e8] sm:$0xff]
    %v380 = vld [vmem:[#allocation8 + $0x5f0] sm:$0xff]
    %v381 = vld [vmem:[#allocation8 + $0x5f8] sm:$0xff]
    %v382 = vld [vmem:[#allocation8 + $0x600] sm:$0xff]
    %v383 = vld [vmem:[#allocation8 + $0x608] sm:$0xff]
    %v384 = vld [vmem:[#allocation8 + $0x610] sm:$0xff]
    %v385 = vld [vmem:[#allocation8 + $0x618] sm:$0xff]
    %v386 = vld [vmem:[%s2] sm:$0xf]
    %v388 = vlaneseq
    %v389 = vshrl.u32 %v388, 7
    %v390 = vsub.s32 0, %v389
    %v391 = vrot.slane %v386, %v390
    %v392 = vlaneseq
    %v393 = vshrl.u32 %v392, 7
    %v394 = vsub.s32 1, %v393
    %v395 = vrot.slane %v386, %v394
    %v396 = vlaneseq
    %v397 = vshrl.u32 %v396, 7
    %v398 = vsub.s32 2, %v397
    %v399 = vrot.slane %v386, %v398
    %v400 = vlaneseq
    %v401 = vshrl.u32 %v400, 7
    %v402 = vsub.s32 3, %v401
    %v403 = vrot.slane %v386, %v402
    %v412 = vunpack.c.l.b16 %v186
    %v413 = vunpack.c.h.b16 %v186
    %v414 = vunpack.c.l.b16 %v187
    %v415 = vunpack.c.h.b16 %v187
    %v416 = vunpack.c.l.b16 %v188
    %v417 = vunpack.c.h.b16 %v188
    %v418 = vunpack.c.l.b16 %v189
    %v419 = vpack.c.b16 %v412, %v412
    %v420 = vpack.c.b16 %v413, %v413
    %v421 = vpack.c.b16 %v414, %v414
    %v422 = vpack.c.b16 %v415, %v415
    %v423 = vpack.c.b16 %v416, %v416
    %v424 = vpack.c.b16 %v417, %v417
    %v425 = vpack.c.b16 %v418, %v418
    %v628 = vunpack.c.l.b16 %v190
    %v629 = vunpack.c.h.b16 %v190
    %v630 = vunpack.c.l.b16 %v191
    %v631 = vunpack.c.h.b16 %v191
    %v632 = vunpack.c.l.b16 %v192
    %v633 = vunpack.c.h.b16 %v192
    %v634 = vunpack.c.l.b16 %v193
    %v635 = vunpack.c.h.b16 %v193
    %v636 = vunpack.c.l.b16 %v194
    %v637 = vunpack.c.h.b16 %v194
    %v638 = vunpack.c.l.b16 %v195
    %v639 = vunpack.c.h.b16 %v195
    %v640 = vunpack.c.l.b16 %v196
    %v641 = vunpack.c.h.b16 %v196
    %v642 = vunpack.c.l.b16 %v197
    %v643 = vunpack.c.h.b16 %v197
    %v644 = vunpack.c.l.b16 %v198
    %v645 = vunpack.c.h.b16 %v198
    %v646 = vunpack.c.l.b16 %v199
    %v647 = vunpack.c.h.b16 %v199
    %v648 = vunpack.c.l.b16 %v200
    %v649 = vunpack.c.h.b16 %v200
    %v650 = vunpack.c.l.b16 %v201
    %v651 = vunpack.c.h.b16 %v201
    %v652 = vunpack.c.l.b16 %v202
    %v653 = vunpack.c.h.b16 %v202
    %v654 = vunpack.c.l.b16 %v203
    %v655 = vunpack.c.h.b16 %v203
    %v656 = vunpack.c.l.b16 %v204
    %v657 = vunpack.c.h.b16 %v204
    %v658 = vunpack.c.l.b16 %v205
    %v659 = vunpack.c.h.b16 %v205
    %v660 = vunpack.c.l.b16 %v206
    %v661 = vunpack.c.h.b16 %v206
    %v662 = vunpack.c.l.b16 %v207
    %v663 = vunpack.c.h.b16 %v207
    %v664 = vunpack.c.l.b16 %v208
    %v665 = vunpack.c.h.b16 %v208
    %v666 = vunpack.c.l.b16 %v209
    %v667 = vunpack.c.h.b16 %v209
    %v668 = vunpack.c.l.b16 %v210
    %v669 = vunpack.c.h.b16 %v210
    %v670 = vunpack.c.l.b16 %v211
    %v671 = vunpack.c.h.b16 %v211
    %v672 = vunpack.c.l.b16 %v212
    %v673 = vunpack.c.h.b16 %v212
    %v674 = vunpack.c.l.b16 %v213
    %v675 = vunpack.c.h.b16 %v213
    %v676 = vunpack.c.l.b16 %v214
    %v677 = vunpack.c.h.b16 %v214
    %v678 = vunpack.c.l.b16 %v215
    %v679 = vunpack.c.h.b16 %v215
    %v680 = vunpack.c.l.b16 %v216
    %v681 = vunpack.c.h.b16 %v216
    %v682 = vunpack.c.l.b16 %v217
    %v683 = vunpack.c.h.b16 %v217
    %v684 = vunpack.c.l.b16 %v218
    %v685 = vunpack.c.h.b16 %v218
    %v686 = vunpack.c.l.b16 %v219
    %v687 = vunpack.c.h.b16 %v219
    %v688 = vunpack.c.l.b16 %v220
    %v689 = vunpack.c.h.b16 %v220
    %v690 = vunpack.c.l.b16 %v221
    %v691 = vunpack.c.h.b16 %v221
    %v692 = vunpack.c.l.b16 %v222
    %v693 = vunpack.c.h.b16 %v222
    %v694 = vunpack.c.l.b16 %v223
    %v695 = vunpack.c.h.b16 %v223
    %v696 = vunpack.c.l.b16 %v224
    %v697 = vunpack.c.h.b16 %v224
    %v698 = vunpack.c.l.b16 %v225
    %v699 = vunpack.c.h.b16 %v225
    %v700 = vunpack.c.l.b16 %v226
    %v701 = vunpack.c.h.b16 %v226
    %v702 = vunpack.c.l.b16 %v227
    %v703 = vunpack.c.h.b16 %v227
    %v704 = vunpack.c.l.b16 %v228
    %v705 = vunpack.c.h.b16 %v228
    %v706 = vunpack.c.l.b16 %v229
    %v707 = vunpack.c.h.b16 %v229
    %v708 = vunpack.c.l.b16 %v230
    %v709 = vunpack.c.h.b16 %v230
    %v710 = vunpack.c.l.b16 %v231
    %v711 = vunpack.c.h.b16 %v231
    %v712 = vunpack.c.l.b16 %v232
    %v713 = vunpack.c.h.b16 %v232
    %v714 = vunpack.c.l.b16 %v233
    %v715 = vunpack.c.h.b16 %v233
    %v716 = vunpack.c.l.b16 %v234
    %v717 = vunpack.c.h.b16 %v234
    %v718 = vunpack.c.l.b16 %v235
    %v719 = vunpack.c.h.b16 %v235
    %v720 = vunpack.c.l.b16 %v236
    %v721 = vunpack.c.h.b16 %v236
    %v722 = vunpack.c.l.b16 %v237
    %v723 = vunpack.c.h.b16 %v237
    %v724 = vunpack.c.l.b16 %v238
    %v725 = vunpack.c.h.b16 %v238
    %v726 = vunpack.c.l.b16 %v239
    %v727 = vunpack.c.h.b16 %v239
    %v728 = vunpack.c.l.b16 %v240
    %v729 = vunpack.c.h.b16 %v240
    %v730 = vunpack.c.l.b16 %v241
    %v731 = vunpack.c.h.b16 %v241
    %v732 = vunpack.c.l.b16 %v242
    %v733 = vunpack.c.h.b16 %v242
    %v734 = vunpack.c.l.b16 %v243
    %v735 = vunpack.c.h.b16 %v243
    %v736 = vunpack.c.l.b16 %v244
    %v737 = vunpack.c.h.b16 %v244
    %v738 = vunpack.c.l.b16 %v245
    %v739 = vunpack.c.h.b16 %v245
    %v740 = vunpack.c.l.b16 %v246
    %v741 = vunpack.c.h.b16 %v246
    %v742 = vunpack.c.l.b16 %v247
    %v743 = vunpack.c.h.b16 %v247
    %v744 = vunpack.c.l.b16 %v248
    %v745 = vunpack.c.h.b16 %v248
    %v746 = vunpack.c.l.b16 %v249
    %v747 = vunpack.c.h.b16 %v249
    %v748 = vunpack.c.l.b16 %v250
    %v749 = vunpack.c.h.b16 %v250
    %v750 = vunpack.c.l.b16 %v251
    %v751 = vunpack.c.h.b16 %v251
    %v752 = vunpack.c.l.b16 %v252
    %v753 = vunpack.c.h.b16 %v252
    %v754 = vunpack.c.l.b16 %v253
    %v755 = vunpack.c.h.b16 %v253
    %v756 = vunpack.c.l.b16 %v254
    %v757 = vunpack.c.h.b16 %v254
    %v758 = vunpack.c.l.b16 %v255
    %v759 = vunpack.c.h.b16 %v255
    %v760 = vunpack.c.l.b16 %v256
    %v761 = vunpack.c.h.b16 %v256
    %v762 = vunpack.c.l.b16 %v257
    %v763 = vunpack.c.h.b16 %v257
    %v764 = vunpack.c.l.b16 %v258
    %v765 = vunpack.c.h.b16 %v258
    %v766 = vunpack.c.l.b16 %v259
    %v767 = vunpack.c.h.b16 %v259
    %v768 = vunpack.c.l.b16 %v260
    %v769 = vunpack.c.h.b16 %v260
    %v770 = vunpack.c.l.b16 %v261
    %v771 = vunpack.c.h.b16 %v261
    %v772 = vunpack.c.l.b16 %v262
    %v773 = vunpack.c.h.b16 %v262
    %v774 = vunpack.c.l.b16 %v263
    %v775 = vunpack.c.h.b16 %v263
    %v776 = vunpack.c.l.b16 %v264
    %v777 = vunpack.c.h.b16 %v264
    %v778 = vunpack.c.l.b16 %v265
    %v779 = vunpack.c.h.b16 %v265
    %v780 = vunpack.c.l.b16 %v266
    %v781 = vunpack.c.h.b16 %v266
    %v782 = vunpack.c.l.b16 %v267
    %v783 = vunpack.c.h.b16 %v267
    %v784 = vunpack.c.l.b16 %v268
    %v785 = vunpack.c.h.b16 %v268
    %v786 = vunpack.c.l.b16 %v269
    %v787 = vunpack.c.h.b16 %v269
    %v788 = vunpack.c.l.b16 %v270
    %v789 = vunpack.c.h.b16 %v270
    %v790 = vunpack.c.l.b16 %v271
    %v791 = vunpack.c.h.b16 %v271
    %v792 = vunpack.c.l.b16 %v272
    %v793 = vunpack.c.h.b16 %v272
    %v794 = vunpack.c.l.b16 %v273
    %v795 = vunpack.c.h.b16 %v273
    %v796 = vunpack.c.l.b16 %v274
    %v797 = vunpack.c.h.b16 %v274
    %v798 = vunpack.c.l.b16 %v275
    %v799 = vunpack.c.h.b16 %v275
    %v800 = vunpack.c.l.b16 %v276
    %v801 = vunpack.c.h.b16 %v276
    %v802 = vunpack.c.l.b16 %v277
    %v803 = vunpack.c.h.b16 %v277
    %v804 = vunpack.c.l.b16 %v278
    %v805 = vunpack.c.h.b16 %v278
    %v806 = vunpack.c.l.b16 %v279
    %v807 = vunpack.c.h.b16 %v279
    %v808 = vunpack.c.l.b16 %v280
    %v809 = vunpack.c.h.b16 %v280
    %v810 = vunpack.c.l.b16 %v281
    %v811 = vunpack.c.h.b16 %v281
    %v812 = vunpack.c.l.b16 %v282
    %v813 = vunpack.c.h.b16 %v282
    %v814 = vunpack.c.l.b16 %v283
    %v815 = vunpack.c.h.b16 %v283
    %v816 = vunpack.c.l.b16 %v284
    %v817 = vunpack.c.h.b16 %v284
    %v818 = vunpack.c.l.b16 %v285
    %v819 = vunpack.c.h.b16 %v285
    %v820 = vunpack.c.l.b16 %v286
    %v821 = vunpack.c.h.b16 %v286
    %v822 = vunpack.c.l.b16 %v287
    %v823 = vunpack.c.h.b16 %v287
    %v824 = vunpack.c.l.b16 %v288
    %v825 = vunpack.c.h.b16 %v288
    %v826 = vunpack.c.l.b16 %v289
    %v827 = vunpack.c.h.b16 %v289
    %v828 = vunpack.c.l.b16 %v290
    %v829 = vunpack.c.h.b16 %v290
    %v830 = vunpack.c.l.b16 %v291
    %v831 = vunpack.c.h.b16 %v291
    %v832 = vunpack.c.l.b16 %v292
    %v833 = vunpack.c.h.b16 %v292
    %v834 = vunpack.c.l.b16 %v293
    %v835 = vunpack.c.h.b16 %v293
    %v836 = vunpack.c.l.b16 %v294
    %v837 = vunpack.c.h.b16 %v294
    %v838 = vunpack.c.l.b16 %v295
    %v839 = vunpack.c.h.b16 %v295
    %v840 = vunpack.c.l.b16 %v296
    %v841 = vunpack.c.h.b16 %v296
    %v842 = vunpack.c.l.b16 %v297
    %v843 = vunpack.c.h.b16 %v297
    %v844 = vunpack.c.l.b16 %v298
    %v845 = vunpack.c.h.b16 %v298
    %v846 = vunpack.c.l.b16 %v299
    %v847 = vunpack.c.h.b16 %v299
    %v848 = vunpack.c.l.b16 %v300
    %v849 = vunpack.c.h.b16 %v300
    %v850 = vunpack.c.l.b16 %v301
    %v851 = vunpack.c.h.b16 %v301
    %v852 = vunpack.c.l.b16 %v302
    %v853 = vunpack.c.h.b16 %v302
    %v854 = vunpack.c.l.b16 %v303
    %v855 = vunpack.c.h.b16 %v303
    %v856 = vunpack.c.l.b16 %v304
    %v857 = vunpack.c.h.b16 %v304
    %v858 = vunpack.c.l.b16 %v305
    %v859 = vunpack.c.h.b16 %v305
    %v860 = vunpack.c.l.b16 %v306
    %v861 = vunpack.c.h.b16 %v306
    %v862 = vunpack.c.l.b16 %v307
    %v863 = vunpack.c.h.b16 %v307
    %v864 = vunpack.c.l.b16 %v308
    %v865 = vunpack.c.h.b16 %v308
    %v866 = vunpack.c.l.b16 %v309
    %v867 = vunpack.c.h.b16 %v309
    %v868 = vunpack.c.l.b16 %v310
    %v869 = vunpack.c.h.b16 %v310
    %v870 = vunpack.c.l.b16 %v311
    %v871 = vunpack.c.h.b16 %v311
    %v872 = vunpack.c.l.b16 %v312
    %v873 = vunpack.c.h.b16 %v312
    %v874 = vunpack.c.l.b16 %v313
    %v875 = vunpack.c.h.b16 %v313
    %v876 = vunpack.c.l.b16 %v314
    %v877 = vunpack.c.h.b16 %v314
    %v878 = vunpack.c.l.b16 %v315
    %v879 = vunpack.c.h.b16 %v315
    %v880 = vunpack.c.l.b16 %v316
    %v881 = vunpack.c.h.b16 %v316
    %v882 = vunpack.c.l.b16 %v317
    %v883 = vunpack.c.h.b16 %v317
    %v884 = vunpack.c.l.b16 %v318
    %v885 = vunpack.c.h.b16 %v318
    %v886 = vunpack.c.l.b16 %v319
    %v887 = vunpack.c.h.b16 %v319
    %v888 = vunpack.c.l.b16 %v320
    %v889 = vunpack.c.h.b16 %v320
    %v890 = vunpack.c.l.b16 %v321
    %v891 = vunpack.c.h.b16 %v321
    %v892 = vunpack.c.l.b16 %v322
    %v893 = vunpack.c.h.b16 %v322
    %v894 = vunpack.c.l.b16 %v323
    %v895 = vunpack.c.h.b16 %v323
    %v896 = vunpack.c.l.b16 %v324
    %v897 = vunpack.c.h.b16 %v324
    %v898 = vunpack.c.l.b16 %v325
    %v899 = vunpack.c.h.b16 %v325
    %v900 = vunpack.c.l.b16 %v326
    %v901 = vunpack.c.h.b16 %v326
    %v902 = vunpack.c.l.b16 %v327
    %v903 = vunpack.c.h.b16 %v327
    %v904 = vunpack.c.l.b16 %v328
    %v905 = vunpack.c.h.b16 %v328
    %v906 = vunpack.c.l.b16 %v329
    %v907 = vunpack.c.h.b16 %v329
    %v908 = vunpack.c.l.b16 %v330
    %v909 = vunpack.c.h.b16 %v330
    %v910 = vunpack.c.l.b16 %v331
    %v911 = vunpack.c.h.b16 %v331
    %v912 = vunpack.c.l.b16 %v332
    %v913 = vunpack.c.h.b16 %v332
    %v914 = vunpack.c.l.b16 %v333
    %v915 = vunpack.c.h.b16 %v333
    %v916 = vunpack.c.l.b16 %v334
    %v917 = vunpack.c.h.b16 %v334
    %v918 = vunpack.c.l.b16 %v335
    %v919 = vunpack.c.h.b16 %v335
    %v920 = vunpack.c.l.b16 %v336
    %v921 = vunpack.c.h.b16 %v336
    %v922 = vunpack.c.l.b16 %v337
    %v923 = vunpack.c.h.b16 %v337
    %v924 = vunpack.c.l.b16 %v338
    %v925 = vunpack.c.h.b16 %v338
    %v926 = vunpack.c.l.b16 %v339
    %v927 = vunpack.c.h.b16 %v339
    %v928 = vunpack.c.l.b16 %v340
    %v929 = vunpack.c.h.b16 %v340
    %v930 = vunpack.c.l.b16 %v341
    %v931 = vunpack.c.h.b16 %v341
    %v932 = vunpack.c.l.b16 %v342
    %v933 = vunpack.c.h.b16 %v342
    %v934 = vunpack.c.l.b16 %v343
    %v935 = vunpack.c.h.b16 %v343
    %v936 = vunpack.c.l.b16 %v344
    %v937 = vunpack.c.h.b16 %v344
    %v938 = vunpack.c.l.b16 %v345
    %v939 = vunpack.c.h.b16 %v345
    %v940 = vunpack.c.l.b16 %v346
    %v941 = vunpack.c.h.b16 %v346
    %v942 = vunpack.c.l.b16 %v347
    %v943 = vunpack.c.h.b16 %v347
    %v944 = vunpack.c.l.b16 %v348
    %v945 = vunpack.c.h.b16 %v348
    %v946 = vunpack.c.l.b16 %v349
    %v947 = vunpack.c.h.b16 %v349
    %v948 = vunpack.c.l.b16 %v350
    %v949 = vunpack.c.h.b16 %v350
    %v950 = vunpack.c.l.b16 %v351
    %v951 = vunpack.c.h.b16 %v351
    %v952 = vunpack.c.l.b16 %v352
    %v953 = vunpack.c.h.b16 %v352
    %v954 = vunpack.c.l.b16 %v353
    %v955 = vunpack.c.h.b16 %v353
    %v956 = vunpack.c.l.b16 %v354
    %v957 = vunpack.c.h.b16 %v354
    %v958 = vunpack.c.l.b16 %v355
    %v959 = vunpack.c.h.b16 %v355
    %v960 = vunpack.c.l.b16 %v356
    %v961 = vunpack.c.h.b16 %v356
    %v962 = vunpack.c.l.b16 %v357
    %v963 = vunpack.c.h.b16 %v357
    %v964 = vunpack.c.l.b16 %v358
    %v965 = vunpack.c.h.b16 %v358
    %v966 = vunpack.c.l.b16 %v359
    %v967 = vunpack.c.h.b16 %v359
    %v968 = vunpack.c.l.b16 %v360
    %v969 = vunpack.c.h.b16 %v360
    %v970 = vunpack.c.l.b16 %v361
    %v971 = vunpack.c.h.b16 %v361
    %v972 = vunpack.c.l.b16 %v362
    %v973 = vunpack.c.h.b16 %v362
    %v974 = vunpack.c.l.b16 %v363
    %v975 = vunpack.c.h.b16 %v363
    %v976 = vunpack.c.l.b16 %v364
    %v977 = vunpack.c.h.b16 %v364
    %v978 = vunpack.c.l.b16 %v365
    %v979 = vunpack.c.h.b16 %v365
    %v980 = vunpack.c.l.b16 %v366
    %v981 = vunpack.c.h.b16 %v366
    %v982 = vunpack.c.l.b16 %v367
    %v983 = vunpack.c.h.b16 %v367
    %v984 = vunpack.c.l.b16 %v368
    %v985 = vunpack.c.h.b16 %v368
    %v986 = vunpack.c.l.b16 %v369
    %v987 = vunpack.c.h.b16 %v369
    %v988 = vunpack.c.l.b16 %v370
    %v989 = vunpack.c.h.b16 %v370
    %v990 = vunpack.c.l.b16 %v371
    %v991 = vunpack.c.h.b16 %v371
    %v992 = vunpack.c.l.b16 %v372
    %v993 = vunpack.c.h.b16 %v372
    %v994 = vunpack.c.l.b16 %v373
    %v995 = vunpack.c.h.b16 %v373
    %v996 = vunpack.c.l.b16 %v374
    %v997 = vunpack.c.h.b16 %v374
    %v998 = vunpack.c.l.b16 %v375
    %v999 = vunpack.c.h.b16 %v375
    %v1000 = vunpack.c.l.b16 %v376
    %v1001 = vunpack.c.h.b16 %v376
    %v1002 = vunpack.c.l.b16 %v377
    %v1003 = vunpack.c.h.b16 %v377
    %v1004 = vunpack.c.l.b16 %v378
    %v1005 = vunpack.c.h.b16 %v378
    %v1006 = vunpack.c.l.b16 %v379
    %v1007 = vunpack.c.h.b16 %v379
    %v1008 = vunpack.c.l.b16 %v380
    %v1009 = vunpack.c.h.b16 %v380
    %v1010 = vunpack.c.l.b16 %v381
    %v1011 = vunpack.c.h.b16 %v381
    %v1012 = vunpack.c.l.b16 %v382
    %v1013 = vunpack.c.h.b16 %v382
    %v1014 = vunpack.c.l.b16 %v383
    %v1015 = vunpack.c.h.b16 %v383
    %v1016 = vunpack.c.l.b16 %v384
    %v1017 = vunpack.c.h.b16 %v384
    %v1018 = vunpack.c.l.b16 %v385
    %v1019 = vunpack.c.h.b16 %v385
    %v1020 = vpack.c.b16 %v632, %v628
    %v1021 = vpack.c.b16 %v633, %v629
    %v1022 = vpack.c.b16 %v634, %v630
    %v1023 = vpack.c.b16 %v635, %v631
    %v1024 = vpack.c.b16 %v640, %v636
    %v1025 = vpack.c.b16 %v641, %v637
    %v1026 = vpack.c.b16 %v642, %v638
    %v1027 = vpack.c.b16 %v643, %v639
    %v1028 = vpack.c.b16 %v648, %v644
    %v1029 = vpack.c.b16 %v649, %v645
    %v1030 = vpack.c.b16 %v650, %v646
    %v1031 = vpack.c.b16 %v651, %v647
    %v1032 = vpack.c.b16 %v656, %v652
    %v1033 = vpack.c.b16 %v657, %v653
    %v1034 = vpack.c.b16 %v658, %v654
    %v1035 = vpack.c.b16 %v659, %v655
    %v1036 = vpack.c.b16 %v664, %v660
    %v1037 = vpack.c.b16 %v665, %v661
    %v1038 = vpack.c.b16 %v666, %v662
    %v1039 = vpack.c.b16 %v667, %v663
    %v1040 = vpack.c.b16 %v672, %v668
    %v1041 = vpack.c.b16 %v673, %v669
    %v1042 = vpack.c.b16 %v674, %v670
    %v1043 = vpack.c.b16 %v675, %v671
    %v1044 = vpack.c.b16 %v680, %v676
    %v1045 = vpack.c.b16 %v681, %v677
    %v1046 = vpack.c.b16 %v682, %v678
    %v1047 = vpack.c.b16 %v683, %v679
    %v1048 = vpack.c.b16 %v688, %v684
    %v1049 = vpack.c.b16 %v689, %v685
    %v1050 = vpack.c.b16 %v690, %v686
    %v1051 = vpack.c.b16 %v691, %v687
    %v1052 = vpack.c.b16 %v696, %v692
    %v1053 = vpack.c.b16 %v697, %v693
    %v1054 = vpack.c.b16 %v698, %v694
    %v1055 = vpack.c.b16 %v699, %v695
    %v1056 = vpack.c.b16 %v704, %v700
    %v1057 = vpack.c.b16 %v705, %v701
    %v1058 = vpack.c.b16 %v706, %v702
    %v1059 = vpack.c.b16 %v707, %v703
    %v1060 = vpack.c.b16 %v712, %v708
    %v1061 = vpack.c.b16 %v713, %v709
    %v1062 = vpack.c.b16 %v714, %v710
    %v1063 = vpack.c.b16 %v715, %v711
    %v1064 = vpack.c.b16 %v720, %v716
    %v1065 = vpack.c.b16 %v721, %v717
    %v1066 = vpack.c.b16 %v722, %v718
    %v1067 = vpack.c.b16 %v723, %v719
    %v1068 = vpack.c.b16 %v728, %v724
    %v1069 = vpack.c.b16 %v729, %v725
    %v1070 = vpack.c.b16 %v730, %v726
    %v1071 = vpack.c.b16 %v731, %v727
    %v1072 = vpack.c.b16 %v736, %v732
    %v1073 = vpack.c.b16 %v737, %v733
    %v1074 = vpack.c.b16 %v738, %v734
    %v1075 = vpack.c.b16 %v739, %v735
    %v1076 = vpack.c.b16 %v744, %v740
    %v1077 = vpack.c.b16 %v745, %v741
    %v1078 = vpack.c.b16 %v746, %v742
    %v1079 = vpack.c.b16 %v747, %v743
    %v1080 = vpack.c.b16 %v752, %v748
    %v1081 = vpack.c.b16 %v753, %v749
    %v1082 = vpack.c.b16 %v754, %v750
    %v1083 = vpack.c.b16 %v755, %v751
    %v1084 = vpack.c.b16 %v760, %v756
    %v1085 = vpack.c.b16 %v761, %v757
    %v1086 = vpack.c.b16 %v762, %v758
    %v1087 = vpack.c.b16 %v763, %v759
    %v1088 = vpack.c.b16 %v768, %v764
    %v1089 = vpack.c.b16 %v769, %v765
    %v1090 = vpack.c.b16 %v770, %v766
    %v1091 = vpack.c.b16 %v771, %v767
    %v1092 = vpack.c.b16 %v776, %v772
    %v1093 = vpack.c.b16 %v777, %v773
    %v1094 = vpack.c.b16 %v778, %v774
    %v1095 = vpack.c.b16 %v779, %v775
    %v1096 = vpack.c.b16 %v784, %v780
    %v1097 = vpack.c.b16 %v785, %v781
    %v1098 = vpack.c.b16 %v786, %v782
    %v1099 = vpack.c.b16 %v787, %v783
    %v1100 = vpack.c.b16 %v792, %v788
    %v1101 = vpack.c.b16 %v793, %v789
    %v1102 = vpack.c.b16 %v794, %v790
    %v1103 = vpack.c.b16 %v795, %v791
    %v1104 = vpack.c.b16 %v800, %v796
    %v1105 = vpack.c.b16 %v801, %v797
    %v1106 = vpack.c.b16 %v802, %v798
    %v1107 = vpack.c.b16 %v803, %v799
    %v1108 = vpack.c.b16 %v808, %v804
    %v1109 = vpack.c.b16 %v809, %v805
    %v1110 = vpack.c.b16 %v810, %v806
    %v1111 = vpack.c.b16 %v811, %v807
    %v1112 = vpack.c.b16 %v816, %v812
    %v1113 = vpack.c.b16 %v817, %v813
    %v1114 = vpack.c.b16 %v818, %v814
    %v1115 = vpack.c.b16 %v819, %v815
    %v1116 = vpack.c.b16 %v824, %v820
    %v1117 = vpack.c.b16 %v825, %v821
    %v1118 = vpack.c.b16 %v826, %v822
    %v1119 = vpack.c.b16 %v827, %v823
    %v1120 = vpack.c.b16 %v832, %v828
    %v1121 = vpack.c.b16 %v833, %v829
    %v1122 = vpack.c.b16 %v834, %v830
    %v1123 = vpack.c.b16 %v835, %v831
    %v1124 = vpack.c.b16 %v840, %v836
    %v1125 = vpack.c.b16 %v841, %v837
    %v1126 = vpack.c.b16 %v842, %v838
    %v1127 = vpack.c.b16 %v843, %v839
    %v1128 = vpack.c.b16 %v848, %v844
    %v1129 = vpack.c.b16 %v849, %v845
    %v1130 = vpack.c.b16 %v850, %v846
    %v1131 = vpack.c.b16 %v851, %v847
    %v1132 = vpack.c.b16 %v856, %v852
    %v1133 = vpack.c.b16 %v857, %v853
    %v1134 = vpack.c.b16 %v858, %v854
    %v1135 = vpack.c.b16 %v859, %v855
    %v1136 = vpack.c.b16 %v864, %v860
    %v1137 = vpack.c.b16 %v865, %v861
    %v1138 = vpack.c.b16 %v866, %v862
    %v1139 = vpack.c.b16 %v867, %v863
    %v1140 = vpack.c.b16 %v872, %v868
    %v1141 = vpack.c.b16 %v873, %v869
    %v1142 = vpack.c.b16 %v874, %v870
    %v1143 = vpack.c.b16 %v875, %v871
    %v1144 = vpack.c.b16 %v880, %v876
    %v1145 = vpack.c.b16 %v881, %v877
    %v1146 = vpack.c.b16 %v882, %v878
    %v1147 = vpack.c.b16 %v883, %v879
    %v1148 = vpack.c.b16 %v888, %v884
    %v1149 = vpack.c.b16 %v889, %v885
    %v1150 = vpack.c.b16 %v890, %v886
    %v1151 = vpack.c.b16 %v891, %v887
    %v1152 = vpack.c.b16 %v896, %v892
    %v1153 = vpack.c.b16 %v897, %v893
    %v1154 = vpack.c.b16 %v898, %v894
    %v1155 = vpack.c.b16 %v899, %v895
    %v1156 = vpack.c.b16 %v904, %v900
    %v1157 = vpack.c.b16 %v905, %v901
    %v1158 = vpack.c.b16 %v906, %v902
    %v1159 = vpack.c.b16 %v907, %v903
    %v1160 = vpack.c.b16 %v912, %v908
    %v1161 = vpack.c.b16 %v913, %v909
    %v1162 = vpack.c.b16 %v914, %v910
    %v1163 = vpack.c.b16 %v915, %v911
    %v1164 = vpack.c.b16 %v920, %v916
    %v1165 = vpack.c.b16 %v921, %v917
    %v1166 = vpack.c.b16 %v922, %v918
    %v1167 = vpack.c.b16 %v923, %v919
    %v1168 = vpack.c.b16 %v928, %v924
    %v1169 = vpack.c.b16 %v929, %v925
    %v1170 = vpack.c.b16 %v930, %v926
    %v1171 = vpack.c.b16 %v931, %v927
    %v1172 = vpack.c.b16 %v936, %v932
    %v1173 = vpack.c.b16 %v937, %v933
    %v1174 = vpack.c.b16 %v938, %v934
    %v1175 = vpack.c.b16 %v939, %v935
    %v1176 = vpack.c.b16 %v944, %v940
    %v1177 = vpack.c.b16 %v945, %v941
    %v1178 = vpack.c.b16 %v946, %v942
    %v1179 = vpack.c.b16 %v947, %v943
    %v1180 = vpack.c.b16 %v952, %v948
    %v1181 = vpack.c.b16 %v953, %v949
    %v1182 = vpack.c.b16 %v954, %v950
    %v1183 = vpack.c.b16 %v955, %v951
    %v1184 = vpack.c.b16 %v960, %v956
    %v1185 = vpack.c.b16 %v961, %v957
    %v1186 = vpack.c.b16 %v962, %v958
    %v1187 = vpack.c.b16 %v963, %v959
    %v1188 = vpack.c.b16 %v968, %v964
    %v1189 = vpack.c.b16 %v969, %v965
    %v1190 = vpack.c.b16 %v970, %v966
    %v1191 = vpack.c.b16 %v971, %v967
    %v1192 = vpack.c.b16 %v976, %v972
    %v1193 = vpack.c.b16 %v977, %v973
    %v1194 = vpack.c.b16 %v978, %v974
    %v1195 = vpack.c.b16 %v979, %v975
    %v1196 = vpack.c.b16 %v984, %v980
    %v1197 = vpack.c.b16 %v985, %v981
    %v1198 = vpack.c.b16 %v986, %v982
    %v1199 = vpack.c.b16 %v987, %v983
    %v1200 = vpack.c.b16 %v992, %v988
    %v1201 = vpack.c.b16 %v993, %v989
    %v1202 = vpack.c.b16 %v994, %v990
    %v1203 = vpack.c.b16 %v995, %v991
    %v1204 = vpack.c.b16 %v1000, %v996
    %v1205 = vpack.c.b16 %v1001, %v997
    %v1206 = vpack.c.b16 %v1002, %v998
    %v1207 = vpack.c.b16 %v1003, %v999
    %v1208 = vpack.c.b16 %v1008, %v1004
    %v1209 = vpack.c.b16 %v1009, %v1005
    %v1210 = vpack.c.b16 %v1010, %v1006
    %v1211 = vpack.c.b16 %v1011, %v1007
    %v1212 = vpack.c.b16 %v1016, %v1012
    %v1213 = vpack.c.b16 %v1017, %v1013
    %v1214 = vpack.c.b16 %v1018, %v1014
    %v1215 = vpack.c.b16 %v1019, %v1015
    %vm1412 = vcmask 130048
    %v1414 = vsel %vm1412, %v425, 0
    %1416 = vmatprep.subr.bf16.mxu0 %v1021
    %1417 = vmatpush1.bf16.msra.mxu0 %v1020
    %1418 = vmatprep.subr.bf16.mxu0 %v1025
    %1419 = vmatpush1.bf16.msra.mxu0 %v1024
    %1420 = vmatprep.subr.bf16.mxu0 %v1029
    %1421 = vmatpush1.bf16.msra.mxu0 %v1028
    %1422 = vmatprep.subr.bf16.mxu0 %v1033
    %1423 = vmatpush1.bf16.msra.mxu0 %v1032
    %1424 = vmatprep.subr.bf16.mxu0 %v1037
    %1425 = vmatpush1.bf16.msra.mxu0 %v1036
    %1426 = vmatprep.subr.bf16.mxu0 %v1041
    %1427 = vmatpush1.bf16.msra.mxu0 %v1040
    %1428 = vmatprep.subr.bf16.mxu0 %v1045
    %1429 = vmatpush1.bf16.msra.mxu0 %v1044
    %1430 = vmatprep.subr.bf16.mxu0 %v1049
    %1431 = vmatpush1.bf16.msra.mxu0 %v1048
    %1432 = vmatprep.subr.bf16.mxu0 %v1053
    %1433 = vmatpush1.bf16.msra.mxu0 %v1052
    %1434 = vmatprep.subr.bf16.mxu0 %v1057
    %1435 = vmatpush1.bf16.msra.mxu0 %v1056
    %1436 = vmatprep.subr.bf16.mxu0 %v1061
    %1437 = vmatpush1.bf16.msra.mxu0 %v1060
    %1438 = vmatprep.subr.bf16.mxu0 %v1065
    %1439 = vmatpush1.bf16.msra.mxu0 %v1064
    %1440 = vmatprep.subr.bf16.mxu0 %v1069
    %1441 = vmatpush1.bf16.msra.mxu0 %v1068
    %1442 = vmatprep.subr.bf16.mxu0 %v1073
    %1443 = vmatpush1.bf16.msra.mxu0 %v1072
    %1444 = vmatprep.subr.bf16.mxu0 %v1077
    %1445 = vmatpush1.bf16.msra.mxu0 %v1076
    %1446 = vmatprep.subr.bf16.mxu0 %v1081
    %1447 = vmatpush1.bf16.msra.mxu0 %v1080
    %1448 = vmatprep.mubr.bf16.mxu0 %v420
    %1449 = vmatmul.mubr.bf16.gmra.mrb[0].mxu0 %v419
    %v1450 = vpop.f32.mrb[0].mxu0
    %v1451 = vadd.f32 %v391, %v1450
    %v1452 = vpop.f32.mrb[0].mxu0
    %v1453 = vadd.f32 %v395, %v1452
    %v1454 = vpop.f32.mrb[0].mxu0
    %v1455 = vpop.f32.mrb[0].mxu0
    %1456 = vdwg.mxu0
    %1457 = vmatprep.subr.bf16.mxu0 %v1085
    %1458 = vmatpush1.bf16.msra.mxu0 %v1084
    %1459 = vmatprep.subr.bf16.mxu0 %v1089
    %1460 = vmatpush1.bf16.msra.mxu0 %v1088
    %1461 = vmatprep.subr.bf16.mxu0 %v1093
    %1462 = vmatpush1.bf16.msra.mxu0 %v1092
    %1463 = vmatprep.subr.bf16.mxu0 %v1097
    %1464 = vmatpush1.bf16.msra.mxu0 %v1096
    %1465 = vmatprep.subr.bf16.mxu0 %v1101
    %1466 = vmatpush1.bf16.msra.mxu0 %v1100
    %1467 = vmatprep.subr.bf16.mxu0 %v1105
    %1468 = vmatpush1.bf16.msra.mxu0 %v1104
    %1469 = vmatprep.subr.bf16.mxu0 %v1109
    %1470 = vmatpush1.bf16.msra.mxu0 %v1108
    %1471 = vmatprep.subr.bf16.mxu0 %v1113
    %1472 = vmatpush1.bf16.msra.mxu0 %v1112
    %1473 = vmatprep.subr.bf16.mxu0 %v1117
    %1474 = vmatpush1.bf16.msra.mxu0 %v1116
    %1475 = vmatprep.subr.bf16.mxu0 %v1121
    %1476 = vmatpush1.bf16.msra.mxu0 %v1120
    %1477 = vmatprep.subr.bf16.mxu0 %v1125
    %1478 = vmatpush1.bf16.msra.mxu0 %v1124
    %1479 = vmatprep.subr.bf16.mxu0 %v1129
    %1480 = vmatpush1.bf16.msra.mxu0 %v1128
    %1481 = vmatprep.subr.bf16.mxu0 %v1133
    %1482 = vmatpush1.bf16.msra.mxu0 %v1132
    %1483 = vmatprep.subr.bf16.mxu0 %v1137
    %1484 = vmatpush1.bf16.msra.mxu0 %v1136
    %1485 = vmatprep.subr.bf16.mxu0 %v1141
    %1486 = vmatpush1.bf16.msra.mxu0 %v1140
    %1487 = vmatprep.subr.bf16.mxu0 %v1145
    %1488 = vmatpush1.bf16.msra.mxu0 %v1144
    %1489 = vmatprep.mubr.bf16.mxu0 %v422
    %1490 = vmatmul.mubr.bf16.gmra.mrb[0].mxu0 %v421
    %v1491 = vpop.f32.mrb[0].mxu0
    %v1492 = vadd.f32 %v1451, %v1491
    %v1493 = vpop.f32.mrb[0].mxu0
    %v1494 = vadd.f32 %v1453, %v1493
    %v1495 = vpop.f32.mrb[0].mxu0
    %v1496 = vpop.f32.mrb[0].mxu0
    %1497 = vdwg.mxu0
    %1498 = vmatprep.subr.bf16.mxu0 %v1149
    %1499 = vmatpush1.bf16.msra.mxu0 %v1148
    %1500 = vmatprep.subr.bf16.mxu0 %v1153
    %1501 = vmatpush1.bf16.msra.mxu0 %v1152
    %1502 = vmatprep.subr.bf16.mxu0 %v1157
    %1503 = vmatpush1.bf16.msra.mxu0 %v1156
    %1504 = vmatprep.subr.bf16.mxu0 %v1161
    %1505 = vmatpush1.bf16.msra.mxu0 %v1160
    %1506 = vmatprep.subr.bf16.mxu0 %v1165
    %1507 = vmatpush1.bf16.msra.mxu0 %v1164
    %1508 = vmatprep.subr.bf16.mxu0 %v1169
    %1509 = vmatpush1.bf16.msra.mxu0 %v1168
    %1510 = vmatprep.subr.bf16.mxu0 %v1173
    %1511 = vmatpush1.bf16.msra.mxu0 %v1172
    %1512 = vmatprep.subr.bf16.mxu0 %v1177
    %1513 = vmatpush1.bf16.msra.mxu0 %v1176
    %1514 = vmatprep.subr.bf16.mxu0 %v1181
    %1515 = vmatpush1.bf16.msra.mxu0 %v1180
    %1516 = vmatprep.subr.bf16.mxu0 %v1185
    %1517 = vmatpush1.bf16.msra.mxu0 %v1184
    %1518 = vmatprep.subr.bf16.mxu0 %v1189
    %1519 = vmatpush1.bf16.msra.mxu0 %v1188
    %1520 = vmatprep.subr.bf16.mxu0 %v1193
    %1521 = vmatpush1.bf16.msra.mxu0 %v1192
    %1522 = vmatprep.subr.bf16.mxu0 %v1197
    %1523 = vmatpush1.bf16.msra.mxu0 %v1196
    %1524 = vmatprep.subr.bf16.mxu0 %v1201
    %1525 = vmatpush1.bf16.msra.mxu0 %v1200
    %1526 = vmatprep.subr.bf16.mxu0 %v1205
    %1527 = vmatpush1.bf16.msra.mxu0 %v1204
    %1528 = vmatprep.subr.bf16.mxu0 %v1209
    %1529 = vmatpush1.bf16.msra.mxu0 %v1208
    %1530 = vmatprep.mubr.bf16.mxu0 %v424
    %1531 = vmatmul.mubr.bf16.gmra.mrb[0].mxu0 %v423
    %v1532 = vpop.f32.mrb[0].mxu0
    %v1533 = vadd.f32 %v1492, %v1532
    %v1534 = vpop.f32.mrb[0].mxu0
    %v1535 = vadd.f32 %v1494, %v1534
    %v1536 = vpop.f32.mrb[0].mxu0
    %v1537 = vpop.f32.mrb[0].mxu0
    %1538 = vdwg.mxu0
    %1539 = vmatprep.subr.bf16.mxu0 %v1213
    %1540 = vmatpush1.bf16.msra.mxu0 %v1212
    %1541 = vmatprep.subr.bf16.mxu0 0
    %1542 = vmatpush1.bf16.msra.mxu0 0
    %1543 = vmatprep.subr.bf16.mxu0 0
    %1544 = vmatpush1.bf16.msra.mxu0 0
    %1545 = vmatprep.subr.bf16.mxu0 0
    %1546 = vmatpush1.bf16.msra.mxu0 0
    %1547 = vmatprep.subr.bf16.mxu0 0
    %1548 = vmatpush1.bf16.msra.mxu0 0
    %1549 = vmatprep.subr.bf16.mxu0 0
    %1550 = vmatpush1.bf16.msra.mxu0 0
    %1551 = vmatprep.subr.bf16.mxu0 0
    %1552 = vmatpush1.bf16.msra.mxu0 0
    %1553 = vmatprep.subr.bf16.mxu0 0
    %1554 = vmatpush1.bf16.msra.mxu0 0
    %1555 = vmatprep.subr.bf16.mxu0 0
    %1556 = vmatpush1.bf16.msra.mxu0 0
    %1557 = vmatprep.subr.bf16.mxu0 0
    %1558 = vmatpush1.bf16.msra.mxu0 0
    %1559 = vmatprep.subr.bf16.mxu0 0
    %1560 = vmatpush1.bf16.msra.mxu0 0
    %1561 = vmatprep.subr.bf16.mxu0 0
    %1562 = vmatpush1.bf16.msra.mxu0 0
    %1563 = vmatprep.subr.bf16.mxu0 0
    %1564 = vmatpush1.bf16.msra.mxu0 0
    %1565 = vmatprep.subr.bf16.mxu0 0
    %1566 = vmatpush1.bf16.msra.mxu0 0
    %1567 = vmatprep.subr.bf16.mxu0 0
    %1568 = vmatpush1.bf16.msra.mxu0 0
    %1569 = vmatprep.subr.bf16.mxu0 0
    %1570 = vmatpush1.bf16.msra.mxu0 0
    %1571 = vmatprep.mubr.bf16.mxu0 0
    %1572 = vmatmul.mubr.bf16.gmra.mrb[0].mxu0 %v1414
    %v1573 = vpop.f32.mrb[0].mxu0
    %v1574 = vadd.f32 %v1533, %v1573
    %v1575 = vpop.f32.mrb[0].mxu0
    %v1576 = vadd.f32 %v1535, %v1575
    %v1577 = vpop.f32.mrb[0].mxu0
    %v1578 = vpop.f32.mrb[0].mxu0
    %1579 = vdwg.mxu0
    %1580 = vmatprep.subr.bf16.mxu0 %v1023
    %1581 = vmatpush1.bf16.msra.mxu0 %v1022
    %1582 = vmatprep.subr.bf16.mxu0 %v1027
    %1583 = vmatpush1.bf16.msra.mxu0 %v1026
    %1584 = vmatprep.subr.bf16.mxu0 %v1031
    %1585 = vmatpush1.bf16.msra.mxu0 %v1030
    %1586 = vmatprep.subr.bf16.mxu0 %v1035
    %1587 = vmatpush1.bf16.msra.mxu0 %v1034
    %1588 = vmatprep.subr.bf16.mxu0 %v1039
    %1589 = vmatpush1.bf16.msra.mxu0 %v1038
    %1590 = vmatprep.subr.bf16.mxu0 %v1043
    %1591 = vmatpush1.bf16.msra.mxu0 %v1042
    %1592 = vmatprep.subr.bf16.mxu0 %v1047
    %1593 = vmatpush1.bf16.msra.mxu0 %v1046
    %1594 = vmatprep.subr.bf16.mxu0 %v1051
    %1595 = vmatpush1.bf16.msra.mxu0 %v1050
    %1596 = vmatprep.subr.bf16.mxu0 %v1055
    %1597 = vmatpush1.bf16.msra.mxu0 %v1054
    %1598 = vmatprep.subr.bf16.mxu0 %v1059
    %1599 = vmatpush1.bf16.msra.mxu0 %v1058
    %1600 = vmatprep.subr.bf16.mxu0 %v1063
    %1601 = vmatpush1.bf16.msra.mxu0 %v1062
    %1602 = vmatprep.subr.bf16.mxu0 %v1067
    %1603 = vmatpush1.bf16.msra.mxu0 %v1066
    %1604 = vmatprep.subr.bf16.mxu0 %v1071
    %1605 = vmatpush1.bf16.msra.mxu0 %v1070
    %1606 = vmatprep.subr.bf16.mxu0 %v1075
    %1607 = vmatpush1.bf16.msra.mxu0 %v1074
    %1608 = vmatprep.subr.bf16.mxu0 %v1079
    %1609 = vmatpush1.bf16.msra.mxu0 %v1078
    %1610 = vmatprep.subr.bf16.mxu0 %v1083
    %1611 = vmatpush1.bf16.msra.mxu0 %v1082
    %1612 = vmatprep.mubr.bf16.mxu0 %v420
    %1613 = vmatmul.mubr.bf16.gmra.mrb[0].mxu0 %v419
    %v1614 = vpop.f32.mrb[0].mxu0
    %v1615 = vadd.f32 %v399, %v1614
    %v1616 = vpop.f32.mrb[0].mxu0
    %v1617 = vadd.f32 %v403, %v1616
    %v1618 = vpop.f32.mrb[0].mxu0
    %v1619 = vpop.f32.mrb[0].mxu0
    %1620 = vdwg.mxu0
    %1621 = vmatprep.subr.bf16.mxu0 %v1087
    %1622 = vmatpush1.bf16.msra.mxu0 %v1086
    %1623 = vmatprep.subr.bf16.mxu0 %v1091
    %1624 = vmatpush1.bf16.msra.mxu0 %v1090
    %1625 = vmatprep.subr.bf16.mxu0 %v1095
    %1626 = vmatpush1.bf16.msra.mxu0 %v1094
    %1627 = vmatprep.subr.bf16.mxu0 %v1099
    %1628 = vmatpush1.bf16.msra.mxu0 %v1098
    %1629 = vmatprep.subr.bf16.mxu0 %v1103
    %1630 = vmatpush1.bf16.msra.mxu0 %v1102
    %1631 = vmatprep.subr.bf16.mxu0 %v1107
    %1632 = vmatpush1.bf16.msra.mxu0 %v1106
    %1633 = vmatprep.subr.bf16.mxu0 %v1111
    %1634 = vmatpush1.bf16.msra.mxu0 %v1110
    %1635 = vmatprep.subr.bf16.mxu0 %v1115
    %1636 = vmatpush1.bf16.msra.mxu0 %v1114
    %1637 = vmatprep.subr.bf16.mxu0 %v1119
    %1638 = vmatpush1.bf16.msra.mxu0 %v1118
    %1639 = vmatprep.subr.bf16.mxu0 %v1123
    %1640 = vmatpush1.bf16.msra.mxu0 %v1122
    %1641 = vmatprep.subr.bf16.mxu0 %v1127
    %1642 = vmatpush1.bf16.msra.mxu0 %v1126
    %1643 = vmatprep.subr.bf16.mxu0 %v1131
    %1644 = vmatpush1.bf16.msra.mxu0 %v1130
    %1645 = vmatprep.subr.bf16.mxu0 %v1135
    %1646 = vmatpush1.bf16.msra.mxu0 %v1134
    %1647 = vmatprep.subr.bf16.mxu0 %v1139
    %1648 = vmatpush1.bf16.msra.mxu0 %v1138
    %1649 = vmatprep.subr.bf16.mxu0 %v1143
    %1650 = vmatpush1.bf16.msra.mxu0 %v1142
    %1651 = vmatprep.subr.bf16.mxu0 %v1147
    %1652 = vmatpush1.bf16.msra.mxu0 %v1146
    %1653 = vmatprep.mubr.bf16.mxu0 %v422
    %1654 = vmatmul.mubr.bf16.gmra.mrb[0].mxu0 %v421
    %v1655 = vpop.f32.mrb[0].mxu0
    %v1656 = vadd.f32 %v1615, %v1655
    %v1657 = vpop.f32.mrb[0].mxu0
    %v1658 = vadd.f32 %v1617, %v1657
    %v1659 = vpop.f32.mrb[0].mxu0
    %v1660 = vpop.f32.mrb[0].mxu0
    %1661 = vdwg.mxu0
    %1662 = vmatprep.subr.bf16.mxu0 %v1151
    %1663 = vmatpush1.bf16.msra.mxu0 %v1150
    %1664 = vmatprep.subr.bf16.mxu0 %v1155
    %1665 = vmatpush1.bf16.msra.mxu0 %v1154
    %1666 = vmatprep.subr.bf16.mxu0 %v1159
    %1667 = vmatpush1.bf16.msra.mxu0 %v1158
    %1668 = vmatprep.subr.bf16.mxu0 %v1163
    %1669 = vmatpush1.bf16.msra.mxu0 %v1162
    %1670 = vmatprep.subr.bf16.mxu0 %v1167
    %1671 = vmatpush1.bf16.msra.mxu0 %v1166
    %1672 = vmatprep.subr.bf16.mxu0 %v1171
    %1673 = vmatpush1.bf16.msra.mxu0 %v1170
    %1674 = vmatprep.subr.bf16.mxu0 %v1175
    %1675 = vmatpush1.bf16.msra.mxu0 %v1174
    %1676 = vmatprep.subr.bf16.mxu0 %v1179
    %1677 = vmatpush1.bf16.msra.mxu0 %v1178
    %1678 = vmatprep.subr.bf16.mxu0 %v1183
    %1679 = vmatpush1.bf16.msra.mxu0 %v1182
    %1680 = vmatprep.subr.bf16.mxu0 %v1187
    %1681 = vmatpush1.bf16.msra.mxu0 %v1186
    %1682 = vmatprep.subr.bf16.mxu0 %v1191
    %1683 = vmatpush1.bf16.msra.mxu0 %v1190
    %1684 = vmatprep.subr.bf16.mxu0 %v1195
    %1685 = vmatpush1.bf16.msra.mxu0 %v1194
    %1686 = vmatprep.subr.bf16.mxu0 %v1199
    %1687 = vmatpush1.bf16.msra.mxu0 %v1198
    %1688 = vmatprep.subr.bf16.mxu0 %v1203
    %1689 = vmatpush1.bf16.msra.mxu0 %v1202
    %1690 = vmatprep.subr.bf16.mxu0 %v1207
    %1691 = vmatpush1.bf16.msra.mxu0 %v1206
    %1692 = vmatprep.subr.bf16.mxu0 %v1211
    %1693 = vmatpush1.bf16.msra.mxu0 %v1210
    %1694 = vmatprep.mubr.bf16.mxu0 %v424
    %1695 = vmatmul.mubr.bf16.gmra.mrb[0].mxu0 %v423
    %v1696 = vpop.f32.mrb[0].mxu0
    %v1697 = vadd.f32 %v1656, %v1696
    %v1698 = vpop.f32.mrb[0].mxu0
    %v1699 = vadd.f32 %v1658, %v1698
    %v1700 = vpop.f32.mrb[0].mxu0
    %v1701 = vpop.f32.mrb[0].mxu0
    %1702 = vdwg.mxu0
    %1703 = vmatprep.subr.bf16.mxu0 %v1215
    %1704 = vmatpush1.bf16.msra.mxu0 %v1214
    %1705 = vmatprep.subr.bf16.mxu0 0
    %1706 = vmatpush1.bf16.msra.mxu0 0
    %1707 = vmatprep.subr.bf16.mxu0 0
    %1708 = vmatpush1.bf16.msra.mxu0 0
    %1709 = vmatprep.subr.bf16.mxu0 0
    %1710 = vmatpush1.bf16.msra.mxu0 0
    %1711 = vmatprep.subr.bf16.mxu0 0
    %1712 = vmatpush1.bf16.msra.mxu0 0
    %1713 = vmatprep.subr.bf16.mxu0 0
    %1714 = vmatpush1.bf16.msra.mxu0 0
    %1715 = vmatprep.subr.bf16.mxu0 0
    %1716 = vmatpush1.bf16.msra.mxu0 0
    %1717 = vmatprep.subr.bf16.mxu0 0
    %1718 = vmatpush1.bf16.msra.mxu0 0
    %1719 = vmatprep.subr.bf16.mxu0 0
    %1720 = vmatpush1.bf16.msra.mxu0 0
    %1721 = vmatprep.subr.bf16.mxu0 0
    %1722 = vmatpush1.bf16.msra.mxu0 0
    %1723 = vmatprep.subr.bf16.mxu0 0
    %1724 = vmatpush1.bf16.msra.mxu0 0
    %1725 = vmatprep.subr.bf16.mxu0 0
    %1726 = vmatpush1.bf16.msra.mxu0 0
    %1727 = vmatprep.subr.bf16.mxu0 0
    %1728 = vmatpush1.bf16.msra.mxu0 0
    %1729 = vmatprep.subr.bf16.mxu0 0
    %1730 = vmatpush1.bf16.msra.mxu0 0
    %1731 = vmatprep.subr.bf16.mxu0 0
    %1732 = vmatpush1.bf16.msra.mxu0 0
    %1733 = vmatprep.subr.bf16.mxu0 0
    %1734 = vmatpush1.bf16.msra.mxu0 0
    %1735 = vmatprep.mubr.bf16.mxu0 0
    %1736 = vmatmul.mubr.bf16.gmra.mrb[0].mxu0 %v1414
    %v1737 = vpop.f32.mrb[0].mxu0
    %v1738 = vadd.f32 %v1697, %v1737
    %v1739 = vpop.f32.mrb[0].mxu0
    %v1740 = vadd.f32 %v1699, %v1739
    %v1741 = vpop.f32.mrb[0].mxu0
    %v1742 = vpop.f32.mrb[0].mxu0
    %1743 = vdwg.mxu0
    %v1744 = vxor.u32 %v1574, 2147483648
    %v1745 = vxor.u32 %v1576, 2147483648
    %v1746 = vxor.u32 %v1738, 2147483648
    %v1747 = vxor.u32 %v1740, 2147483648
    %v1748 = vmul.f32 %v1744, 1.442695
    %v1749 = vpow.pop %v1748
    %v1750 = vmul.f32 %v1745, 1.442695
    %v1751 = vpow.pop %v1750
    %v1752 = vmul.f32 %v1746, 1.442695
    %v1753 = vpow.pop %v1752
    %v1754 = vmul.f32 %v1747, 1.442695
    %v1755 = vpow.pop %v1754
    %v1756 = vadd.f32 %v1749, 1.0
    %v1757 = vadd.f32 %v1751, 1.0
    %v1758 = vadd.f32 %v1753, 1.0
    %v1759 = vadd.f32 %v1755, 1.0
    %v1760 = vrcp.pop %v1756
    %v1761 = vmul.f32 1.0, %v1760
    %v1762 = vrcp.pop %v1757
    %v1763 = vmul.f32 1.0, %v1762
    %v1764 = vrcp.pop %v1758
    %v1765 = vmul.f32 1.0, %v1764
    %v1766 = vrcp.pop %v1759
    %v1767 = vmul.f32 1.0, %v1766
    %v1768 = vld [vmem:[%s5] sm:$0xf]
    %v1770 = vlaneseq
    %v1771 = vshrl.u32 %v1770, 7
    %v1772 = vsub.s32 0, %v1771
    %v1773 = vrot.slane %v1768, %v1772
    %v1774 = vlaneseq
    %v1775 = vshrl.u32 %v1774, 7
    %v1776 = vsub.s32 1, %v1775
    %v1777 = vrot.slane %v1768, %v1776
    %v1778 = vlaneseq
    %v1779 = vshrl.u32 %v1778, 7
    %v1780 = vsub.s32 2, %v1779
    %v1781 = vrot.slane %v1768, %v1780
    %v1782 = vlaneseq
    %v1783 = vshrl.u32 %v1782, 7
    %v1784 = vsub.s32 3, %v1783
    %v1785 = vrot.slane %v1768, %v1784
    %v1790 = vld [vmem:[%s6] sm:$0xf]
    %v1792 = vlaneseq
    %v1793 = vshrl.u32 %v1792, 7
    %v1794 = vsub.s32 0, %v1793
    %v1795 = vrot.slane %v1790, %v1794
    %v1796 = vlaneseq
    %v1797 = vshrl.u32 %v1796, 7
    %v1798 = vsub.s32 1, %v1797
    %v1799 = vrot.slane %v1790, %v1798
    %v1800 = vlaneseq
    %v1801 = vshrl.u32 %v1800, 7
    %v1802 = vsub.s32 2, %v1801
    %v1803 = vrot.slane %v1790, %v1802
    %v1804 = vlaneseq
    %v1805 = vshrl.u32 %v1804, 7
    %v1806 = vsub.s32 3, %v1805
    %v1807 = vrot.slane %v1790, %v1806
    %v1812 = vld [vmem:[%s3] sm:$0xff]
    %v1813 = vld [vmem:[%s3 + $0x8] sm:$0xff]
    %v1814 = vld [vmem:[%s3 + $0x10] sm:$0xff]
    %v1815 = vld [vmem:[%s3 + $0x18] sm:$0xff]
    %v1816 = vlaneseq
    %v1817 = vshrl.u32 %v1816, 7
    %v1818 = vsub.s32 0, %v1817
    %v1819 = vrot.slane %v1812, %v1818
    %v1820 = vlaneseq
    %v1821 = vshrl.u32 %v1820, 7
    %v1822 = vsub.s32 0, %v1821
    %v1823 = vrot.slane %v1813, %v1822
    %v1824 = vlaneseq
    %v1825 = vshrl.u32 %v1824, 7
    %v1826 = vsub.s32 0, %v1825
    %v1827 = vrot.slane %v1814, %v1826
    %v1828 = vlaneseq
    %v1829 = vshrl.u32 %v1828, 7
    %v1830 = vsub.s32 0, %v1829
    %v1831 = vrot.slane %v1815, %v1830
    %v1832 = vmul.f32 %v1819, %v1761
    %v1833 = vmul.f32 %v1823, %v1763
    %v1834 = vmul.f32 %v1827, %v1765
    %v1835 = vmul.f32 %v1831, %v1767
    %v1836 = vpack.c.bf16 %v1832, %v1832
    %v1837 = vpack.c.bf16 %v1833, %v1833
    %v1838 = vpack.c.bf16 %v1834, %v1834
    %v1839 = vpack.c.bf16 %v1835, %v1835
    %1840 = vst [vmem:[#allocation4] sm:$0xf] %v1836
    %1841 = vst [vmem:[#allocation4 + $0x8] sm:$0xf] %v1837
    %1842 = vst [vmem:[#allocation4 + $0x10] sm:$0xf] %v1838
    %1843 = vst [vmem:[#allocation4 + $0x18] sm:$0xf] %v1839
    %v1844 = vlaneseq
    %v1845 = vshrl.u32 %v1844, 7
    %v1846 = vsub.s32 1, %v1845
    %v1847 = vrot.slane %v1812, %v1846
    %v1848 = vlaneseq
    %v1849 = vshrl.u32 %v1848, 7
    %v1850 = vsub.s32 1, %v1849
    %v1851 = vrot.slane %v1813, %v1850
    %v1852 = vlaneseq
    %v1853 = vshrl.u32 %v1852, 7
    %v1854 = vsub.s32 1, %v1853
    %v1855 = vrot.slane %v1814, %v1854
    %v1856 = vlaneseq
    %v1857 = vshrl.u32 %v1856, 7
    %v1858 = vsub.s32 1, %v1857
    %v1859 = vrot.slane %v1815, %v1858
    %v1860 = vmul.f32 %v1847, %v1761
    %v1861 = vmul.f32 %v1851, %v1763
    %v1862 = vmul.f32 %v1855, %v1765
    %v1863 = vmul.f32 %v1859, %v1767
    %v1864 = vpack.c.bf16 %v1860, %v1860
    %v1865 = vpack.c.bf16 %v1861, %v1861
    %v1866 = vpack.c.bf16 %v1862, %v1862
    %v1867 = vpack.c.bf16 %v1863, %v1863
    %v1872 = vrot.slane %v1864, 4
    %v1873 = vrot.slane %v1865, 4
    %v1874 = vrot.slane %v1866, 4
    %v1875 = vrot.slane %v1867, 4
    %1880 = vst [vmem:[#allocation4] sm:$0xf0] %v1872
    %1881 = vst [vmem:[#allocation4 + $0x8] sm:$0xf0] %v1873
    %1882 = vst [vmem:[#allocation4 + $0x10] sm:$0xf0] %v1874
    %1883 = vst [vmem:[#allocation4 + $0x18] sm:$0xf0] %v1875
    %v1884 = vlaneseq
    %v1885 = vshrl.u32 %v1884, 7
    %v1886 = vsub.s32 2, %v1885
    %v1887 = vrot.slane %v1812, %v1886
    %v1888 = vlaneseq
    %v1889 = vshrl.u32 %v1888, 7
    %v1890 = vsub.s32 2, %v1889
    %v1891 = vrot.slane %v1813, %v1890
    %v1892 = vlaneseq
    %v1893 = vshrl.u32 %v1892, 7
    %v1894 = vsub.s32 2, %v1893
    %v1895 = vrot.slane %v1814, %v1894
    %v1896 = vlaneseq
    %v1897 = vshrl.u32 %v1896, 7
    %v1898 = vsub.s32 2, %v1897
    %v1899 = vrot.slane %v1815, %v1898
    %v1900 = vmul.f32 %v1887, %v1761
    %v1901 = vmul.f32 %v1891, %v1763
    %v1902 = vmul.f32 %v1895, %v1765
    %v1903 = vmul.f32 %v1899, %v1767
    %v1904 = vpack.c.bf16 %v1900, %v1900
    %v1905 = vpack.c.bf16 %v1901, %v1901
    %v1906 = vpack.c.bf16 %v1902, %v1902
    %v1907 = vpack.c.bf16 %v1903, %v1903
    %1908 = vst [vmem:[#allocation4 + $0x20] sm:$0xf] %v1904
    %1909 = vst [vmem:[#allocation4 + $0x28] sm:$0xf] %v1905
    %1910 = vst [vmem:[#allocation4 + $0x30] sm:$0xf] %v1906
    %1911 = vst [vmem:[#allocation4 + $0x38] sm:$0xf] %v1907
    %v1912 = vlaneseq
    %v1913 = vshrl.u32 %v1912, 7
    %v1914 = vsub.s32 3, %v1913
    %v1915 = vrot.slane %v1812, %v1914
    %v1916 = vlaneseq
    %v1917 = vshrl.u32 %v1916, 7
    %v1918 = vsub.s32 3, %v1917
    %v1919 = vrot.slane %v1813, %v1918
    %v1920 = vlaneseq
    %v1921 = vshrl.u32 %v1920, 7
    %v1922 = vsub.s32 3, %v1921
    %v1923 = vrot.slane %v1814, %v1922
    %v1924 = vlaneseq
    %v1925 = vshrl.u32 %v1924, 7
    %v1926 = vsub.s32 3, %v1925
    %v1927 = vrot.slane %v1815, %v1926
    %v1928 = vmul.f32 %v1915, %v1761
    %v1929 = vmul.f32 %v1919, %v1763
    %v1930 = vmul.f32 %v1923, %v1765
    %v1931 = vmul.f32 %v1927, %v1767
    %v1932 = vpack.c.bf16 %v1928, %v1928
    %v1933 = vpack.c.bf16 %v1929, %v1929
    %v1934 = vpack.c.bf16 %v1930, %v1930
    %v1935 = vpack.c.bf16 %v1931, %v1931
    %v1940 = vrot.slane %v1932, 4
    %v1941 = vrot.slane %v1933, 4
    %v1942 = vrot.slane %v1934, 4
    %v1943 = vrot.slane %v1935, 4
    %1948 = vst [vmem:[#allocation4 + $0x20] sm:$0xf0] %v1940
    %1949 = vst [vmem:[#allocation4 + $0x28] sm:$0xf0] %v1941
    %1950 = vst [vmem:[#allocation4 + $0x30] sm:$0xf0] %v1942
    %1951 = vst [vmem:[#allocation4 + $0x38] sm:$0xf0] %v1943
    %v1952 = vlaneseq
    %v1953 = vshrl.u32 %v1952, 7
    %v1954 = vsub.s32 4, %v1953
    %v1955 = vrot.slane %v1812, %v1954
    %v1956 = vlaneseq
    %v1957 = vshrl.u32 %v1956, 7
    %v1958 = vsub.s32 4, %v1957
    %v1959 = vrot.slane %v1813, %v1958
    %v1960 = vlaneseq
    %v1961 = vshrl.u32 %v1960, 7
    %v1962 = vsub.s32 4, %v1961
    %v1963 = vrot.slane %v1814, %v1962
    %v1964 = vlaneseq
    %v1965 = vshrl.u32 %v1964, 7
    %v1966 = vsub.s32 4, %v1965
    %v1967 = vrot.slane %v1815, %v1966
    %v1968 = vmul.f32 %v1955, %v1761
    %v1969 = vmul.f32 %v1959, %v1763
    %v1970 = vmul.f32 %v1963, %v1765
    %v1971 = vmul.f32 %v1967, %v1767
    %v1972 = vpack.c.bf16 %v1968, %v1968
    %v1973 = vpack.c.bf16 %v1969, %v1969
    %v1974 = vpack.c.bf16 %v1970, %v1970
    %v1975 = vpack.c.bf16 %v1971, %v1971
    %1976 = vst [vmem:[#allocation4 + $0x40] sm:$0xf] %v1972
    %1977 = vst [vmem:[#allocation4 + $0x48] sm:$0xf] %v1973
    %1978 = vst [vmem:[#allocation4 + $0x50] sm:$0xf] %v1974
    %1979 = vst [vmem:[#allocation4 + $0x58] sm:$0xf] %v1975
    %v1980 = vlaneseq
    %v1981 = vshrl.u32 %v1980, 7
    %v1982 = vsub.s32 5, %v1981
    %v1983 = vrot.slane %v1812, %v1982
    %v1984 = vlaneseq
    %v1985 = vshrl.u32 %v1984, 7
    %v1986 = vsub.s32 5, %v1985
    %v1987 = vrot.slane %v1813, %v1986
    %v1988 = vlaneseq
    %v1989 = vshrl.u32 %v1988, 7
    %v1990 = vsub.s32 5, %v1989
    %v1991 = vrot.slane %v1814, %v1990
    %v1992 = vlaneseq
    %v1993 = vshrl.u32 %v1992, 7
    %v1994 = vsub.s32 5, %v1993
    %v1995 = vrot.slane %v1815, %v1994
    %v1996 = vmul.f32 %v1983, %v1761
    %v1997 = vmul.f32 %v1987, %v1763
    %v1998 = vmul.f32 %v1991, %v1765
    %v1999 = vmul.f32 %v1995, %v1767
    %v2000 = vpack.c.bf16 %v1996, %v1996
    %v2001 = vpack.c.bf16 %v1997, %v1997
    %v2002 = vpack.c.bf16 %v1998, %v1998
    %v2003 = vpack.c.bf16 %v1999, %v1999
    %v2008 = vrot.slane %v2000, 4
    %v2009 = vrot.slane %v2001, 4
    %v2010 = vrot.slane %v2002, 4
    %v2011 = vrot.slane %v2003, 4
    %2016 = vst [vmem:[#allocation4 + $0x40] sm:$0xf0] %v2008
    %2017 = vst [vmem:[#allocation4 + $0x48] sm:$0xf0] %v2009
    %2018 = vst [vmem:[#allocation4 + $0x50] sm:$0xf0] %v2010
    %2019 = vst [vmem:[#allocation4 + $0x58] sm:$0xf0] %v2011
    %v2020 = vlaneseq
    %v2021 = vshrl.u32 %v2020, 7
    %v2022 = vsub.s32 6, %v2021
    %v2023 = vrot.slane %v1812, %v2022
    %v2024 = vlaneseq
    %v2025 = vshrl.u32 %v2024, 7
    %v2026 = vsub.s32 6, %v2025
    %v2027 = vrot.slane %v1813, %v2026
    %v2028 = vlaneseq
    %v2029 = vshrl.u32 %v2028, 7
    %v2030 = vsub.s32 6, %v2029
    %v2031 = vrot.slane %v1814, %v2030
    %v2032 = vlaneseq
    %v2033 = vshrl.u32 %v2032, 7
    %v2034 = vsub.s32 6, %v2033
    %v2035 = vrot.slane %v1815, %v2034
    %v2036 = vmul.f32 %v2023, %v1761
    %v2037 = vmul.f32 %v2027, %v1763
    %v2038 = vmul.f32 %v2031, %v1765
    %v2039 = vmul.f32 %v2035, %v1767
    %v2040 = vpack.c.bf16 %v2036, %v2036
    %v2041 = vpack.c.bf16 %v2037, %v2037
    %v2042 = vpack.c.bf16 %v2038, %v2038
    %v2043 = vpack.c.bf16 %v2039, %v2039
    %2044 = vst [vmem:[#allocation4 + $0x60] sm:$0xf] %v2040
    %2045 = vst [vmem:[#allocation4 + $0x68] sm:$0xf] %v2041
    %2046 = vst [vmem:[#allocation4 + $0x70] sm:$0xf] %v2042
    %2047 = vst [vmem:[#allocation4 + $0x78] sm:$0xf] %v2043
    %v2048 = vlaneseq
    %v2049 = vshrl.u32 %v2048, 7
    %v2050 = vsub.s32 7, %v2049
    %v2051 = vrot.slane %v1812, %v2050
    %v2052 = vlaneseq
    %v2053 = vshrl.u32 %v2052, 7
    %v2054 = vsub.s32 7, %v2053
    %v2055 = vrot.slane %v1813, %v2054
    %v2056 = vlaneseq
    %v2057 = vshrl.u32 %v2056, 7
    %v2058 = vsub.s32 7, %v2057
    %v2059 = vrot.slane %v1814, %v2058
    %v2060 = vlaneseq
    %v2061 = vshrl.u32 %v2060, 7
    %v2062 = vsub.s32 7, %v2061
    %v2063 = vrot.slane %v1815, %v2062
    %v2064 = vmul.f32 %v2051, %v1761
    %v2065 = vmul.f32 %v2055, %v1763
    %v2066 = vmul.f32 %v2059, %v1765
    %v2067 = vmul.f32 %v2063, %v1767
    %v2068 = vpack.c.bf16 %v2064, %v2064
    %v2069 = vpack.c.bf16 %v2065, %v2065
    %v2070 = vpack.c.bf16 %v2066, %v2066
    %v2071 = vpack.c.bf16 %v2067, %v2067
    %v2076 = vrot.slane %v2068, 4
    %v2077 = vrot.slane %v2069, 4
    %v2078 = vrot.slane %v2070, 4
    %v2079 = vrot.slane %v2071, 4
    %2084 = vst [vmem:[#allocation4 + $0x60] sm:$0xf0] %v2076
    %2085 = vst [vmem:[#allocation4 + $0x68] sm:$0xf0] %v2077
    %2086 = vst [vmem:[#allocation4 + $0x70] sm:$0xf0] %v2078
    %2087 = vst [vmem:[#allocation4 + $0x78] sm:$0xf0] %v2079
    %s2088 = smul.u32 4, 64
    %s2089 = smul.u32 %s2088, 4
    %s2090 = sshll.u32 %s2089, 4
    %2091 = dma.done [#allocation7], %s2090
    %v2092 = vld [vmem:[#allocation4] sm:$0xff]
    %v2093 = vld [vmem:[#allocation4 + $0x8] sm:$0xff]
    %v2094 = vld [vmem:[#allocation4 + $0x10] sm:$0xff]
    %v2095 = vld [vmem:[#allocation4 + $0x18] sm:$0xff]
    %v2096 = vld [vmem:[#allocation4 + $0x20] sm:$0xff]
    %v2097 = vld [vmem:[#allocation4 + $0x28] sm:$0xff]
    %v2098 = vld [vmem:[#allocation4 + $0x30] sm:$0xff]
    %v2099 = vld [vmem:[#allocation4 + $0x38] sm:$0xff]
    %v2100 = vld [vmem:[#allocation4 + $0x40] sm:$0xff]
    %v2101 = vld [vmem:[#allocation4 + $0x48] sm:$0xff]
    %v2102 = vld [vmem:[#allocation4 + $0x50] sm:$0xff]
    %v2103 = vld [vmem:[#allocation4 + $0x58] sm:$0xff]
    %v2104 = vld [vmem:[#allocation4 + $0x60] sm:$0xff]
    %v2105 = vld [vmem:[#allocation4 + $0x68] sm:$0xff]
    %v2106 = vld [vmem:[#allocation4 + $0x70] sm:$0xff]
    %v2107 = vld [vmem:[#allocation4 + $0x78] sm:$0xff]
    %v2108 = vld [vmem:[#allocation2] sm:$0xff]
    %v2109 = vld [vmem:[#allocation2 + $0x8] sm:$0xff]
    %v2110 = vld [vmem:[#allocation2 + $0x10] sm:$0xff]
    %v2111 = vld [vmem:[#allocation2 + $0x18] sm:$0xff]
    %v2112 = vld [vmem:[#allocation2 + $0x20] sm:$0xff]
    %v2113 = vld [vmem:[#allocation2 + $0x28] sm:$0xff]
    %v2114 = vld [vmem:[#allocation2 + $0x30] sm:$0xff]
    %v2115 = vld [vmem:[#allocation2 + $0x38] sm:$0xff]
    %v2116 = vld [vmem:[#allocation2 + $0x40] sm:$0xff]
    %v2117 = vld [vmem:[#allocation2 + $0x48] sm:$0xff]
    %v2118 = vld [vmem:[#allocation2 + $0x50] sm:$0xff]
    %v2119 = vld [vmem:[#allocation2 + $0x58] sm:$0xff]
    %v2120 = vld [vmem:[#allocation2 + $0x60] sm:$0xff]
    %v2121 = vld [vmem:[#allocation2 + $0x68] sm:$0xff]
    %v2122 = vld [vmem:[#allocation2 + $0x70] sm:$0xff]
    %v2123 = vld [vmem:[#allocation2 + $0x78] sm:$0xff]
    %v2124 = vld [vmem:[#allocation2 + $0x80] sm:$0xff]
    %v2125 = vld [vmem:[#allocation2 + $0x88] sm:$0xff]
    %v2126 = vld [vmem:[#allocation2 + $0x90] sm:$0xff]
    %v2127 = vld [vmem:[#allocation2 + $0x98] sm:$0xff]
    %v2128 = vld [vmem:[#allocation2 + $0xa0] sm:$0xff]
    %v2129 = vld [vmem:[#allocation2 + $0xa8] sm:$0xff]
    %v2130 = vld [vmem:[#allocation2 + $0xb0] sm:$0xff]
    %v2131 = vld [vmem:[#allocation2 + $0xb8] sm:$0xff]
    %v2132 = vld [vmem:[#allocation2 + $0xc0] sm:$0xff]
    %v2133 = vld [vmem:[#allocation2 + $0xc8] sm:$0xff]
    %v2134 = vld [vmem:[#allocation2 + $0xd0] sm:$0xff]
    %v2135 = vld [vmem:[#allocation2 + $0xd8] sm:$0xff]
    %v2136 = vld [vmem:[#allocation2 + $0xe0] sm:$0xff]
    %v2137 = vld [vmem:[#allocation2 + $0xe8] sm:$0xff]
    %v2138 = vld [vmem:[#allocation2 + $0xf0] sm:$0xff]
    %v2139 = vld [vmem:[#allocation2 + $0xf8] sm:$0xff]
    %v2140 = vld [vmem:[#allocation2 + $0x100] sm:$0xff]
    %v2141 = vld [vmem:[#allocation2 + $0x108] sm:$0xff]
    %v2142 = vld [vmem:[#allocation2 + $0x110] sm:$0xff]
    %v2143 = vld [vmem:[#allocation2 + $0x118] sm:$0xff]
    %v2144 = vld [vmem:[#allocation2 + $0x120] sm:$0xff]
    %v2145 = vld [vmem:[#allocation2 + $0x128] sm:$0xff]
    %v2146 = vld [vmem:[#allocation2 + $0x130] sm:$0xff]
    %v2147 = vld [vmem:[#allocation2 + $0x138] sm:$0xff]
    %v2148 = vld [vmem:[#allocation2 + $0x140] sm:$0xff]
    %v2149 = vld [vmem:[#allocation2 + $0x148] sm:$0xff]
    %v2150 = vld [vmem:[#allocation2 + $0x150] sm:$0xff]
    %v2151 = vld [vmem:[#allocation2 + $0x158] sm:$0xff]
    %v2152 = vld [vmem:[#allocation2 + $0x160] sm:$0xff]
    %v2153 = vld [vmem:[#allocation2 + $0x168] sm:$0xff]
    %v2154 = vld [vmem:[#allocation2 + $0x170] sm:$0xff]
    %v2155 = vld [vmem:[#allocation2 + $0x178] sm:$0xff]
    %v2156 = vld [vmem:[#allocation2 + $0x180] sm:$0xff]
    %v2157 = vld [vmem:[#allocation2 + $0x188] sm:$0xff]
    %v2158 = vld [vmem:[#allocation2 + $0x190] sm:$0xff]
    %v2159 = vld [vmem:[#allocation2 + $0x198] sm:$0xff]
    %v2160 = vld [vmem:[#allocation2 + $0x1a0] sm:$0xff]
    %v2161 = vld [vmem:[#allocation2 + $0x1a8] sm:$0xff]
    %v2162 = vld [vmem:[#allocation2 + $0x1b0] sm:$0xff]
    %v2163 = vld [vmem:[#allocation2 + $0x1b8] sm:$0xff]
    %v2164 = vld [vmem:[#allocation2 + $0x1c0] sm:$0xff]
    %v2165 = vld [vmem:[#allocation2 + $0x1c8] sm:$0xff]
    %v2166 = vld [vmem:[#allocation2 + $0x1d0] sm:$0xff]
    %v2167 = vld [vmem:[#allocation2 + $0x1d8] sm:$0xff]
    %v2168 = vld [vmem:[#allocation2 + $0x1e0] sm:$0xff]
    %v2169 = vld [vmem:[#allocation2 + $0x1e8] sm:$0xff]
    %v2170 = vld [vmem:[#allocation2 + $0x1f0] sm:$0xff]
    %v2171 = vld [vmem:[#allocation2 + $0x1f8] sm:$0xff]
    %v2172 = vld [vmem:[#allocation2 + $0x200] sm:$0xff]
    %v2173 = vld [vmem:[#allocation2 + $0x208] sm:$0xff]
    %v2174 = vld [vmem:[#allocation2 + $0x210] sm:$0xff]
    %v2175 = vld [vmem:[#allocation2 + $0x218] sm:$0xff]
    %v2176 = vld [vmem:[#allocation2 + $0x220] sm:$0xff]
    %v2177 = vld [vmem:[#allocation2 + $0x228] sm:$0xff]
    %v2178 = vld [vmem:[#allocation2 + $0x230] sm:$0xff]
    %v2179 = vld [vmem:[#allocation2 + $0x238] sm:$0xff]
    %v2180 = vld [vmem:[#allocation2 + $0x240] sm:$0xff]
    %v2181 = vld [vmem:[#allocation2 + $0x248] sm:$0xff]
    %v2182 = vld [vmem:[#allocation2 + $0x250] sm:$0xff]
    %v2183 = vld [vmem:[#allocation2 + $0x258] sm:$0xff]
    %v2184 = vld [vmem:[#allocation2 + $0x260] sm:$0xff]
    %v2185 = vld [vmem:[#allocation2 + $0x268] sm:$0xff]
    %v2186 = vld [vmem:[#allocation2 + $0x270] sm:$0xff]
    %v2187 = vld [vmem:[#allocation2 + $0x278] sm:$0xff]
    %v2188 = vld [vmem:[#allocation2 + $0x280] sm:$0xff]
    %v2189 = vld [vmem:[#allocation2 + $0x288] sm:$0xff]
    %v2190 = vld [vmem:[#allocation2 + $0x290] sm:$0xff]
    %v2191 = vld [vmem:[#allocation2 + $0x298] sm:$0xff]
    %v2192 = vld [vmem:[#allocation2 + $0x2a0] sm:$0xff]
    %v2193 = vld [vmem:[#allocation2 + $0x2a8] sm:$0xff]
    %v2194 = vld [vmem:[#allocation2 + $0x2b0] sm:$0xff]
    %v2195 = vld [vmem:[#allocation2 + $0x2b8] sm:$0xff]
    %v2196 = vld [vmem:[#allocation2 + $0x2c0] sm:$0xff]
    %v2197 = vld [vmem:[#allocation2 + $0x2c8] sm:$0xff]
    %v2198 = vld [vmem:[#allocation2 + $0x2d0] sm:$0xff]
    %v2199 = vld [vmem:[#allocation2 + $0x2d8] sm:$0xff]
    %v2200 = vld [vmem:[#allocation2 + $0x2e0] sm:$0xff]
    %v2201 = vld [vmem:[#allocation2 + $0x2e8] sm:$0xff]
    %v2202 = vld [vmem:[#allocation2 + $0x2f0] sm:$0xff]
    %v2203 = vld [vmem:[#allocation2 + $0x2f8] sm:$0xff]
    %v2204 = vld [vmem:[#allocation2 + $0x300] sm:$0xff]
    %v2205 = vld [vmem:[#allocation2 + $0x308] sm:$0xff]
    %v2206 = vld [vmem:[#allocation2 + $0x310] sm:$0xff]
    %v2207 = vld [vmem:[#allocation2 + $0x318] sm:$0xff]
    %v2208 = vld [vmem:[#allocation2 + $0x320] sm:$0xff]
    %v2209 = vld [vmem:[#allocation2 + $0x328] sm:$0xff]
    %v2210 = vld [vmem:[#allocation2 + $0x330] sm:$0xff]
    %v2211 = vld [vmem:[#allocation2 + $0x338] sm:$0xff]
    %v2212 = vld [vmem:[#allocation2 + $0x340] sm:$0xff]
    %v2213 = vld [vmem:[#allocation2 + $0x348] sm:$0xff]
    %v2214 = vld [vmem:[#allocation2 + $0x350] sm:$0xff]
    %v2215 = vld [vmem:[#allocation2 + $0x358] sm:$0xff]
    %v2216 = vld [vmem:[#allocation2 + $0x360] sm:$0xff]
    %v2217 = vld [vmem:[#allocation2 + $0x368] sm:$0xff]
    %v2218 = vld [vmem:[#allocation2 + $0x370] sm:$0xff]
    %v2219 = vld [vmem:[#allocation2 + $0x378] sm:$0xff]
    %v2220 = vld [vmem:[#allocation2 + $0x380] sm:$0xff]
    %v2221 = vld [vmem:[#allocation2 + $0x388] sm:$0xff]
    %v2222 = vld [vmem:[#allocation2 + $0x390] sm:$0xff]
    %v2223 = vld [vmem:[#allocation2 + $0x398] sm:$0xff]
    %v2224 = vld [vmem:[#allocation2 + $0x3a0] sm:$0xff]
    %v2225 = vld [vmem:[#allocation2 + $0x3a8] sm:$0xff]
    %v2226 = vld [vmem:[#allocation2 + $0x3b0] sm:$0xff]
    %v2227 = vld [vmem:[#allocation2 + $0x3b8] sm:$0xff]
    %v2228 = vld [vmem:[#allocation2 + $0x3c0] sm:$0xff]
    %v2229 = vld [vmem:[#allocation2 + $0x3c8] sm:$0xff]
    %v2230 = vld [vmem:[#allocation2 + $0x3d0] sm:$0xff]
    %v2231 = vld [vmem:[#allocation2 + $0x3d8] sm:$0xff]
    %v2232 = vld [vmem:[#allocation2 + $0x3e0] sm:$0xff]
    %v2233 = vld [vmem:[#allocation2 + $0x3e8] sm:$0xff]
    %v2234 = vld [vmem:[#allocation2 + $0x3f0] sm:$0xff]
    %v2235 = vld [vmem:[#allocation2 + $0x3f8] sm:$0xff]
    %v2236 = vld [vmem:[%s4] sm:$0xf]
    %v2238 = vlaneseq
    %v2239 = vshrl.u32 %v2238, 7
    %v2240 = vsub.s32 0, %v2239
    %v2241 = vrot.slane %v2236, %v2240
    %v2242 = vlaneseq
    %v2243 = vshrl.u32 %v2242, 7
    %v2244 = vsub.s32 1, %v2243
    %v2245 = vrot.slane %v2236, %v2244
    %v2246 = vlaneseq
    %v2247 = vshrl.u32 %v2246, 7
    %v2248 = vsub.s32 2, %v2247
    %v2249 = vrot.slane %v2236, %v2248
    %v2250 = vlaneseq
    %v2251 = vshrl.u32 %v2250, 7
    %v2252 = vsub.s32 3, %v2251
    %v2253 = vrot.slane %v2236, %v2252
    %2258 = vmatprep.subr.bf16.mxu0 %v2109
    %2259 = vmatpush1.bf16.msra.mxu0 %v2108
    %2260 = vmatprep.subr.bf16.mxu0 %v2113
    %2261 = vmatpush1.bf16.msra.mxu0 %v2112
    %2262 = vmatprep.subr.bf16.mxu0 %v2117
    %2263 = vmatpush1.bf16.msra.mxu0 %v2116
    %2264 = vmatprep.subr.bf16.mxu0 %v2121
    %2265 = vmatpush1.bf16.msra.mxu0 %v2120
    %2266 = vmatprep.subr.bf16.mxu0 %v2125
    %2267 = vmatpush1.bf16.msra.mxu0 %v2124
    %2268 = vmatprep.subr.bf16.mxu0 %v2129
    %2269 = vmatpush1.bf16.msra.mxu0 %v2128
    %2270 = vmatprep.subr.bf16.mxu0 %v2133
    %2271 = vmatpush1.bf16.msra.mxu0 %v2132
    %2272 = vmatprep.subr.bf16.mxu0 %v2137
    %2273 = vmatpush1.bf16.msra.mxu0 %v2136
    %2274 = vmatprep.subr.bf16.mxu0 %v2141
    %2275 = vmatpush1.bf16.msra.mxu0 %v2140
    %2276 = vmatprep.subr.bf16.mxu0 %v2145
    %2277 = vmatpush1.bf16.msra.mxu0 %v2144
    %2278 = vmatprep.subr.bf16.mxu0 %v2149
    %2279 = vmatpush1.bf16.msra.mxu0 %v2148
    %2280 = vmatprep.subr.bf16.mxu0 %v2153
    %2281 = vmatpush1.bf16.msra.mxu0 %v2152
    %2282 = vmatprep.subr.bf16.mxu0 %v2157
    %2283 = vmatpush1.bf16.msra.mxu0 %v2156
    %2284 = vmatprep.subr.bf16.mxu0 %v2161
    %2285 = vmatpush1.bf16.msra.mxu0 %v2160
    %2286 = vmatprep.subr.bf16.mxu0 %v2165
    %2287 = vmatpush1.bf16.msra.mxu0 %v2164
    %2288 = vmatprep.subr.bf16.mxu0 %v2169
    %2289 = vmatpush1.bf16.msra.mxu0 %v2168
    %2290 = vmatprep.mubr.bf16.mxu0 %v2093
    %2291 = vmatmul.mubr.bf16.gmra.mrb[0].mxu0 %v2092
    %v2292 = vpop.f32.mrb[0].mxu0
    %v2293 = vadd.f32 %v2241, %v2292
    %v2294 = vpop.f32.mrb[0].mxu0
    %v2295 = vadd.f32 %v2245, %v2294
    %v2296 = vpop.f32.mrb[0].mxu0
    %v2297 = vadd.f32 %v2241, %v2296
    %v2298 = vpop.f32.mrb[0].mxu0
    %v2299 = vadd.f32 %v2245, %v2298
    %2300 = vmatprep.mubr.bf16.mxu0 %v2097
    %2301 = vmatmul.mubr.bf16.gmra.mrb[0].mxu0 %v2096
    %v2302 = vpop.f32.mrb[0].mxu0
    %v2303 = vadd.f32 %v2241, %v2302
    %v2304 = vpop.f32.mrb[0].mxu0
    %v2305 = vadd.f32 %v2245, %v2304
    %v2306 = vpop.f32.mrb[0].mxu0
    %v2307 = vadd.f32 %v2241, %v2306
    %v2308 = vpop.f32.mrb[0].mxu0
    %v2309 = vadd.f32 %v2245, %v2308
    %2310 = vmatprep.mubr.bf16.mxu0 %v2101
    %2311 = vmatmul.mubr.bf16.gmra.mrb[0].mxu0 %v2100
    %v2312 = vpop.f32.mrb[0].mxu0
    %v2313 = vadd.f32 %v2241, %v2312
    %v2314 = vpop.f32.mrb[0].mxu0
    %v2315 = vadd.f32 %v2245, %v2314
    %v2316 = vpop.f32.mrb[0].mxu0
    %v2317 = vadd.f32 %v2241, %v2316
    %v2318 = vpop.f32.mrb[0].mxu0
    %v2319 = vadd.f32 %v2245, %v2318
    %2320 = vmatprep.mubr.bf16.mxu0 %v2105
    %2321 = vmatmul.mubr.bf16.gmra.mrb[0].mxu0 %v2104
    %v2322 = vpop.f32.mrb[0].mxu0
    %v2323 = vadd.f32 %v2241, %v2322
    %v2324 = vpop.f32.mrb[0].mxu0
    %v2325 = vadd.f32 %v2245, %v2324
    %v2326 = vpop.f32.mrb[0].mxu0
    %v2327 = vadd.f32 %v2241, %v2326
    %v2328 = vpop.f32.mrb[0].mxu0
    %v2329 = vadd.f32 %v2245, %v2328
    %2330 = vdwg.mxu0
    %2331 = vmatprep.subr.bf16.mxu0 %v2173
    %2332 = vmatpush1.bf16.msra.mxu0 %v2172
    %2333 = vmatprep.subr.bf16.mxu0 %v2177
    %2334 = vmatpush1.bf16.msra.mxu0 %v2176
    %2335 = vmatprep.subr.bf16.mxu0 %v2181
    %2336 = vmatpush1.bf16.msra.mxu0 %v2180
    %2337 = vmatprep.subr.bf16.mxu0 %v2185
    %2338 = vmatpush1.bf16.msra.mxu0 %v2184
    %2339 = vmatprep.subr.bf16.mxu0 %v2189
    %2340 = vmatpush1.bf16.msra.mxu0 %v2188
    %2341 = vmatprep.subr.bf16.mxu0 %v2193
    %2342 = vmatpush1.bf16.msra.mxu0 %v2192
    %2343 = vmatprep.subr.bf16.mxu0 %v2197
    %2344 = vmatpush1.bf16.msra.mxu0 %v2196
    %2345 = vmatprep.subr.bf16.mxu0 %v2201
    %2346 = vmatpush1.bf16.msra.mxu0 %v2200
    %2347 = vmatprep.subr.bf16.mxu0 %v2205
    %2348 = vmatpush1.bf16.msra.mxu0 %v2204
    %2349 = vmatprep.subr.bf16.mxu0 %v2209
    %2350 = vmatpush1.bf16.msra.mxu0 %v2208
    %2351 = vmatprep.subr.bf16.mxu0 %v2213
    %2352 = vmatpush1.bf16.msra.mxu0 %v2212
    %2353 = vmatprep.subr.bf16.mxu0 %v2217
    %2354 = vmatpush1.bf16.msra.mxu0 %v2216
    %2355 = vmatprep.subr.bf16.mxu0 %v2221
    %2356 = vmatpush1.bf16.msra.mxu0 %v2220
    %2357 = vmatprep.subr.bf16.mxu0 %v2225
    %2358 = vmatpush1.bf16.msra.mxu0 %v2224
    %2359 = vmatprep.subr.bf16.mxu0 %v2229
    %2360 = vmatpush1.bf16.msra.mxu0 %v2228
    %2361 = vmatprep.subr.bf16.mxu0 %v2233
    %2362 = vmatpush1.bf16.msra.mxu0 %v2232
    %2363 = vmatprep.mubr.bf16.mxu0 %v2095
    %2364 = vmatmul.mubr.bf16.gmra.mrb[0].mxu0 %v2094
    %v2365 = vpop.f32.mrb[0].mxu0
    %v2366 = vadd.f32 %v2293, %v2365
    %v2367 = vpop.f32.mrb[0].mxu0
    %v2368 = vadd.f32 %v2295, %v2367
    %v2369 = vpop.f32.mrb[0].mxu0
    %v2370 = vadd.f32 %v2297, %v2369
    %v2371 = vpop.f32.mrb[0].mxu0
    %v2372 = vadd.f32 %v2299, %v2371
    %2373 = vmatprep.mubr.bf16.mxu0 %v2099
    %2374 = vmatmul.mubr.bf16.gmra.mrb[0].mxu0 %v2098
    %v2375 = vpop.f32.mrb[0].mxu0
    %v2376 = vadd.f32 %v2303, %v2375
    %v2377 = vpop.f32.mrb[0].mxu0
    %v2378 = vadd.f32 %v2305, %v2377
    %v2379 = vpop.f32.mrb[0].mxu0
    %v2380 = vadd.f32 %v2307, %v2379
    %v2381 = vpop.f32.mrb[0].mxu0
    %v2382 = vadd.f32 %v2309, %v2381
    %2383 = vmatprep.mubr.bf16.mxu0 %v2103
    %2384 = vmatmul.mubr.bf16.gmra.mrb[0].mxu0 %v2102
    %v2385 = vpop.f32.mrb[0].mxu0
    %v2386 = vadd.f32 %v2313, %v2385
    %v2387 = vpop.f32.mrb[0].mxu0
    %v2388 = vadd.f32 %v2315, %v2387
    %v2389 = vpop.f32.mrb[0].mxu0
    %v2390 = vadd.f32 %v2317, %v2389
    %v2391 = vpop.f32.mrb[0].mxu0
    %v2392 = vadd.f32 %v2319, %v2391
    %2393 = vmatprep.mubr.bf16.mxu0 %v2107
    %2394 = vmatmul.mubr.bf16.gmra.mrb[0].mxu0 %v2106
    %v2395 = vpop.f32.mrb[0].mxu0
    %v2396 = vadd.f32 %v2323, %v2395
    %v2397 = vpop.f32.mrb[0].mxu0
    %v2398 = vadd.f32 %v2325, %v2397
    %v2399 = vpop.f32.mrb[0].mxu0
    %v2400 = vadd.f32 %v2327, %v2399
    %v2401 = vpop.f32.mrb[0].mxu0
    %v2402 = vadd.f32 %v2329, %v2401
    %2403 = vdwg.mxu0
    %2404 = vmatprep.subr.bf16.mxu0 %v2111
    %2405 = vmatpush1.bf16.msra.mxu0 %v2110
    %2406 = vmatprep.subr.bf16.mxu0 %v2115
    %2407 = vmatpush1.bf16.msra.mxu0 %v2114
    %2408 = vmatprep.subr.bf16.mxu0 %v2119
    %2409 = vmatpush1.bf16.msra.mxu0 %v2118
    %2410 = vmatprep.subr.bf16.mxu0 %v2123
    %2411 = vmatpush1.bf16.msra.mxu0 %v2122
    %2412 = vmatprep.subr.bf16.mxu0 %v2127
    %2413 = vmatpush1.bf16.msra.mxu0 %v2126
    %2414 = vmatprep.subr.bf16.mxu0 %v2131
    %2415 = vmatpush1.bf16.msra.mxu0 %v2130
    %2416 = vmatprep.subr.bf16.mxu0 %v2135
    %2417 = vmatpush1.bf16.msra.mxu0 %v2134
    %2418 = vmatprep.subr.bf16.mxu0 %v2139
    %2419 = vmatpush1.bf16.msra.mxu0 %v2138
    %2420 = vmatprep.subr.bf16.mxu0 %v2143
    %2421 = vmatpush1.bf16.msra.mxu0 %v2142
    %2422 = vmatprep.subr.bf16.mxu0 %v2147
    %2423 = vmatpush1.bf16.msra.mxu0 %v2146
    %2424 = vmatprep.subr.bf16.mxu0 %v2151
    %2425 = vmatpush1.bf16.msra.mxu0 %v2150
    %2426 = vmatprep.subr.bf16.mxu0 %v2155
    %2427 = vmatpush1.bf16.msra.mxu0 %v2154
    %2428 = vmatprep.subr.bf16.mxu0 %v2159
    %2429 = vmatpush1.bf16.msra.mxu0 %v2158
    %2430 = vmatprep.subr.bf16.mxu0 %v2163
    %2431 = vmatpush1.bf16.msra.mxu0 %v2162
    %2432 = vmatprep.subr.bf16.mxu0 %v2167
    %2433 = vmatpush1.bf16.msra.mxu0 %v2166
    %2434 = vmatprep.subr.bf16.mxu0 %v2171
    %2435 = vmatpush1.bf16.msra.mxu0 %v2170
    %2436 = vmatprep.mubr.bf16.mxu0 %v2093
    %2437 = vmatmul.mubr.bf16.gmra.mrb[0].mxu0 %v2092
    %v2438 = vpop.f32.mrb[0].mxu0
    %v2439 = vadd.f32 %v2249, %v2438
    %v2440 = vpop.f32.mrb[0].mxu0
    %v2441 = vadd.f32 %v2253, %v2440
    %v2442 = vpop.f32.mrb[0].mxu0
    %v2443 = vadd.f32 %v2249, %v2442
    %v2444 = vpop.f32.mrb[0].mxu0
    %v2445 = vadd.f32 %v2253, %v2444
    %2446 = vmatprep.mubr.bf16.mxu0 %v2097
    %2447 = vmatmul.mubr.bf16.gmra.mrb[0].mxu0 %v2096
    %v2448 = vpop.f32.mrb[0].mxu0
    %v2449 = vadd.f32 %v2249, %v2448
    %v2450 = vpop.f32.mrb[0].mxu0
    %v2451 = vadd.f32 %v2253, %v2450
    %v2452 = vpop.f32.mrb[0].mxu0
    %v2453 = vadd.f32 %v2249, %v2452
    %v2454 = vpop.f32.mrb[0].mxu0
    %v2455 = vadd.f32 %v2253, %v2454
    %2456 = vmatprep.mubr.bf16.mxu0 %v2101
    %2457 = vmatmul.mubr.bf16.gmra.mrb[0].mxu0 %v2100
    %v2458 = vpop.f32.mrb[0].mxu0
    %v2459 = vadd.f32 %v2249, %v2458
    %v2460 = vpop.f32.mrb[0].mxu0
    %v2461 = vadd.f32 %v2253, %v2460
    %v2462 = vpop.f32.mrb[0].mxu0
    %v2463 = vadd.f32 %v2249, %v2462
    %v2464 = vpop.f32.mrb[0].mxu0
    %v2465 = vadd.f32 %v2253, %v2464
    %2466 = vmatprep.mubr.bf16.mxu0 %v2105
    %2467 = vmatmul.mubr.bf16.gmra.mrb[0].mxu0 %v2104
    %v2468 = vpop.f32.mrb[0].mxu0
    %v2469 = vadd.f32 %v2249, %v2468
    %v2470 = vpop.f32.mrb[0].mxu0
    %v2471 = vadd.f32 %v2253, %v2470
    %v2472 = vpop.f32.mrb[0].mxu0
    %v2473 = vadd.f32 %v2249, %v2472
    %v2474 = vpop.f32.mrb[0].mxu0
    %v2475 = vadd.f32 %v2253, %v2474
    %2476 = vdwg.mxu0
    %2477 = vmatprep.subr.bf16.mxu0 %v2175
    %2478 = vmatpush1.bf16.msra.mxu0 %v2174
    %2479 = vmatprep.subr.bf16.mxu0 %v2179
    %2480 = vmatpush1.bf16.msra.mxu0 %v2178
    %2481 = vmatprep.subr.bf16.mxu0 %v2183
    %2482 = vmatpush1.bf16.msra.mxu0 %v2182
    %2483 = vmatprep.subr.bf16.mxu0 %v2187
    %2484 = vmatpush1.bf16.msra.mxu0 %v2186
    %2485 = vmatprep.subr.bf16.mxu0 %v2191
    %2486 = vmatpush1.bf16.msra.mxu0 %v2190
    %2487 = vmatprep.subr.bf16.mxu0 %v2195
    %2488 = vmatpush1.bf16.msra.mxu0 %v2194
    %2489 = vmatprep.subr.bf16.mxu0 %v2199
    %2490 = vmatpush1.bf16.msra.mxu0 %v2198
    %2491 = vmatprep.subr.bf16.mxu0 %v2203
    %2492 = vmatpush1.bf16.msra.mxu0 %v2202
    %2493 = vmatprep.subr.bf16.mxu0 %v2207
    %2494 = vmatpush1.bf16.msra.mxu0 %v2206
    %2495 = vmatprep.subr.bf16.mxu0 %v2211
    %2496 = vmatpush1.bf16.msra.mxu0 %v2210
    %2497 = vmatprep.subr.bf16.mxu0 %v2215
    %2498 = vmatpush1.bf16.msra.mxu0 %v2214
    %2499 = vmatprep.subr.bf16.mxu0 %v2219
    %2500 = vmatpush1.bf16.msra.mxu0 %v2218
    %2501 = vmatprep.subr.bf16.mxu0 %v2223
    %2502 = vmatpush1.bf16.msra.mxu0 %v2222
    %2503 = vmatprep.subr.bf16.mxu0 %v2227
    %2504 = vmatpush1.bf16.msra.mxu0 %v2226
    %2505 = vmatprep.subr.bf16.mxu0 %v2231
    %2506 = vmatpush1.bf16.msra.mxu0 %v2230
    %2507 = vmatprep.subr.bf16.mxu0 %v2235
    %2508 = vmatpush1.bf16.msra.mxu0 %v2234
    %2509 = vmatprep.mubr.bf16.mxu0 %v2095
    %2510 = vmatmul.mubr.bf16.gmra.mrb[0].mxu0 %v2094
    %v2511 = vpop.f32.mrb[0].mxu0
    %v2512 = vadd.f32 %v2439, %v2511
    %v2513 = vpop.f32.mrb[0].mxu0
    %v2514 = vadd.f32 %v2441, %v2513
    %v2515 = vpop.f32.mrb[0].mxu0
    %v2516 = vadd.f32 %v2443, %v2515
    %v2517 = vpop.f32.mrb[0].mxu0
    %v2518 = vadd.f32 %v2445, %v2517
    %2519 = vmatprep.mubr.bf16.mxu0 %v2099
    %2520 = vmatmul.mubr.bf16.gmra.mrb[0].mxu0 %v2098
    %v2521 = vpop.f32.mrb[0].mxu0
    %v2522 = vadd.f32 %v2449, %v2521
    %v2523 = vpop.f32.mrb[0].mxu0
    %v2524 = vadd.f32 %v2451, %v2523
    %v2525 = vpop.f32.mrb[0].mxu0
    %v2526 = vadd.f32 %v2453, %v2525
    %v2527 = vpop.f32.mrb[0].mxu0
    %v2528 = vadd.f32 %v2455, %v2527
    %2529 = vmatprep.mubr.bf16.mxu0 %v2103
    %2530 = vmatmul.mubr.bf16.gmra.mrb[0].mxu0 %v2102
    %v2531 = vpop.f32.mrb[0].mxu0
    %v2532 = vadd.f32 %v2459, %v2531
    %v2533 = vpop.f32.mrb[0].mxu0
    %v2534 = vadd.f32 %v2461, %v2533
    %v2535 = vpop.f32.mrb[0].mxu0
    %v2536 = vadd.f32 %v2463, %v2535
    %v2537 = vpop.f32.mrb[0].mxu0
    %v2538 = vadd.f32 %v2465, %v2537
    %2539 = vmatprep.mubr.bf16.mxu0 %v2107
    %2540 = vmatmul.mubr.bf16.gmra.mrb[0].mxu0 %v2106
    %v2541 = vpop.f32.mrb[0].mxu0
    %v2542 = vadd.f32 %v2469, %v2541
    %v2543 = vpop.f32.mrb[0].mxu0
    %v2544 = vadd.f32 %v2471, %v2543
    %v2545 = vpop.f32.mrb[0].mxu0
    %v2546 = vadd.f32 %v2473, %v2545
    %v2547 = vpop.f32.mrb[0].mxu0
    %v2548 = vadd.f32 %v2475, %v2547
    %2549 = vdwg.mxu0
    %2550 = vst [vmem:[#allocation5] sm:$0xff] %v2366
    %2551 = vst [vmem:[#allocation5 + $0x8] sm:$0xff] %v2368
    %2552 = vst [vmem:[#allocation5 + $0x10] sm:$0xff] %v2512
    %2553 = vst [vmem:[#allocation5 + $0x18] sm:$0xff] %v2514
    %2554 = vst [vmem:[#allocation5 + $0x20] sm:$0xff] %v2370
    %2555 = vst [vmem:[#allocation5 + $0x28] sm:$0xff] %v2372
    %2556 = vst [vmem:[#allocation5 + $0x30] sm:$0xff] %v2516
    %2557 = vst [vmem:[#allocation5 + $0x38] sm:$0xff] %v2518
    %2558 = vst [vmem:[#allocation5 + $0x40] sm:$0xff] %v2376
    %2559 = vst [vmem:[#allocation5 + $0x48] sm:$0xff] %v2378
    %2560 = vst [vmem:[#allocation5 + $0x50] sm:$0xff] %v2522
    %2561 = vst [vmem:[#allocation5 + $0x58] sm:$0xff] %v2524
    %2562 = vst [vmem:[#allocation5 + $0x60] sm:$0xff] %v2380
    %2563 = vst [vmem:[#allocation5 + $0x68] sm:$0xff] %v2382
    %2564 = vst [vmem:[#allocation5 + $0x70] sm:$0xff] %v2526
    %2565 = vst [vmem:[#allocation5 + $0x78] sm:$0xff] %v2528
    %2566 = vst [vmem:[#allocation5 + $0x80] sm:$0xff] %v2386
    %2567 = vst [vmem:[#allocation5 + $0x88] sm:$0xff] %v2388
    %2568 = vst [vmem:[#allocation5 + $0x90] sm:$0xff] %v2532
    %2569 = vst [vmem:[#allocation5 + $0x98] sm:$0xff] %v2534
    %2570 = vst [vmem:[#allocation5 + $0xa0] sm:$0xff] %v2390
    %2571 = vst [vmem:[#allocation5 + $0xa8] sm:$0xff] %v2392
    %2572 = vst [vmem:[#allocation5 + $0xb0] sm:$0xff] %v2536
    %2573 = vst [vmem:[#allocation5 + $0xb8] sm:$0xff] %v2538
    %2574 = vst [vmem:[#allocation5 + $0xc0] sm:$0xff] %v2396
    %2575 = vst [vmem:[#allocation5 + $0xc8] sm:$0xff] %v2398
    %2576 = vst [vmem:[#allocation5 + $0xd0] sm:$0xff] %v2542
    %2577 = vst [vmem:[#allocation5 + $0xd8] sm:$0xff] %v2544
    %2578 = vst [vmem:[#allocation5 + $0xe0] sm:$0xff] %v2400
    %2579 = vst [vmem:[#allocation5 + $0xe8] sm:$0xff] %v2402
    %2580 = vst [vmem:[#allocation5 + $0xf0] sm:$0xff] %v2546
    %2581 = vst [vmem:[#allocation5 + $0xf8] sm:$0xff] %v2548
    %v2582 = vld [vmem:[#allocation5] sm:$0xff]
    %v2583 = vld [vmem:[#allocation5 + $0x8] sm:$0xff]
    %v2584 = vld [vmem:[#allocation5 + $0x10] sm:$0xff]
    %v2585 = vld [vmem:[#allocation5 + $0x18] sm:$0xff]
    %v2586 = vadd.f32 %v2582, 0.0
    %v2587 = vadd.f32 %v2583, 0.0
    %v2588 = vadd.f32 %v2584, 0.0
    %v2589 = vadd.f32 %v2585, 0.0
    %vm2590 = vcmp.gt.f32.partialorder %v2586, 1.0
    %vm2591 = vcmp.gt.f32.partialorder %v2587, 1.0
    %vm2592 = vcmp.gt.f32.partialorder %v2588, 1.0
    %vm2593 = vcmp.gt.f32.partialorder %v2589, 1.0
    %v2594 = vsel %vm2590, 1.0, 0.0
    %v2595 = vsel %vm2591, 1.0, 0.0
    %v2596 = vsel %vm2592, 1.0, 0.0
    %v2597 = vsel %vm2593, 1.0, 0.0
    %v2598 = vmul.f32 %v1773, 0.0
    %v2599 = vmul.f32 %v1777, 0.0
    %v2600 = vmul.f32 %v1781, 0.0
    %v2601 = vmul.f32 %v1785, 0.0
    %v2602 = vmul.f32 %v1795, 0.0
    %v2603 = vmul.f32 %v1799, 0.0
    %v2604 = vmul.f32 %v1803, 0.0
    %v2605 = vmul.f32 %v1807, 0.0
    %v2606 = vadd.f32 %v2598, %v2602
    %v2607 = vadd.f32 %v2599, %v2603
    %v2608 = vadd.f32 %v2600, %v2604
    %v2609 = vadd.f32 %v2601, %v2605
    %v2610 = vadd.f32 %v2606, %v2594
    %v2611 = vadd.f32 %v2607, %v2595
    %v2612 = vadd.f32 %v2608, %v2596
    %v2613 = vadd.f32 %v2609, %v2597
    %v2614 = vpack.c.bf16 %v2610, %v2610
    %v2615 = vpack.c.bf16 %v2611, %v2611
    %v2616 = vpack.c.bf16 %v2612, %v2612
    %v2617 = vpack.c.bf16 %v2613, %v2613
    %2618 = vst [vmem:[#allocation6] sm:$0xf] %v2614
    %2619 = vst [vmem:[#allocation6 + $0x8] sm:$0xf] %v2615
    %2620 = vst [vmem:[#allocation6 + $0x10] sm:$0xf] %v2616
    %2621 = vst [vmem:[#allocation6 + $0x18] sm:$0xf] %v2617
    %v2622 = vld [vmem:[#allocation5 + $0x20] sm:$0xff]
    %v2623 = vld [vmem:[#allocation5 + $0x28] sm:$0xff]
    %v2624 = vld [vmem:[#allocation5 + $0x30] sm:$0xff]
    %v2625 = vld [vmem:[#allocation5 + $0x38] sm:$0xff]
    %v2626 = vsub.f32 1.0, %v2594
    %v2627 = vsub.f32 1.0, %v2595
    %v2628 = vsub.f32 1.0, %v2596
    %v2629 = vsub.f32 1.0, %v2597
    %v2630 = vmul.f32 %v2626, 0.7788008
    %v2631 = vmul.f32 %v2627, 0.7788008
    %v2632 = vmul.f32 %v2628, 0.7788008
    %v2633 = vmul.f32 %v2629, 0.7788008
    %v2634 = vmul.f32 %v2586, %v2630
    %v2635 = vmul.f32 %v2587, %v2631
    %v2636 = vmul.f32 %v2588, %v2632
    %v2637 = vmul.f32 %v2589, %v2633
    %v2638 = vadd.f32 %v2634, %v2622
    %v2639 = vadd.f32 %v2635, %v2623
    %v2640 = vadd.f32 %v2636, %v2624
    %v2641 = vadd.f32 %v2637, %v2625
    %vm2642 = vcmp.gt.f32.partialorder %v2638, 1.0
    %vm2643 = vcmp.gt.f32.partialorder %v2639, 1.0
    %vm2644 = vcmp.gt.f32.partialorder %v2640, 1.0
    %vm2645 = vcmp.gt.f32.partialorder %v2641, 1.0
    %v2646 = vsel %vm2642, 1.0, 0.0
    %v2647 = vsel %vm2643, 1.0, 0.0
    %v2648 = vsel %vm2644, 1.0, 0.0
    %v2649 = vsel %vm2645, 1.0, 0.0
    %v2650 = vmul.f32 %v1773, %v2610
    %v2651 = vmul.f32 %v1777, %v2611
    %v2652 = vmul.f32 %v1781, %v2612
    %v2653 = vmul.f32 %v1785, %v2613
    %v2654 = vadd.f32 %v2650, %v2602
    %v2655 = vadd.f32 %v2651, %v2603
    %v2656 = vadd.f32 %v2652, %v2604
    %v2657 = vadd.f32 %v2653, %v2605
    %v2658 = vadd.f32 %v2654, %v2646
    %v2659 = vadd.f32 %v2655, %v2647
    %v2660 = vadd.f32 %v2656, %v2648
    %v2661 = vadd.f32 %v2657, %v2649
    %v2662 = vpack.c.bf16 %v2658, %v2658
    %v2663 = vpack.c.bf16 %v2659, %v2659
    %v2664 = vpack.c.bf16 %v2660, %v2660
    %v2665 = vpack.c.bf16 %v2661, %v2661
    %v2670 = vrot.slane %v2662, 4
    %v2671 = vrot.slane %v2663, 4
    %v2672 = vrot.slane %v2664, 4
    %v2673 = vrot.slane %v2665, 4
    %2678 = vst [vmem:[#allocation6] sm:$0xf0] %v2670
    %2679 = vst [vmem:[#allocation6 + $0x8] sm:$0xf0] %v2671
    %2680 = vst [vmem:[#allocation6 + $0x10] sm:$0xf0] %v2672
    %2681 = vst [vmem:[#allocation6 + $0x18] sm:$0xf0] %v2673
    %v2682 = vld [vmem:[#allocation5 + $0x40] sm:$0xff]
    %v2683 = vld [vmem:[#allocation5 + $0x48] sm:$0xff]
    %v2684 = vld [vmem:[#allocation5 + $0x50] sm:$0xff]
    %v2685 = vld [vmem:[#allocation5 + $0x58] sm:$0xff]
    %v2686 = vsub.f32 1.0, %v2646
    %v2687 = vsub.f32 1.0, %v2647
    %v2688 = vsub.f32 1.0, %v2648
    %v2689 = vsub.f32 1.0, %v2649
    %v2690 = vmul.f32 %v2686, 0.7788008
    %v2691 = vmul.f32 %v2687, 0.7788008
    %v2692 = vmul.f32 %v2688, 0.7788008
    %v2693 = vmul.f32 %v2689, 0.7788008
    %v2694 = vmul.f32 %v2638, %v2690
    %v2695 = vmul.f32 %v2639, %v2691
    %v2696 = vmul.f32 %v2640, %v2692
    %v2697 = vmul.f32 %v2641, %v2693
    %v2698 = vadd.f32 %v2694, %v2682
    %v2699 = vadd.f32 %v2695, %v2683
    %v2700 = vadd.f32 %v2696, %v2684
    %v2701 = vadd.f32 %v2697, %v2685
    %vm2702 = vcmp.gt.f32.partialorder %v2698, 1.0
    %vm2703 = vcmp.gt.f32.partialorder %v2699, 1.0
    %vm2704 = vcmp.gt.f32.partialorder %v2700, 1.0
    %vm2705 = vcmp.gt.f32.partialorder %v2701, 1.0
    %v2706 = vsel %vm2702, 1.0, 0.0
    %v2707 = vsel %vm2703, 1.0, 0.0
    %v2708 = vsel %vm2704, 1.0, 0.0
    %v2709 = vsel %vm2705, 1.0, 0.0
    %v2710 = vmul.f32 %v1773, %v2658
    %v2711 = vmul.f32 %v1777, %v2659
    %v2712 = vmul.f32 %v1781, %v2660
    %v2713 = vmul.f32 %v1785, %v2661
    %v2714 = vmul.f32 %v1795, %v2610
    %v2715 = vmul.f32 %v1799, %v2611
    %v2716 = vmul.f32 %v1803, %v2612
    %v2717 = vmul.f32 %v1807, %v2613
    %v2718 = vadd.f32 %v2710, %v2714
    %v2719 = vadd.f32 %v2711, %v2715
    %v2720 = vadd.f32 %v2712, %v2716
    %v2721 = vadd.f32 %v2713, %v2717
    %v2722 = vadd.f32 %v2718, %v2706
    %v2723 = vadd.f32 %v2719, %v2707
    %v2724 = vadd.f32 %v2720, %v2708
    %v2725 = vadd.f32 %v2721, %v2709
    %v2726 = vpack.c.bf16 %v2722, %v2722
    %v2727 = vpack.c.bf16 %v2723, %v2723
    %v2728 = vpack.c.bf16 %v2724, %v2724
    %v2729 = vpack.c.bf16 %v2725, %v2725
    %2730 = vst [vmem:[#allocation6 + $0x20] sm:$0xf] %v2726
    %2731 = vst [vmem:[#allocation6 + $0x28] sm:$0xf] %v2727
    %2732 = vst [vmem:[#allocation6 + $0x30] sm:$0xf] %v2728
    %2733 = vst [vmem:[#allocation6 + $0x38] sm:$0xf] %v2729
    %v2734 = vld [vmem:[#allocation5 + $0x60] sm:$0xff]
    %v2735 = vld [vmem:[#allocation5 + $0x68] sm:$0xff]
    %v2736 = vld [vmem:[#allocation5 + $0x70] sm:$0xff]
    %v2737 = vld [vmem:[#allocation5 + $0x78] sm:$0xff]
    %v2738 = vsub.f32 1.0, %v2706
    %v2739 = vsub.f32 1.0, %v2707
    %v2740 = vsub.f32 1.0, %v2708
    %v2741 = vsub.f32 1.0, %v2709
    %v2742 = vmul.f32 %v2738, 0.7788008
    %v2743 = vmul.f32 %v2739, 0.7788008
    %v2744 = vmul.f32 %v2740, 0.7788008
    %v2745 = vmul.f32 %v2741, 0.7788008
    %v2746 = vmul.f32 %v2698, %v2742
    %v2747 = vmul.f32 %v2699, %v2743
    %v2748 = vmul.f32 %v2700, %v2744
    %v2749 = vmul.f32 %v2701, %v2745
    %v2750 = vadd.f32 %v2746, %v2734
    %v2751 = vadd.f32 %v2747, %v2735
    %v2752 = vadd.f32 %v2748, %v2736
    %v2753 = vadd.f32 %v2749, %v2737
    %vm2754 = vcmp.gt.f32.partialorder %v2750, 1.0
    %vm2755 = vcmp.gt.f32.partialorder %v2751, 1.0
    %vm2756 = vcmp.gt.f32.partialorder %v2752, 1.0
    %vm2757 = vcmp.gt.f32.partialorder %v2753, 1.0
    %v2758 = vsel %vm2754, 1.0, 0.0
    %v2759 = vsel %vm2755, 1.0, 0.0
    %v2760 = vsel %vm2756, 1.0, 0.0
    %v2761 = vsel %vm2757, 1.0, 0.0
    %v2762 = vmul.f32 %v1773, %v2722
    %v2763 = vmul.f32 %v1777, %v2723
    %v2764 = vmul.f32 %v1781, %v2724
    %v2765 = vmul.f32 %v1785, %v2725
    %v2766 = vmul.f32 %v1795, %v2658
    %v2767 = vmul.f32 %v1799, %v2659
    %v2768 = vmul.f32 %v1803, %v2660
    %v2769 = vmul.f32 %v1807, %v2661
    %v2770 = vadd.f32 %v2762, %v2766
    %v2771 = vadd.f32 %v2763, %v2767
    %v2772 = vadd.f32 %v2764, %v2768
    %v2773 = vadd.f32 %v2765, %v2769
    %v2774 = vadd.f32 %v2770, %v2758
    %v2775 = vadd.f32 %v2771, %v2759
    %v2776 = vadd.f32 %v2772, %v2760
    %v2777 = vadd.f32 %v2773, %v2761
    %v2778 = vpack.c.bf16 %v2774, %v2774
    %v2779 = vpack.c.bf16 %v2775, %v2775
    %v2780 = vpack.c.bf16 %v2776, %v2776
    %v2781 = vpack.c.bf16 %v2777, %v2777
    %v2786 = vrot.slane %v2778, 4
    %v2787 = vrot.slane %v2779, 4
    %v2788 = vrot.slane %v2780, 4
    %v2789 = vrot.slane %v2781, 4
    %2794 = vst [vmem:[#allocation6 + $0x20] sm:$0xf0] %v2786
    %2795 = vst [vmem:[#allocation6 + $0x28] sm:$0xf0] %v2787
    %2796 = vst [vmem:[#allocation6 + $0x30] sm:$0xf0] %v2788
    %2797 = vst [vmem:[#allocation6 + $0x38] sm:$0xf0] %v2789
    %v2798 = vld [vmem:[#allocation5 + $0x80] sm:$0xff]
    %v2799 = vld [vmem:[#allocation5 + $0x88] sm:$0xff]
    %v2800 = vld [vmem:[#allocation5 + $0x90] sm:$0xff]
    %v2801 = vld [vmem:[#allocation5 + $0x98] sm:$0xff]
    %v2802 = vsub.f32 1.0, %v2758
    %v2803 = vsub.f32 1.0, %v2759
    %v2804 = vsub.f32 1.0, %v2760
    %v2805 = vsub.f32 1.0, %v2761
    %v2806 = vmul.f32 %v2802, 0.7788008
    %v2807 = vmul.f32 %v2803, 0.7788008
    %v2808 = vmul.f32 %v2804, 0.7788008
    %v2809 = vmul.f32 %v2805, 0.7788008
    %v2810 = vmul.f32 %v2750, %v2806
    %v2811 = vmul.f32 %v2751, %v2807
    %v2812 = vmul.f32 %v2752, %v2808
    %v2813 = vmul.f32 %v2753, %v2809
    %v2814 = vadd.f32 %v2810, %v2798
    %v2815 = vadd.f32 %v2811, %v2799
    %v2816 = vadd.f32 %v2812, %v2800
    %v2817 = vadd.f32 %v2813, %v2801
    %vm2818 = vcmp.gt.f32.partialorder %v2814, 1.0
    %vm2819 = vcmp.gt.f32.partialorder %v2815, 1.0
    %vm2820 = vcmp.gt.f32.partialorder %v2816, 1.0
    %vm2821 = vcmp.gt.f32.partialorder %v2817, 1.0
    %v2822 = vsel %vm2818, 1.0, 0.0
    %v2823 = vsel %vm2819, 1.0, 0.0
    %v2824 = vsel %vm2820, 1.0, 0.0
    %v2825 = vsel %vm2821, 1.0, 0.0
    %v2826 = vmul.f32 %v1773, %v2774
    %v2827 = vmul.f32 %v1777, %v2775
    %v2828 = vmul.f32 %v1781, %v2776
    %v2829 = vmul.f32 %v1785, %v2777
    %v2830 = vmul.f32 %v1795, %v2722
    %v2831 = vmul.f32 %v1799, %v2723
    %v2832 = vmul.f32 %v1803, %v2724
    %v2833 = vmul.f32 %v1807, %v2725
    %v2834 = vadd.f32 %v2826, %v2830
    %v2835 = vadd.f32 %v2827, %v2831
    %v2836 = vadd.f32 %v2828, %v2832
    %v2837 = vadd.f32 %v2829, %v2833
    %v2838 = vadd.f32 %v2834, %v2822
    %v2839 = vadd.f32 %v2835, %v2823
    %v2840 = vadd.f32 %v2836, %v2824
    %v2841 = vadd.f32 %v2837, %v2825
    %v2842 = vpack.c.bf16 %v2838, %v2838
    %v2843 = vpack.c.bf16 %v2839, %v2839
    %v2844 = vpack.c.bf16 %v2840, %v2840
    %v2845 = vpack.c.bf16 %v2841, %v2841
    %2846 = vst [vmem:[#allocation6 + $0x40] sm:$0xf] %v2842
    %2847 = vst [vmem:[#allocation6 + $0x48] sm:$0xf] %v2843
    %2848 = vst [vmem:[#allocation6 + $0x50] sm:$0xf] %v2844
    %2849 = vst [vmem:[#allocation6 + $0x58] sm:$0xf] %v2845
    %v2850 = vld [vmem:[#allocation5 + $0xa0] sm:$0xff]
    %v2851 = vld [vmem:[#allocation5 + $0xa8] sm:$0xff]
    %v2852 = vld [vmem:[#allocation5 + $0xb0] sm:$0xff]
    %v2853 = vld [vmem:[#allocation5 + $0xb8] sm:$0xff]
    %v2854 = vsub.f32 1.0, %v2822
    %v2855 = vsub.f32 1.0, %v2823
    %v2856 = vsub.f32 1.0, %v2824
    %v2857 = vsub.f32 1.0, %v2825
    %v2858 = vmul.f32 %v2854, 0.7788008
    %v2859 = vmul.f32 %v2855, 0.7788008
    %v2860 = vmul.f32 %v2856, 0.7788008
    %v2861 = vmul.f32 %v2857, 0.7788008
    %v2862 = vmul.f32 %v2814, %v2858
    %v2863 = vmul.f32 %v2815, %v2859
    %v2864 = vmul.f32 %v2816, %v2860
    %v2865 = vmul.f32 %v2817, %v2861
    %v2866 = vadd.f32 %v2862, %v2850
    %v2867 = vadd.f32 %v2863, %v2851
    %v2868 = vadd.f32 %v2864, %v2852
    %v2869 = vadd.f32 %v2865, %v2853
    %vm2870 = vcmp.gt.f32.partialorder %v2866, 1.0
    %vm2871 = vcmp.gt.f32.partialorder %v2867, 1.0
    %vm2872 = vcmp.gt.f32.partialorder %v2868, 1.0
    %vm2873 = vcmp.gt.f32.partialorder %v2869, 1.0
    %v2874 = vsel %vm2870, 1.0, 0.0
    %v2875 = vsel %vm2871, 1.0, 0.0
    %v2876 = vsel %vm2872, 1.0, 0.0
    %v2877 = vsel %vm2873, 1.0, 0.0
    %v2878 = vmul.f32 %v1773, %v2838
    %v2879 = vmul.f32 %v1777, %v2839
    %v2880 = vmul.f32 %v1781, %v2840
    %v2881 = vmul.f32 %v1785, %v2841
    %v2882 = vmul.f32 %v1795, %v2774
    %v2883 = vmul.f32 %v1799, %v2775
    %v2884 = vmul.f32 %v1803, %v2776
    %v2885 = vmul.f32 %v1807, %v2777
    %v2886 = vadd.f32 %v2878, %v2882
    %v2887 = vadd.f32 %v2879, %v2883
    %v2888 = vadd.f32 %v2880, %v2884
    %v2889 = vadd.f32 %v2881, %v2885
    %v2890 = vadd.f32 %v2886, %v2874
    %v2891 = vadd.f32 %v2887, %v2875
    %v2892 = vadd.f32 %v2888, %v2876
    %v2893 = vadd.f32 %v2889, %v2877
    %v2894 = vpack.c.bf16 %v2890, %v2890
    %v2895 = vpack.c.bf16 %v2891, %v2891
    %v2896 = vpack.c.bf16 %v2892, %v2892
    %v2897 = vpack.c.bf16 %v2893, %v2893
    %v2902 = vrot.slane %v2894, 4
    %v2903 = vrot.slane %v2895, 4
    %v2904 = vrot.slane %v2896, 4
    %v2905 = vrot.slane %v2897, 4
    %2910 = vst [vmem:[#allocation6 + $0x40] sm:$0xf0] %v2902
    %2911 = vst [vmem:[#allocation6 + $0x48] sm:$0xf0] %v2903
    %2912 = vst [vmem:[#allocation6 + $0x50] sm:$0xf0] %v2904
    %2913 = vst [vmem:[#allocation6 + $0x58] sm:$0xf0] %v2905
    %v2914 = vld [vmem:[#allocation5 + $0xc0] sm:$0xff]
    %v2915 = vld [vmem:[#allocation5 + $0xc8] sm:$0xff]
    %v2916 = vld [vmem:[#allocation5 + $0xd0] sm:$0xff]
    %v2917 = vld [vmem:[#allocation5 + $0xd8] sm:$0xff]
    %v2918 = vsub.f32 1.0, %v2874
    %v2919 = vsub.f32 1.0, %v2875
    %v2920 = vsub.f32 1.0, %v2876
    %v2921 = vsub.f32 1.0, %v2877
    %v2922 = vmul.f32 %v2918, 0.7788008
    %v2923 = vmul.f32 %v2919, 0.7788008
    %v2924 = vmul.f32 %v2920, 0.7788008
    %v2925 = vmul.f32 %v2921, 0.7788008
    %v2926 = vmul.f32 %v2866, %v2922
    %v2927 = vmul.f32 %v2867, %v2923
    %v2928 = vmul.f32 %v2868, %v2924
    %v2929 = vmul.f32 %v2869, %v2925
    %v2930 = vadd.f32 %v2926, %v2914
    %v2931 = vadd.f32 %v2927, %v2915
    %v2932 = vadd.f32 %v2928, %v2916
    %v2933 = vadd.f32 %v2929, %v2917
    %vm2934 = vcmp.gt.f32.partialorder %v2930, 1.0
    %vm2935 = vcmp.gt.f32.partialorder %v2931, 1.0
    %vm2936 = vcmp.gt.f32.partialorder %v2932, 1.0
    %vm2937 = vcmp.gt.f32.partialorder %v2933, 1.0
    %v2938 = vsel %vm2934, 1.0, 0.0
    %v2939 = vsel %vm2935, 1.0, 0.0
    %v2940 = vsel %vm2936, 1.0, 0.0
    %v2941 = vsel %vm2937, 1.0, 0.0
    %v2942 = vmul.f32 %v1773, %v2890
    %v2943 = vmul.f32 %v1777, %v2891
    %v2944 = vmul.f32 %v1781, %v2892
    %v2945 = vmul.f32 %v1785, %v2893
    %v2946 = vmul.f32 %v1795, %v2838
    %v2947 = vmul.f32 %v1799, %v2839
    %v2948 = vmul.f32 %v1803, %v2840
    %v2949 = vmul.f32 %v1807, %v2841
    %v2950 = vadd.f32 %v2942, %v2946
    %v2951 = vadd.f32 %v2943, %v2947
    %v2952 = vadd.f32 %v2944, %v2948
    %v2953 = vadd.f32 %v2945, %v2949
    %v2954 = vadd.f32 %v2950, %v2938
    %v2955 = vadd.f32 %v2951, %v2939
    %v2956 = vadd.f32 %v2952, %v2940
    %v2957 = vadd.f32 %v2953, %v2941
    %v2958 = vpack.c.bf16 %v2954, %v2954
    %v2959 = vpack.c.bf16 %v2955, %v2955
    %v2960 = vpack.c.bf16 %v2956, %v2956
    %v2961 = vpack.c.bf16 %v2957, %v2957
    %2962 = vst [vmem:[#allocation6 + $0x60] sm:$0xf] %v2958
    %2963 = vst [vmem:[#allocation6 + $0x68] sm:$0xf] %v2959
    %2964 = vst [vmem:[#allocation6 + $0x70] sm:$0xf] %v2960
    %2965 = vst [vmem:[#allocation6 + $0x78] sm:$0xf] %v2961
    %v2966 = vld [vmem:[#allocation5 + $0xe0] sm:$0xff]
    %v2967 = vld [vmem:[#allocation5 + $0xe8] sm:$0xff]
    %v2968 = vld [vmem:[#allocation5 + $0xf0] sm:$0xff]
    %v2969 = vld [vmem:[#allocation5 + $0xf8] sm:$0xff]
    %v2970 = vsub.f32 1.0, %v2938
    %v2971 = vsub.f32 1.0, %v2939
    %v2972 = vsub.f32 1.0, %v2940
    %v2973 = vsub.f32 1.0, %v2941
    %v2974 = vmul.f32 %v2970, 0.7788008
    %v2975 = vmul.f32 %v2971, 0.7788008
    %v2976 = vmul.f32 %v2972, 0.7788008
    %v2977 = vmul.f32 %v2973, 0.7788008
    %v2978 = vmul.f32 %v2930, %v2974
    %v2979 = vmul.f32 %v2931, %v2975
    %v2980 = vmul.f32 %v2932, %v2976
    %v2981 = vmul.f32 %v2933, %v2977
    %v2982 = vadd.f32 %v2978, %v2966
    %v2983 = vadd.f32 %v2979, %v2967
    %v2984 = vadd.f32 %v2980, %v2968
    %v2985 = vadd.f32 %v2981, %v2969
    %vm2986 = vcmp.gt.f32.partialorder %v2982, 1.0
    %vm2987 = vcmp.gt.f32.partialorder %v2983, 1.0
    %vm2988 = vcmp.gt.f32.partialorder %v2984, 1.0
    %vm2989 = vcmp.gt.f32.partialorder %v2985, 1.0
    %v2990 = vsel %vm2986, 1.0, 0.0
    %v2991 = vsel %vm2987, 1.0, 0.0
    %v2992 = vsel %vm2988, 1.0, 0.0
    %v2993 = vsel %vm2989, 1.0, 0.0
    %v2994 = vmul.f32 %v1773, %v2954
    %v2995 = vmul.f32 %v1777, %v2955
    %v2996 = vmul.f32 %v1781, %v2956
    %v2997 = vmul.f32 %v1785, %v2957
    %v2998 = vmul.f32 %v1795, %v2890
    %v2999 = vmul.f32 %v1799, %v2891
    %v3000 = vmul.f32 %v1803, %v2892
    %v3001 = vmul.f32 %v1807, %v2893
    %v3002 = vadd.f32 %v2994, %v2998
    %v3003 = vadd.f32 %v2995, %v2999
    %v3004 = vadd.f32 %v2996, %v3000
    %v3005 = vadd.f32 %v2997, %v3001
    %v3006 = vadd.f32 %v3002, %v2990
    %v3007 = vadd.f32 %v3003, %v2991
    %v3008 = vadd.f32 %v3004, %v2992
    %v3009 = vadd.f32 %v3005, %v2993
    %v3010 = vpack.c.bf16 %v3006, %v3006
    %v3011 = vpack.c.bf16 %v3007, %v3007
    %v3012 = vpack.c.bf16 %v3008, %v3008
    %v3013 = vpack.c.bf16 %v3009, %v3009
    %v3018 = vrot.slane %v3010, 4
    %v3019 = vrot.slane %v3011, 4
    %v3020 = vrot.slane %v3012, 4
    %v3021 = vrot.slane %v3013, 4
    %3026 = vst [vmem:[#allocation6 + $0x60] sm:$0xf0] %v3018
    %3027 = vst [vmem:[#allocation6 + $0x68] sm:$0xf0] %v3019
    %3028 = vst [vmem:[#allocation6 + $0x70] sm:$0xf0] %v3020
    %3029 = vst [vmem:[#allocation6 + $0x78] sm:$0xf0] %v3021
    %s3030 = smul.u32 %s2088, 1
    %s3031 = sshll.u32 %s3030, 4
    %3032 = dma.done %s81, %s3031
    %v3033 = vld [vmem:[#allocation6] sm:$0xff]
    %v3034 = vld [vmem:[#allocation6 + $0x8] sm:$0xff]
    %v3035 = vld [vmem:[#allocation6 + $0x10] sm:$0xff]
    %v3036 = vld [vmem:[#allocation6 + $0x18] sm:$0xff]
    %v3037 = vld [vmem:[#allocation6 + $0x20] sm:$0xff]
    %v3038 = vld [vmem:[#allocation6 + $0x28] sm:$0xff]
    %v3039 = vld [vmem:[#allocation6 + $0x30] sm:$0xff]
    %v3040 = vld [vmem:[#allocation6 + $0x38] sm:$0xff]
    %v3041 = vld [vmem:[#allocation6 + $0x40] sm:$0xff]
    %v3042 = vld [vmem:[#allocation6 + $0x48] sm:$0xff]
    %v3043 = vld [vmem:[#allocation6 + $0x50] sm:$0xff]
    %v3044 = vld [vmem:[#allocation6 + $0x58] sm:$0xff]
    %v3045 = vld [vmem:[#allocation6 + $0x60] sm:$0xff]
    %v3046 = vld [vmem:[#allocation6 + $0x68] sm:$0xff]
    %v3047 = vld [vmem:[#allocation6 + $0x70] sm:$0xff]
    %v3048 = vld [vmem:[#allocation6 + $0x78] sm:$0xff]
    %v3049 = vld [vmem:[#allocation3] sm:$0xff]
    %v3050 = vld [vmem:[#allocation3 + $0x8] sm:$0xff]
    %v3051 = vld [vmem:[#allocation3 + $0x10] sm:$0xff]
    %v3052 = vld [vmem:[#allocation3 + $0x18] sm:$0xff]
    %v3053 = vld [vmem:[#allocation3 + $0x20] sm:$0xff]
    %v3054 = vld [vmem:[#allocation3 + $0x28] sm:$0xff]
    %v3055 = vld [vmem:[#allocation3 + $0x30] sm:$0xff]
    %v3056 = vld [vmem:[#allocation3 + $0x38] sm:$0xff]
    %v3057 = vld [vmem:[#allocation3 + $0x40] sm:$0xff]
    %v3058 = vld [vmem:[#allocation3 + $0x48] sm:$0xff]
    %v3059 = vld [vmem:[#allocation3 + $0x50] sm:$0xff]
    %v3060 = vld [vmem:[#allocation3 + $0x58] sm:$0xff]
    %v3061 = vld [vmem:[#allocation3 + $0x60] sm:$0xff]
    %v3062 = vld [vmem:[#allocation3 + $0x68] sm:$0xff]
    %v3063 = vld [vmem:[#allocation3 + $0x70] sm:$0xff]
    %v3064 = vld [vmem:[#allocation3 + $0x78] sm:$0xff]
    %v3065 = vld [vmem:[#allocation3 + $0x80] sm:$0xff]
    %v3066 = vld [vmem:[#allocation3 + $0x88] sm:$0xff]
    %v3067 = vld [vmem:[#allocation3 + $0x90] sm:$0xff]
    %v3068 = vld [vmem:[#allocation3 + $0x98] sm:$0xff]
    %v3069 = vld [vmem:[#allocation3 + $0xa0] sm:$0xff]
    %v3070 = vld [vmem:[#allocation3 + $0xa8] sm:$0xff]
    %v3071 = vld [vmem:[#allocation3 + $0xb0] sm:$0xff]
    %v3072 = vld [vmem:[#allocation3 + $0xb8] sm:$0xff]
    %v3073 = vld [vmem:[#allocation3 + $0xc0] sm:$0xff]
    %v3074 = vld [vmem:[#allocation3 + $0xc8] sm:$0xff]
    %v3075 = vld [vmem:[#allocation3 + $0xd0] sm:$0xff]
    %v3076 = vld [vmem:[#allocation3 + $0xd8] sm:$0xff]
    %v3077 = vld [vmem:[#allocation3 + $0xe0] sm:$0xff]
    %v3078 = vld [vmem:[#allocation3 + $0xe8] sm:$0xff]
    %v3079 = vld [vmem:[#allocation3 + $0xf0] sm:$0xff]
    %v3080 = vld [vmem:[#allocation3 + $0xf8] sm:$0xff]
    %v3081 = vld [vmem:[%s7] sm:$0x1]
    %v3083 = vlaneseq
    %v3084 = vshrl.u32 %v3083, 7
    %v3085 = vsub.s32 0, %v3084
    %v3086 = vrot.slane %v3081, %v3085
    %3088 = vmatprep.subr.bf16.mxu0 0
    %3089 = vmatpush1.bf16.msra.mxu0 %v3049
    %3090 = vmatprep.subr.bf16.mxu0 0
    %3091 = vmatpush1.bf16.msra.mxu0 %v3050
    %3092 = vmatprep.subr.bf16.mxu0 0
    %3093 = vmatpush1.bf16.msra.mxu0 %v3051
    %3094 = vmatprep.subr.bf16.mxu0 0
    %3095 = vmatpush1.bf16.msra.mxu0 %v3052
    %3096 = vmatprep.subr.bf16.mxu0 0
    %3097 = vmatpush1.bf16.msra.mxu0 %v3053
    %3098 = vmatprep.subr.bf16.mxu0 0
    %3099 = vmatpush1.bf16.msra.mxu0 %v3054
    %3100 = vmatprep.subr.bf16.mxu0 0
    %3101 = vmatpush1.bf16.msra.mxu0 %v3055
    %3102 = vmatprep.subr.bf16.mxu0 0
    %3103 = vmatpush1.bf16.msra.mxu0 %v3056
    %3104 = vmatprep.subr.bf16.mxu0 0
    %3105 = vmatpush1.bf16.msra.mxu0 %v3057
    %3106 = vmatprep.subr.bf16.mxu0 0
    %3107 = vmatpush1.bf16.msra.mxu0 %v3058
    %3108 = vmatprep.subr.bf16.mxu0 0
    %3109 = vmatpush1.bf16.msra.mxu0 %v3059
    %3110 = vmatprep.subr.bf16.mxu0 0
    %3111 = vmatpush1.bf16.msra.mxu0 %v3060
    %3112 = vmatprep.subr.bf16.mxu0 0
    %3113 = vmatpush1.bf16.msra.mxu0 %v3061
    %3114 = vmatprep.subr.bf16.mxu0 0
    %3115 = vmatpush1.bf16.msra.mxu0 %v3062
    %3116 = vmatprep.subr.bf16.mxu0 0
    %3117 = vmatpush1.bf16.msra.mxu0 %v3063
    %3118 = vmatprep.subr.bf16.mxu0 0
    %3119 = vmatpush1.bf16.msra.mxu0 %v3064
    %3120 = vmatprep.mubr.bf16.mxu0 %v3034
    %3121 = vmatmul.mubr.bf16.gmra.mrb[0].mxu0 %v3033
    %v3122 = vpop.f32.mrb[0].mxu0
    %v3123 = vadd.f32 %v3086, %v3122
    %v3124 = vpop.f32.mrb[0].mxu0
    %v3125 = vpop.f32.mrb[0].mxu0
    %v3126 = vadd.f32 %v3086, %v3125
    %v3127 = vpop.f32.mrb[0].mxu0
    %3128 = vmatprep.mubr.bf16.mxu0 %v3038
    %3129 = vmatmul.mubr.bf16.gmra.mrb[0].mxu0 %v3037
    %v3130 = vpop.f32.mrb[0].mxu0
    %v3131 = vadd.f32 %v3086, %v3130
    %v3132 = vpop.f32.mrb[0].mxu0
    %v3133 = vpop.f32.mrb[0].mxu0
    %v3134 = vadd.f32 %v3086, %v3133
    %v3135 = vpop.f32.mrb[0].mxu0
    %3136 = vmatprep.mubr.bf16.mxu0 %v3042
    %3137 = vmatmul.mubr.bf16.gmra.mrb[0].mxu0 %v3041
    %v3138 = vpop.f32.mrb[0].mxu0
    %v3139 = vadd.f32 %v3086, %v3138
    %v3140 = vpop.f32.mrb[0].mxu0
    %v3141 = vpop.f32.mrb[0].mxu0
    %v3142 = vadd.f32 %v3086, %v3141
    %v3143 = vpop.f32.mrb[0].mxu0
    %3144 = vmatprep.mubr.bf16.mxu0 %v3046
    %3145 = vmatmul.mubr.bf16.gmra.mrb[0].mxu0 %v3045
    %v3146 = vpop.f32.mrb[0].mxu0
    %v3147 = vadd.f32 %v3086, %v3146
    %v3148 = vpop.f32.mrb[0].mxu0
    %v3149 = vpop.f32.mrb[0].mxu0
    %v3150 = vadd.f32 %v3086, %v3149
    %v3151 = vpop.f32.mrb[0].mxu0
    %3152 = vdwg.mxu0
    %3153 = vmatprep.subr.bf16.mxu0 0
    %3154 = vmatpush1.bf16.msra.mxu0 %v3065
    %3155 = vmatprep.subr.bf16.mxu0 0
    %3156 = vmatpush1.bf16.msra.mxu0 %v3066
    %3157 = vmatprep.subr.bf16.mxu0 0
    %3158 = vmatpush1.bf16.msra.mxu0 %v3067
    %3159 = vmatprep.subr.bf16.mxu0 0
    %3160 = vmatpush1.bf16.msra.mxu0 %v3068
    %3161 = vmatprep.subr.bf16.mxu0 0
    %3162 = vmatpush1.bf16.msra.mxu0 %v3069
    %3163 = vmatprep.subr.bf16.mxu0 0
    %3164 = vmatpush1.bf16.msra.mxu0 %v3070
    %3165 = vmatprep.subr.bf16.mxu0 0
    %3166 = vmatpush1.bf16.msra.mxu0 %v3071
    %3167 = vmatprep.subr.bf16.mxu0 0
    %3168 = vmatpush1.bf16.msra.mxu0 %v3072
    %3169 = vmatprep.subr.bf16.mxu0 0
    %3170 = vmatpush1.bf16.msra.mxu0 %v3073
    %3171 = vmatprep.subr.bf16.mxu0 0
    %3172 = vmatpush1.bf16.msra.mxu0 %v3074
    %3173 = vmatprep.subr.bf16.mxu0 0
    %3174 = vmatpush1.bf16.msra.mxu0 %v3075
    %3175 = vmatprep.subr.bf16.mxu0 0
    %3176 = vmatpush1.bf16.msra.mxu0 %v3076
    %3177 = vmatprep.subr.bf16.mxu0 0
    %3178 = vmatpush1.bf16.msra.mxu0 %v3077
    %3179 = vmatprep.subr.bf16.mxu0 0
    %3180 = vmatpush1.bf16.msra.mxu0 %v3078
    %3181 = vmatprep.subr.bf16.mxu0 0
    %3182 = vmatpush1.bf16.msra.mxu0 %v3079
    %3183 = vmatprep.subr.bf16.mxu0 0
    %3184 = vmatpush1.bf16.msra.mxu0 %v3080
    %3185 = vmatprep.mubr.bf16.mxu0 %v3036
    %3186 = vmatmul.mubr.bf16.gmra.mrb[0].mxu0 %v3035
    %v3187 = vpop.f32.mrb[0].mxu0
    %v3188 = vadd.f32 %v3123, %v3187
    %v3189 = vpop.f32.mrb[0].mxu0
    %v3190 = vpop.f32.mrb[0].mxu0
    %v3191 = vadd.f32 %v3126, %v3190
    %v3192 = vpop.f32.mrb[0].mxu0
    %3193 = vmatprep.mubr.bf16.mxu0 %v3040
    %3194 = vmatmul.mubr.bf16.gmra.mrb[0].mxu0 %v3039
    %v3195 = vpop.f32.mrb[0].mxu0
    %v3196 = vadd.f32 %v3131, %v3195
    %v3197 = vpop.f32.mrb[0].mxu0
    %v3198 = vpop.f32.mrb[0].mxu0
    %v3199 = vadd.f32 %v3134, %v3198
    %v3200 = vpop.f32.mrb[0].mxu0
    %3201 = vmatprep.mubr.bf16.mxu0 %v3044
    %3202 = vmatmul.mubr.bf16.gmra.mrb[0].mxu0 %v3043
    %v3203 = vpop.f32.mrb[0].mxu0
    %v3204 = vadd.f32 %v3139, %v3203
    %v3205 = vpop.f32.mrb[0].mxu0
    %v3206 = vpop.f32.mrb[0].mxu0
    %v3207 = vadd.f32 %v3142, %v3206
    %v3208 = vpop.f32.mrb[0].mxu0
    %3209 = vmatprep.mubr.bf16.mxu0 %v3048
    %3210 = vmatmul.mubr.bf16.gmra.mrb[0].mxu0 %v3047
    %v3211 = vpop.f32.mrb[0].mxu0
    %v3212 = vadd.f32 %v3147, %v3211
    %v3213 = vpop.f32.mrb[0].mxu0
    %v3214 = vpop.f32.mrb[0].mxu0
    %v3215 = vadd.f32 %v3150, %v3214
    %v3216 = vpop.f32.mrb[0].mxu0
    %3217 = vdwg.mxu0
    %v3218 = vadd.f32 %v3188, 0.0
    %vm3219 = vcmp.gt.f32.partialorder %v3218, 1.0
    %v3220 = vsel %vm3219, 1.0, 0.0
    %vm3221 = vcmask 80896
    %3222 = vst.msk [vmem:[%s10] sm:$0xff] %vm3221, %v3220
    %v3223 = vsub.f32 1.0, %v3220
    %v3224 = vmul.f32 %v3223, 0.7788008
    %v3225 = vmul.f32 %v3218, %v3224
    %v3226 = vadd.f32 %v3225, %v3191
    %vm3227 = vcmp.gt.f32.partialorder %v3226, 1.0
    %v3228 = vsel %vm3227, 1.0, 0.0
    %3229 = vst.msk [vmem:[%s10 + $0x8] sm:$0xff] %vm3221, %v3228
    %v3230 = vsub.f32 1.0, %v3228
    %v3231 = vmul.f32 %v3230, 0.7788008
    %v3232 = vmul.f32 %v3226, %v3231
    %v3233 = vadd.f32 %v3232, %v3196
    %vm3234 = vcmp.gt.f32.partialorder %v3233, 1.0
    %v3235 = vsel %vm3234, 1.0, 0.0
    %3236 = vst.msk [vmem:[%s10 + $0x10] sm:$0xff] %vm3221, %v3235
    %v3237 = vsub.f32 1.0, %v3235
    %v3238 = vmul.f32 %v3237, 0.7788008
    %v3239 = vmul.f32 %v3233, %v3238
    %v3240 = vadd.f32 %v3239, %v3199
    %vm3241 = vcmp.gt.f32.partialorder %v3240, 1.0
    %v3242 = vsel %vm3241, 1.0, 0.0
    %3243 = vst.msk [vmem:[%s10 + $0x18] sm:$0xff] %vm3221, %v3242
    %v3244 = vsub.f32 1.0, %v3242
    %v3245 = vmul.f32 %v3244, 0.7788008
    %v3246 = vmul.f32 %v3240, %v3245
    %v3247 = vadd.f32 %v3246, %v3204
    %vm3248 = vcmp.gt.f32.partialorder %v3247, 1.0
    %v3249 = vsel %vm3248, 1.0, 0.0
    %3250 = vst.msk [vmem:[%s10 + $0x20] sm:$0xff] %vm3221, %v3249
    %v3251 = vsub.f32 1.0, %v3249
    %v3252 = vmul.f32 %v3251, 0.7788008
    %v3253 = vmul.f32 %v3247, %v3252
    %v3254 = vadd.f32 %v3253, %v3207
    %vm3255 = vcmp.gt.f32.partialorder %v3254, 1.0
    %v3256 = vsel %vm3255, 1.0, 0.0
    %3257 = vst.msk [vmem:[%s10 + $0x28] sm:$0xff] %vm3221, %v3256
    %v3258 = vsub.f32 1.0, %v3256
    %v3259 = vmul.f32 %v3258, 0.7788008
    %v3260 = vmul.f32 %v3254, %v3259
    %v3261 = vadd.f32 %v3260, %v3212
    %vm3262 = vcmp.gt.f32.partialorder %v3261, 1.0
    %v3263 = vsel %vm3262, 1.0, 0.0
    %3264 = vst.msk [vmem:[%s10 + $0x30] sm:$0xff] %vm3221, %v3263
    %v3265 = vsub.f32 1.0, %v3263
    %v3266 = vmul.f32 %v3265, 0.7788008
    %v3267 = vmul.f32 %v3261, %v3266
    %v3268 = vadd.f32 %v3267, %v3215
    %vm3269 = vcmp.gt.f32.partialorder %v3268, 1.0
    %v3270 = vsel %vm3269, 1.0, 0.0
    %3271 = vst.msk [vmem:[%s10 + $0x38] sm:$0xff] %vm3221, %v3270
    // Predicated region
    $region72: #{tpu_custom_call.1} parent=1 // pred_check
      _
    $region73: #{tpu_custom_call.1} parent=1 // pred_check_branch
      %3273 = sbr.rel (0) target = $region75
    $region74: #{tpu_custom_call.1} parent=1 // pred_region
      _
    $region75: #{tpu_custom_call.1} parent=1 // pred_fallthru
      _
    // Predicated region
    $region76: #{tpu_custom_call.1} parent=1 // pred_check
      _
    $region77: #{tpu_custom_call.1} parent=1 // pred_check_branch
      %3275 = sbr.rel (0) target = $region79
    $region78: #{tpu_custom_call.1} parent=1 // pred_region
      _
    $region79: #{tpu_custom_call.1} parent=1 // pred_fallthru
      _
    %3276 = vsyncpa [#allocation9], 1
  %3277 = vsyncmov [#allocation7]
  %s3278 = vpop.sfrf %3277
  %p3279 = scmp.eq.s32.totalorder %s3278, 0
  %p3280 = pneg %p3279
  %3282 = shalt.err (%p3280)
  %s3283 = scalar_lea.sflag [#allocation7], 1
  %3284 = vsyncmov %s3283
  %s3285 = vpop.sfrf %3284
  %p3286 = scmp.eq.s32.totalorder %s3285, 0
  %p3287 = pneg %p3286
  %3289 = shalt.err (%p3287)

</llo_original>
